<compile_context>
chip_gen: v7x
topology: tpu7x:2x2x1
jax: 0.10.0
libtpu: 0.0.40
codegen_flags: <defaults>
</compile_context>

<pallas_src>
import functools
import math

import jax
import jax.numpy as jnp
from jax import lax
from jax.experimental import pallas as pl
from jax.experimental.pallas import tpu as pltpu

_BN_EPS = 1e-5
_VMEM_LIMIT = 48 * 1024 * 1024   # under the 64 MiB v7x physical VMEM, plenty on v5e/v6e


def _round_up(x, m):
    return ((x + m - 1) // m) * m


# ----------------------------- Pallas kernels --------------------------------

def _mbconv_kernel(*refs, K, stride, TH, H, W, pad, has_expand):
    """Fused MBConv step for one (batch n, output-row-tile t) grid point.

    expand 1x1 (+bias+ReLU, BN folded into weight) -> depthwise KxK (+bias+ReLU)
    -> project 1x1 (+bias) -> residual add.  The expanded activation stays in the
    `ebuf` VMEM scratch buffer.
    """
    if has_expand:
        (x_ref, w_pw_ref, b_pw_ref, w_dw_ref, b_dw_ref,
         w_pwl_ref, b_pwl_ref, res_ref, o_ref, ebuf_ref) = refs
    else:
        (x_ref, w_dw_ref, b_dw_ref,
         w_pwl_ref, b_pwl_ref, res_ref, o_ref, ebuf_ref) = refs

    rows_in, Wp, inner = ebuf_ref.shape
    _, Wo, out_c = o_ref.shape

    t = pl.program_id(1)
    row_step = TH * stride
    row0 = pl.multiple_of(t * row_step, row_step)

    # ---- expand 1x1 (BN scale folded into the weight) -------------------------
    xr = x_ref[pl.ds(row0, rows_in), :, :]                 # (rows_in, Wp, Cin)
    if has_expand:
        cin = xr.shape[-1]
        e = jnp.dot(xr.reshape(rows_in * Wp, cin), w_pw_ref[...],
                    preferred_element_type=jnp.float32)
        e = jnp.maximum(e + b_pw_ref[...], 0.0).reshape(rows_in, Wp, inner)
        # Zero the depthwise halo: padded rows/cols of the *expanded* activation must
        # be 0 (the 1x1 conv here ran over the zero-padded input, giving relu(bias)).
        r = row0 + lax.broadcasted_iota(jnp.int32, (rows_in, Wp, 1), 0)
        c = lax.broadcasted_iota(jnp.int32, (rows_in, Wp, 1), 1)
        valid = (r >= pad) & (r < pad + H) & (c >= pad) & (c < pad + W)
        ebuf_ref[...] = jnp.where(valid, e, 0.0)
    else:
        ebuf_ref[...] = xr.astype(jnp.float32)

    # ---- depthwise KxK + bias + ReLU (BN scale folded into taps) --------------
    wdw = w_dw_ref[...]                                    # (K*K, inner), loaded once
    acc = jnp.zeros((TH, Wo, inner), jnp.float32)
    for kh in range(K):
        for kw in range(K):
            if stride == 1:
                patch = ebuf_ref[pl.ds(kh, TH), pl.ds(kw, Wo), :]
            else:
                # TODO(synk): for stride 2, a one-time even/odd W-phase split of ebuf
                # would replace K*K sublane-strided reads with 2.
                patch = ebuf_ref[pl.ds(kh, TH, stride), pl.ds(kw, Wo, stride), :]
            acc = acc + patch * wdw[kh * K + kw].reshape(1, 1, inner)
    y = jnp.maximum(acc + b_dw_ref[...].reshape(1, 1, inner), 0.0)

    # ---- project 1x1 + bias + residual add ------------------------------------
    z = jnp.dot(y.reshape(TH * Wo, inner), w_pwl_ref[...],
                preferred_element_type=jnp.float32)
    z = (z + b_pwl_ref[...]).reshape(TH, Wo, out_c)
    z = z + res_ref[...].astype(jnp.float32)
    o_ref[...] = z.astype(o_ref.dtype)


def _pw_kernel(x_ref, w_ref, o_ref):
    """Plain 1x1 conv (shortcut branch): o = x @ w, one M-row tile per grid step."""
    o_ref[...] = jnp.dot(x_ref[...], w_ref[...],
                         preferred_element_type=jnp.float32).astype(o_ref.dtype)


# --------------------------- kernel wrappers ----------------------------------

def pointwise_conv(x_nhwc, w_oi, *, block_rows=256):
    """Standalone tiled 1x1 conv (shortcut branch). Weight layout [Cout, Cin]."""
    N, H, W, Cin = x_nhwc.shape
    Cout = w_oi.shape[0]
    M = N * H * W
    TM = min(block_rows, _round_up(M, 8))                  # sublane-aligned row tile
    Mp = _round_up(M, TM)
    x2d = x_nhwc.reshape(M, Cin)
    if Mp != M:
        x2d = jnp.pad(x2d, ((0, Mp - M), (0, 0)))
    w = jnp.transpose(w_oi)                                # [Cin, Cout]
    out = pl.pallas_call(
        _pw_kernel,
        out_shape=jax.ShapeDtypeStruct((Mp, Cout), x_nhwc.dtype),
        grid=(Mp // TM,),
        in_specs=[pl.BlockSpec((TM, Cin), lambda i: (i, 0)),
                  pl.BlockSpec((Cin, Cout), lambda i: (0, 0))],
        out_specs=pl.BlockSpec((TM, Cout), lambda i: (i, 0)),
        compiler_params=pltpu.CompilerParams(
            dimension_semantics=("parallel",),
            vmem_limit_bytes=_VMEM_LIMIT),
    )(x2d, w)
    return out[:M].reshape(N, H, W, Cout)


def mbconv_fused(x_nhwc, res_nhwc, params, *, K, stride, has_expand, tile_rows=8):
    """Fused expand->depthwise->project(+residual) over a (batch, row-tile) grid."""
    N, H, W, Cin = x_nhwc.shape
    pad = 1 if K == 3 else 2
    inner = params["w_dw"].shape[1]
    out_c = params["w_pwl"].shape[1]
    Ho = (H + 2 * pad - K) // stride + 1
    Wo = (W + 2 * pad - K) // stride + 1
    Wp = W + 2 * pad

    TH = min(tile_rows, Ho)                    # output rows per grid step
    n_t = pl.cdiv(Ho, TH)
    Ho_pad = n_t * TH
    rows_in = (TH - 1) * stride + K            # input rows needed per tile (with halo)
    need_rows = (Ho_pad - 1) * stride + K
    Hin_p = max(H + 2 * pad, need_rows)

    xp = jnp.pad(x_nhwc, ((0, 0), (pad, Hin_p - H - pad), (pad, pad), (0, 0)))
    res = res_nhwc
    assert res.shape == (N, Ho, Wo, out_c), (res.shape, (N, Ho, Wo, out_c))
    if Ho_pad != Ho:
        res = jnp.pad(res, ((0, 0), (0, Ho_pad - Ho), (0, 0), (0, 0)))
    res = res.astype(x_nhwc.dtype)

    kernel = functools.partial(_mbconv_kernel, K=K, stride=stride, TH=TH,
                               H=H, W=W, pad=pad, has_expand=has_expand)

    args = [xp]
    in_specs = [pl.BlockSpec((None, Hin_p, Wp, Cin), lambda n, t: (n, 0, 0, 0))]
    if has_expand:
        args += [params["w_pw"], params["b_pw"]]
        in_specs += [pl.BlockSpec((Cin, inner), lambda n, t: (0, 0)),
                     pl.BlockSpec((1, inner), lambda n, t: (0, 0))]
    args += [params["w_dw"], params["b_dw"], params["w_pwl"], params["b_pwl"], res]
    in_specs += [pl.BlockSpec((K * K, inner), lambda n, t: (0, 0)),
                 pl.BlockSpec((1, inner), lambda n, t: (0, 0)),
                 pl.BlockSpec((inner, out_c), lambda n, t: (0, 0)),
                 pl.BlockSpec((1, out_c), lambda n, t: (0, 0)),
                 pl.BlockSpec((None, TH, Wo, out_c), lambda n, t: (n, t, 0, 0))]

    flops = 2 * N * Ho_pad * Wo * inner * (Cin * int(has_expand) + K * K + out_c)
    bytes_accessed = sum(int(a.size) for a in args) * 4 + N * Ho_pad * Wo * out_c * 4

    out = pl.pallas_call(
        kernel,
        out_shape=jax.ShapeDtypeStruct((N, Ho_pad, Wo, out_c), x_nhwc.dtype),
        grid=(N, n_t),
        in_specs=in_specs,
        out_specs=pl.BlockSpec((None, TH, Wo, out_c), lambda n, t: (n, t, 0, 0)),
        scratch_shapes=[pltpu.VMEM((rows_in, Wp, inner), jnp.float32)],
        input_output_aliases={len(args) - 1: 0},   # residual written in place
        cost_estimate=pl.CostEstimate(flops=int(flops), transcendentals=0,
                                      bytes_accessed=int(bytes_accessed)),
        compiler_params=pltpu.CompilerParams(
            dimension_semantics=("parallel", "parallel"),
            vmem_limit_bytes=_VMEM_LIMIT),
    )(*args)
    return out[:, :Ho] if Ho_pad != Ho else out


# ------------------------------- helpers --------------------------------------

def _fold_bn(bn, c):
    scale = bn["gamma"][:c] / jnp.sqrt(bn["var"][:c] + _BN_EPS)
    bias = bn["beta"][:c] - bn["mean"][:c] * scale
    return scale, bias


def _avg_pool_nhwc(x, k, pad):
    # F.avg_pool2d(x, k, padding=pad), count_include_pad=True (shortcut downsample).
    summed = lax.reduce_window(
        x, 0.0, lax.add,
        window_dimensions=(1, k, k, 1),
        window_strides=(1, k, k, 1),
        padding=((0, 0), (pad, pad), (pad, pad), (0, 0)))
    return summed / float(k * k)


@functools.partial(jax.jit, static_argnames=("K", "stride", "has_expand",
                                             "shortcut", "avgpool_k", "avgpool_pad"))
def _mobile_block_forward(x_nchw, params, *, K, stride, has_expand,
                          shortcut, avgpool_k, avgpool_pad):
    x = jnp.transpose(x_nchw, (0, 2, 3, 1))      # NCHW -> NHWC
    res = x
    if avgpool_k > 1:
        res = _avg_pool_nhwc(res, avgpool_k, avgpool_pad)
    if shortcut:
        res = pointwise_conv(res, params["w_sc"])
    out = mbconv_fused(x, res, params, K=K, stride=stride, has_expand=has_expand)
    return jnp.transpose(out, (0, 3, 1, 2))      # NHWC -> NCHW


# ---------------------------- MobileBlock (Pallas) -----------------------------

class MobileBlockPallas:
    def __init__(self, key, max_channels, min_channels, in_channels, ratio,
                 stride, layer_idx, kr_size=(5, 3), se=False):
        self.max_channels = max_channels if stride == 1 else in_channels
        self.min_channels = min_channels
        self.max_out_channels = max_channels
        self.ratio = tuple(ratio)
        self.stride = stride
        self.kr_size = tuple(kr_size)
        self.layer_idx = layer_idx
        self.using_se = se
        # TODO(synk): squeeze-and-excitation branch (se=True) not implemented as a
        # Pallas kernel; the module's default is se=False and this demo keeps it off.
        assert not se, "SE path not implemented"
        max_ratio = max(self.ratio)
        self.max_inner = max_channels * max_ratio
        Kmax = max(self.kr_size)

        keys = jax.random.split(key, 8)

        def winit(k, shape, fan_in):
            bound = 1.0 / math.sqrt(fan_in)
            return jax.random.uniform(k, shape, jnp.float32, -bound, bound)

        # PyTorch conv weight layouts (bias=False in the main path).
        if max_ratio > 1:
            self.pw_w = winit(keys[0], (self.max_inner, max_channels), max_channels)
            self.pw_bn = self._bn_init(keys[1], self.max_inner)
        self.dw_w = winit(keys[2], (self.max_inner, 1, Kmax, Kmax), Kmax * Kmax)
        self.dw_bn = self._bn_init(keys[3], self.max_inner)
        self.pwl_w = winit(keys[4], (self.max_out_channels, self.max_inner), self.max_inner)
        # NOTE: pwl_bn gamma randomly initialized (not the paper's zero-init) so the
        # main path is non-degenerate in this synthetic test.
        self.pwl_bn = self._bn_init(keys[5], self.max_out_channels)
        self.shortcut_w = winit(keys[6], (self.max_out_channels, max_channels),
                                max_channels)

        self.sampled_in_channels = -1
        self.sampled_ratio = -1
        self.sampled_kernel_size = -1
        self.sampled_out_channels = -1
        self.sampled_res = -1

    @staticmethod
    def _bn_init(key, c):
        k1, k2, k3, k4 = jax.random.split(key, 4)
        return dict(
            gamma=1.0 + 0.1 * jax.random.normal(k1, (c,), jnp.float32),
            beta=0.1 * jax.random.normal(k2, (c,), jnp.float32),
            mean=0.1 * jax.random.normal(k3, (c,), jnp.float32),
            var=jnp.abs(0.5 + 0.1 * jax.random.normal(k4, (c,), jnp.float32)),
        )

    def set_conf(self, channels, last_stage_sampled_channels, sampled_res,
                 sampled_kernel_size, sampled_ratio, sampled_out_channels):
        self.sampled_res = sampled_res
        self.sampled_ratio = sampled_ratio
        self.sampled_kernel_size = sampled_kernel_size
        self.sampled_out_channels = sampled_out_channels
        self.sampled_in_channels = (channels if self.layer_idx != 0
                                    else last_stage_sampled_channels)

    def _sliced_dw_weight(self, inner):
        # elastic kernel-size slicing (matches _do_elastic_conv_bn_act).
        K = self.sampled_kernel_size
        if K == 1 or K == 5 or max(self.kr_size) == min(self.kr_size):
            return self.dw_w[:inner]
        elif K == 3:
            return self.dw_w[:inner, :, 1:4, 1:4]
        raise NotImplementedError

    def forward(self, x_nchw):
        in_c = x_nchw.shape[1]
        assert in_c == self.sampled_in_channels
        inner = in_c * self.sampled_ratio
        out_c = self.sampled_out_channels
        K = self.sampled_kernel_size
        assert K in self.kr_size and max(self.kr_size) <= 5
        has_expand = max(self.ratio) > 1

        # Fold BN scale into weights on the host; kernels only see a bias row.
        params = {}
        if has_expand:
            s, b = _fold_bn(self.pw_bn, inner)
            params["w_pw"] = jnp.transpose(self.pw_w[:inner, :in_c]) * s[None, :]
            params["b_pw"] = b.reshape(1, inner)
        s, b = _fold_bn(self.dw_bn, inner)
        wdw = self._sliced_dw_weight(inner)                       # [inner, 1, K, K]
        params["w_dw"] = (jnp.transpose(wdw[:, 0], (1, 2, 0)).reshape(K * K, inner)
                          * s[None, :])
        params["b_dw"] = b.reshape(1, inner)
        s, b = _fold_bn(self.pwl_bn, out_c)
        params["w_pwl"] = jnp.transpose(self.pwl_w[:out_c, :inner]) * s[None, :]
        params["b_pwl"] = b.reshape(1, out_c)

        shortcut = in_c != out_c
        avgpool_k = self.stride if self.stride > 1 else 1
        avgpool_pad = 0 if x_nchw.shape[-1] % 2 == 0 else 1
        if shortcut:
            params["w_sc"] = self.shortcut_w[:out_c, :in_c]

        return _mobile_block_forward(
            x_nchw, params, K=K, stride=self.stride, has_expand=has_expand,
            shortcut=shortcut, avgpool_k=avgpool_k, avgpool_pad=avgpool_pad)


# ------------------------- pure-JAX reference (check) --------------------------

def _ref_conv1x1(x, w_oi):
    w = jnp.transpose(w_oi)[None, None]     # [1,1,Cin,Cout]
    return lax.conv_general_dilated(x, w, (1, 1), 'VALID',
                                    dimension_numbers=('NHWC', 'HWIO', 'NHWC'))


def _ref_depthwise(x, w_c1kk, stride, pad):
    C = w_c1kk.shape[0]
    w = jnp.transpose(w_c1kk, (2, 3, 1, 0))  # [K,K,1,C]
    return lax.conv_general_dilated(
        x, w, (stride, stride), ((pad, pad), (pad, pad)),
        dimension_numbers=('NHWC', 'HWIO', 'NHWC'), feature_group_count=C)


def ref_forward(block, x_nchw):
    in_c = x_nchw.shape[1]
    inner = in_c * block.sampled_ratio
    out_c = block.sampled_out_channels
    x = jnp.transpose(x_nchw, (0, 2, 3, 1))
    res = x
    if max(block.ratio) > 1:
        s, b = _fold_bn(block.pw_bn, inner)
        x = jnp.maximum(_ref_conv1x1(x, block.pw_w[:inner, :in_c]) * s + b, 0.0)
    K = block.sampled_kernel_size
    pad = 1 if K == 3 else 2
    s, b = _fold_bn(block.dw_bn, inner)
    x = jnp.maximum(_ref_depthwise(x, block._sliced_dw_weight(inner),
                                   block.stride, pad) * s + b, 0.0)
    s, b = _fold_bn(block.pwl_bn, out_c)
    x = _ref_conv1x1(x, block.pwl_w[:out_c, :inner]) * s + b
    if in_c == out_c and block.stride == 1:
        out = x + res
    else:
        if block.stride > 1:
            pad_res = 0 if res.shape[2] % 2 == 0 else 1
            res = _avg_pool_nhwc(res, block.stride, pad_res)
        if in_c != out_c:
            res = _ref_conv1x1(res, block.shortcut_w[:out_c, :in_c])
        out = x + res
    return jnp.transpose(out, (0, 3, 1, 2))


# ----------------------------------- main --------------------------------------

if __name__ == "__main__":
    key = jax.random.PRNGKey(0)
    kp1, kp2, kp3, kx = jax.random.split(key, 4)
    N, H, W = 2, 16, 16

    configs = []
    # 1) identity residual (stride 1, in == out), K=3
    blk = MobileBlockPallas(kp1, max_channels=8, min_channels=4, in_channels=8,
                            ratio=(4, 6), stride=1, layer_idx=1, kr_size=(5, 3))
    blk.set_conf(channels=8, last_stage_sampled_channels=8, sampled_res=H,
                 sampled_kernel_size=3, sampled_ratio=4, sampled_out_channels=8)
    configs.append((blk, 8, 8))
    # 2) K=5, channel-changing shortcut conv (stride 1, in != out)
    blk = MobileBlockPallas(kp2, max_channels=16, min_channels=4, in_channels=16,
                            ratio=(4, 6), stride=1, layer_idx=1, kr_size=(5, 3))
    blk.set_conf(channels=8, last_stage_sampled_channels=8, sampled_res=H,
                 sampled_kernel_size=5, sampled_ratio=4, sampled_out_channels=12)
    configs.append((blk, 8, 12))
    # 3) stride 2: avg-pool + shortcut conv residual, strided depthwise
    blk = MobileBlockPallas(kp3, max_channels=16, min_channels=4, in_channels=8,
                            ratio=(4, 6), stride=2, layer_idx=1, kr_size=(5, 3))
    blk.set_conf(channels=8, last_stage_sampled_channels=8, sampled_res=H,
                 sampled_kernel_size=3, sampled_ratio=4, sampled_out_channels=16)
    configs.append((blk, 8, 16))

    for i, (blk, cin, cout) in enumerate(configs):
        x = jax.random.normal(jax.random.fold_in(kx, i), (N, cin, H, W), jnp.float32)
        out = jax.block_until_ready(blk.forward(x))
        ref = jax.block_until_ready(ref_forward(blk, x))
        ho = H // blk.stride
        assert out.shape == (N, cout, ho, ho), out.shape
        max_err = float(jnp.max(jnp.abs(out - ref)))
        assert jnp.allclose(out, ref, rtol=1e-4, atol=5e-4), \
            f"config {i}: max abs err {max_err}"

    print("KERNEL_OK")
</pallas_src>

<mosaic_0001>
module attributes {stable_mosaic.version = 11 : i64} {
  func.func @_mbconv_kernel(%arg0: i32, %arg1: i32, %arg2: memref<1x18x18x8xf32, #tpu.memory_space<vmem>>, %arg3: memref<8x32xf32, #tpu.memory_space<vmem>>, %arg4: memref<1x32xf32, #tpu.memory_space<vmem>>, %arg5: memref<9x32xf32, #tpu.memory_space<vmem>>, %arg6: memref<1x32xf32, #tpu.memory_space<vmem>>, %arg7: memref<32x8xf32, #tpu.memory_space<vmem>>, %arg8: memref<1x8xf32, #tpu.memory_space<vmem>>, %arg9: memref<1x8x16x8xf32, #tpu.memory_space<vmem>>, %arg10: memref<1x8x16x8xf32, #tpu.memory_space<vmem>>, %arg11: memref<10x18x32xf32, #tpu.memory_space<vmem>>) attributes {dimension_semantics = [#tpu.dimension_semantics<parallel>, #tpu.dimension_semantics<parallel>], iteration_bounds = array<i64: 2, 2>, scalar_prefetch = 0 : i64, scratch_operands = 1 : i64, tpu.core_type = #tpu.core_type<tc>, window_params = [{transform_indices = @transform_0, window_bounds = array<i64: 1, 18, 18, 8>}, {pipeline_mode = #tpu.pipeline_mode<synchronous>, transform_indices = @transform_1, window_bounds = array<i64: 8, 32>}, {pipeline_mode = #tpu.pipeline_mode<synchronous>, transform_indices = @transform_2, window_bounds = array<i64: 1, 32>}, {pipeline_mode = #tpu.pipeline_mode<synchronous>, transform_indices = @transform_3, window_bounds = array<i64: 9, 32>}, {pipeline_mode = #tpu.pipeline_mode<synchronous>, transform_indices = @transform_4, window_bounds = array<i64: 1, 32>}, {pipeline_mode = #tpu.pipeline_mode<synchronous>, transform_indices = @transform_5, window_bounds = array<i64: 32, 8>}, {pipeline_mode = #tpu.pipeline_mode<synchronous>, transform_indices = @transform_6, window_bounds = array<i64: 1, 8>}, {transform_indices = @transform_7, window_bounds = array<i64: 1, 8, 16, 8>}, {transform_indices = @transform_8, window_bounds = array<i64: 1, 8, 16, 8>}]} {
    %c8_i32 = arith.constant 8 : i32
    %0 = arith.muli %arg1, %c8_i32 : i32
    %1 = tpu.assume_multiple %0, 8 : i32
    %c0 = arith.constant 0 : index
    %2 = arith.index_cast %1 : i32 to index
    %c0_0 = arith.constant 0 : index
    %c0_1 = arith.constant 0 : index
    %3 = vector.load %arg2[%c0, %2, %c0_0, %c0_1] : memref<1x18x18x8xf32, #tpu.memory_space<vmem>>, vector<1x10x18x8xf32>
    %4 = vector.shape_cast %3 : vector<1x10x18x8xf32> to vector<10x18x8xf32>
    %5 = vector.shape_cast %4 : vector<10x18x8xf32> to vector<180x8xf32>
    %c0_2 = arith.constant 0 : index
    %c0_3 = arith.constant 0 : index
    %6 = vector.load %arg3[%c0_2, %c0_3] : memref<8x32xf32, #tpu.memory_space<vmem>>, vector<8x32xf32>
    %cst = arith.constant dense<0.000000e+00> : vector<180x32xf32>
    %7 = tpu.matmul %5, %6, %cst {dimension_numbers = #tpu.dot_dimension_numbers<[1], [0], [0], [1], [0, 0, 1, 1], [], []>} : vector<180x8xf32>, vector<8x32xf32>, vector<180x32xf32> -> vector<180x32xf32>
    %c0_4 = arith.constant 0 : index
    %c0_5 = arith.constant 0 : index
    %8 = vector.load %arg4[%c0_4, %c0_5] : memref<1x32xf32, #tpu.memory_space<vmem>>, vector<1x32xf32>
    %9 = vector.broadcast %8 : vector<1x32xf32> to vector<180x32xf32>
    %10 = arith.addf %7, %9 : vector<180x32xf32>
    %cst_6 = arith.constant 0.000000e+00 : f32
    %11 = vector.broadcast %cst_6 : f32 to vector<180x32xf32>
    %12 = arith.maximumf %10, %11 : vector<180x32xf32>
    %13 = vector.shape_cast %12 : vector<180x32xf32> to vector<10x18x32xf32>
    %14 = tpu.iota {dimensions = array<i32: 0>} : vector<10x18x1xi32>
    %15 = vector.broadcast %1 : i32 to vector<10x18x1xi32>
    %16 = arith.addi %15, %14 : vector<10x18x1xi32>
    %17 = tpu.iota {dimensions = array<i32: 1>} : vector<10x18x1xi32>
    %c1_i32 = arith.constant 1 : i32
    %18 = vector.broadcast %c1_i32 : i32 to vector<10x18x1xi32>
    %19 = arith.cmpi sge, %16, %18 : vector<10x18x1xi32>
    %c17_i32 = arith.constant 17 : i32
    %20 = vector.broadcast %c17_i32 : i32 to vector<10x18x1xi32>
    %21 = arith.cmpi slt, %16, %20 : vector<10x18x1xi32>
    %22 = arith.andi %19, %21 : vector<10x18x1xi1>
    %c1_i32_7 = arith.constant 1 : i32
    %23 = vector.broadcast %c1_i32_7 : i32 to vector<10x18x1xi32>
    %24 = arith.cmpi sge, %17, %23 : vector<10x18x1xi32>
    %25 = arith.andi %22, %24 : vector<10x18x1xi1>
    %c17_i32_8 = arith.constant 17 : i32
    %26 = vector.broadcast %c17_i32_8 : i32 to vector<10x18x1xi32>
    %27 = arith.cmpi slt, %17, %26 : vector<10x18x1xi32>
    %28 = arith.andi %25, %27 : vector<10x18x1xi1>
    %cst_9 = arith.constant 0.000000e+00 : f32
    %29 = vector.shape_cast %28 : vector<10x18x1xi1> to vector<10x18x1xi1>
    %30 = vector.broadcast %29 : vector<10x18x1xi1> to vector<10x18x32xi1>
    %31 = vector.broadcast %cst_9 : f32 to vector<10x18x32xf32>
    %32 = arith.select %30, %13, %31 : vector<10x18x32xi1>, vector<10x18x32xf32>
    %c0_10 = arith.constant 0 : index
    %c0_11 = arith.constant 0 : index
    %c0_12 = arith.constant 0 : index
    %33 = vector.load %arg11[%c0_10, %c0_11, %c0_12] : memref<10x18x32xf32, #tpu.memory_space<vmem>>, vector<10x18x32xf32>
    tpu.vector_store %arg11[%c0_10, %c0_11, %c0_12], %32 {strides = array<i32>} : memref<10x18x32xf32, #tpu.memory_space<vmem>>, vector<10x18x32xf32>,
    %c0_13 = arith.constant 0 : index
    %c0_14 = arith.constant 0 : index
    %34 = vector.load %arg5[%c0_13, %c0_14] : memref<9x32xf32, #tpu.memory_space<vmem>>, vector<9x32xf32>
    %cst_15 = arith.constant 0.000000e+00 : f32
    %35 = vector.broadcast %cst_15 : f32 to vector<8x16x32xf32>
    %c0_16 = arith.constant 0 : index
    %c0_17 = arith.constant 0 : index
    %c0_18 = arith.constant 0 : index
    %36 = vector.load %arg11[%c0_16, %c0_17, %c0_18] : memref<10x18x32xf32, #tpu.memory_space<vmem>>, vector<8x16x32xf32>
    %37 = vector.extract_strided_slice %34 {offsets = [0, 0], sizes = [1, 32], strides = [1, 1]} : vector<9x32xf32> to vector<1x32xf32>
    %38 = vector.shape_cast %37 : vector<1x32xf32> to vector<32xf32>
    %39 = vector.shape_cast %38 : vector<32xf32> to vector<1x1x32xf32>
    %40 = vector.broadcast %39 : vector<1x1x32xf32> to vector<8x16x32xf32>
    %41 = arith.mulf %36, %40 : vector<8x16x32xf32>
    %42 = arith.addf %35, %41 : vector<8x16x32xf32>
    %c0_19 = arith.constant 0 : index
    %c1 = arith.constant 1 : index
    %c0_20 = arith.constant 0 : index
    %43 = vector.load %arg11[%c0_19, %c1, %c0_20] : memref<10x18x32xf32, #tpu.memory_space<vmem>>, vector<8x16x32xf32>
    %44 = vector.extract_strided_slice %34 {offsets = [1, 0], sizes = [1, 32], strides = [1, 1]} : vector<9x32xf32> to vector<1x32xf32>
    %45 = vector.shape_cast %44 : vector<1x32xf32> to vector<32xf32>
    %46 = vector.shape_cast %45 : vector<32xf32> to vector<1x1x32xf32>
    %47 = vector.broadcast %46 : vector<1x1x32xf32> to vector<8x16x32xf32>
    %48 = arith.mulf %43, %47 : vector<8x16x32xf32>
    %49 = arith.addf %42, %48 : vector<8x16x32xf32>
    %c0_21 = arith.constant 0 : index
    %c2 = arith.constant 2 : index
    %c0_22 = arith.constant 0 : index
    %50 = vector.load %arg11[%c0_21, %c2, %c0_22] : memref<10x18x32xf32, #tpu.memory_space<vmem>>, vector<8x16x32xf32>
    %51 = vector.extract_strided_slice %34 {offsets = [2, 0], sizes = [1, 32], strides = [1, 1]} : vector<9x32xf32> to vector<1x32xf32>
    %52 = vector.shape_cast %51 : vector<1x32xf32> to vector<32xf32>
    %53 = vector.shape_cast %52 : vector<32xf32> to vector<1x1x32xf32>
    %54 = vector.broadcast %53 : vector<1x1x32xf32> to vector<8x16x32xf32>
    %55 = arith.mulf %50, %54 : vector<8x16x32xf32>
    %56 = arith.addf %49, %55 : vector<8x16x32xf32>
    %c1_23 = arith.constant 1 : index
    %c0_24 = arith.constant 0 : index
    %c0_25 = arith.constant 0 : index
    %57 = vector.load %arg11[%c1_23, %c0_24, %c0_25] : memref<10x18x32xf32, #tpu.memory_space<vmem>>, vector<8x16x32xf32>
    %58 = vector.extract_strided_slice %34 {offsets = [3, 0], sizes = [1, 32], strides = [1, 1]} : vector<9x32xf32> to vector<1x32xf32>
    %59 = vector.shape_cast %58 : vector<1x32xf32> to vector<32xf32>
    %60 = vector.shape_cast %59 : vector<32xf32> to vector<1x1x32xf32>
    %61 = vector.broadcast %60 : vector<1x1x32xf32> to vector<8x16x32xf32>
    %62 = arith.mulf %57, %61 : vector<8x16x32xf32>
    %63 = arith.addf %56, %62 : vector<8x16x32xf32>
    %c1_26 = arith.constant 1 : index
    %c1_27 = arith.constant 1 : index
    %c0_28 = arith.constant 0 : index
    %64 = vector.load %arg11[%c1_26, %c1_27, %c0_28] : memref<10x18x32xf32, #tpu.memory_space<vmem>>, vector<8x16x32xf32>
    %65 = vector.extract_strided_slice %34 {offsets = [4, 0], sizes = [1, 32], strides = [1, 1]} : vector<9x32xf32> to vector<1x32xf32>
    %66 = vector.shape_cast %65 : vector<1x32xf32> to vector<32xf32>
    %67 = vector.shape_cast %66 : vector<32xf32> to vector<1x1x32xf32>
    %68 = vector.broadcast %67 : vector<1x1x32xf32> to vector<8x16x32xf32>
    %69 = arith.mulf %64, %68 : vector<8x16x32xf32>
    %70 = arith.addf %63, %69 : vector<8x16x32xf32>
    %c1_29 = arith.constant 1 : index
    %c2_30 = arith.constant 2 : index
    %c0_31 = arith.constant 0 : index
    %71 = vector.load %arg11[%c1_29, %c2_30, %c0_31] : memref<10x18x32xf32, #tpu.memory_space<vmem>>, vector<8x16x32xf32>
    %72 = vector.extract_strided_slice %34 {offsets = [5, 0], sizes = [1, 32], strides = [1, 1]} : vector<9x32xf32> to vector<1x32xf32>
    %73 = vector.shape_cast %72 : vector<1x32xf32> to vector<32xf32>
    %74 = vector.shape_cast %73 : vector<32xf32> to vector<1x1x32xf32>
    %75 = vector.broadcast %74 : vector<1x1x32xf32> to vector<8x16x32xf32>
    %76 = arith.mulf %71, %75 : vector<8x16x32xf32>
    %77 = arith.addf %70, %76 : vector<8x16x32xf32>
    %c2_32 = arith.constant 2 : index
    %c0_33 = arith.constant 0 : index
    %c0_34 = arith.constant 0 : index
    %78 = vector.load %arg11[%c2_32, %c0_33, %c0_34] : memref<10x18x32xf32, #tpu.memory_space<vmem>>, vector<8x16x32xf32>
    %79 = vector.extract_strided_slice %34 {offsets = [6, 0], sizes = [1, 32], strides = [1, 1]} : vector<9x32xf32> to vector<1x32xf32>
    %80 = vector.shape_cast %79 : vector<1x32xf32> to vector<32xf32>
    %81 = vector.shape_cast %80 : vector<32xf32> to vector<1x1x32xf32>
    %82 = vector.broadcast %81 : vector<1x1x32xf32> to vector<8x16x32xf32>
    %83 = arith.mulf %78, %82 : vector<8x16x32xf32>
    %84 = arith.addf %77, %83 : vector<8x16x32xf32>
    %c2_35 = arith.constant 2 : index
    %c1_36 = arith.constant 1 : index
    %c0_37 = arith.constant 0 : index
    %85 = vector.load %arg11[%c2_35, %c1_36, %c0_37] : memref<10x18x32xf32, #tpu.memory_space<vmem>>, vector<8x16x32xf32>
    %86 = vector.extract_strided_slice %34 {offsets = [7, 0], sizes = [1, 32], strides = [1, 1]} : vector<9x32xf32> to vector<1x32xf32>
    %87 = vector.shape_cast %86 : vector<1x32xf32> to vector<32xf32>
    %88 = vector.shape_cast %87 : vector<32xf32> to vector<1x1x32xf32>
    %89 = vector.broadcast %88 : vector<1x1x32xf32> to vector<8x16x32xf32>
    %90 = arith.mulf %85, %89 : vector<8x16x32xf32>
    %91 = arith.addf %84, %90 : vector<8x16x32xf32>
    %c2_38 = arith.constant 2 : index
    %c2_39 = arith.constant 2 : index
    %c0_40 = arith.constant 0 : index
    %92 = vector.load %arg11[%c2_38, %c2_39, %c0_40] : memref<10x18x32xf32, #tpu.memory_space<vmem>>, vector<8x16x32xf32>
    %93 = vector.extract_strided_slice %34 {offsets = [8, 0], sizes = [1, 32], strides = [1, 1]} : vector<9x32xf32> to vector<1x32xf32>
    %94 = vector.shape_cast %93 : vector<1x32xf32> to vector<32xf32>
    %95 = vector.shape_cast %94 : vector<32xf32> to vector<1x1x32xf32>
    %96 = vector.broadcast %95 : vector<1x1x32xf32> to vector<8x16x32xf32>
    %97 = arith.mulf %92, %96 : vector<8x16x32xf32>
    %98 = arith.addf %91, %97 : vector<8x16x32xf32>
    %c0_41 = arith.constant 0 : index
    %c0_42 = arith.constant 0 : index
    %99 = vector.load %arg6[%c0_41, %c0_42] : memref<1x32xf32, #tpu.memory_space<vmem>>, vector<1x32xf32>
    %100 = vector.shape_cast %99 : vector<1x32xf32> to vector<1x1x32xf32>
    %101 = vector.broadcast %100 : vector<1x1x32xf32> to vector<8x16x32xf32>
    %102 = arith.addf %98, %101 : vector<8x16x32xf32>
    %cst_43 = arith.constant 0.000000e+00 : f32
    %103 = vector.broadcast %cst_43 : f32 to vector<8x16x32xf32>
    %104 = arith.maximumf %102, %103 : vector<8x16x32xf32>
    %105 = vector.shape_cast %104 : vector<8x16x32xf32> to vector<128x32xf32>
    %c0_44 = arith.constant 0 : index
    %c0_45 = arith.constant 0 : index
    %106 = vector.load %arg7[%c0_44, %c0_45] : memref<32x8xf32, #tpu.memory_space<vmem>>, vector<32x8xf32>
    %cst_46 = arith.constant dense<0.000000e+00> : vector<128x8xf32>
    %107 = tpu.matmul %105, %106, %cst_46 {dimension_numbers = #tpu.dot_dimension_numbers<[1], [0], [0], [1], [0, 0, 1, 1], [], []>} : vector<128x32xf32>, vector<32x8xf32>, vector<128x8xf32> -> vector<128x8xf32>
    %c0_47 = arith.constant 0 : index
    %c0_48 = arith.constant 0 : index
    %108 = vector.load %arg8[%c0_47, %c0_48] : memref<1x8xf32, #tpu.memory_space<vmem>>, vector<1x8xf32>
    %109 = vector.broadcast %108 : vector<1x8xf32> to vector<128x8xf32>
    %110 = arith.addf %107, %109 : vector<128x8xf32>
    %111 = vector.shape_cast %110 : vector<128x8xf32> to vector<8x16x8xf32>
    %c0_49 = arith.constant 0 : index
    %c0_50 = arith.constant 0 : index
    %c0_51 = arith.constant 0 : index
    %c0_52 = arith.constant 0 : index
    %112 = vector.load %arg9[%c0_49, %c0_50, %c0_51, %c0_52] : memref<1x8x16x8xf32, #tpu.memory_space<vmem>>, vector<1x8x16x8xf32>
    %113 = vector.shape_cast %112 : vector<1x8x16x8xf32> to vector<8x16x8xf32>
    %114 = arith.addf %111, %113 : vector<8x16x8xf32>
    %c0_53 = arith.constant 0 : index
    %c0_54 = arith.constant 0 : index
    %c0_55 = arith.constant 0 : index
    %c0_56 = arith.constant 0 : index
    %115 = vector.load %arg10[%c0_53, %c0_54, %c0_55, %c0_56] : memref<1x8x16x8xf32, #tpu.memory_space<vmem>>, vector<1x8x16x8xf32>
    %116 = vector.shape_cast %115 : vector<1x8x16x8xf32> to vector<8x16x8xf32>
    %117 = vector.shape_cast %114 : vector<8x16x8xf32> to vector<1x8x16x8xf32>
    tpu.vector_store %arg10[%c0_53, %c0_54, %c0_55, %c0_56], %117 {strides = array<i32>} : memref<1x8x16x8xf32, #tpu.memory_space<vmem>>, vector<1x8x16x8xf32>,
    return
  }
  func.func @transform_0(%arg0: i32, %arg1: i32) -> (i32, i32, i32, i32) {
    %c0_i32 = arith.constant 0 : i32
    %c0_i32_0 = arith.constant 0 : i32
    %c0_i32_1 = arith.constant 0 : i32
    %c0_i32_2 = arith.constant 0 : i32
    return %arg0, %c0_i32, %c0_i32_0, %c0_i32_1 : i32, i32, i32, i32
  }
  func.func @transform_1(%arg0: i32, %arg1: i32) -> (i32, i32) {
    %c0_i32 = arith.constant 0 : i32
    %c0_i32_0 = arith.constant 0 : i32
    %c0_i32_1 = arith.constant 0 : i32
    return %c0_i32, %c0_i32_0 : i32, i32
  }
  func.func @transform_2(%arg0: i32, %arg1: i32) -> (i32, i32) {
    %c0_i32 = arith.constant 0 : i32
    %c0_i32_0 = arith.constant 0 : i32
    %c0_i32_1 = arith.constant 0 : i32
    return %c0_i32, %c0_i32_0 : i32, i32
  }
  func.func @transform_3(%arg0: i32, %arg1: i32) -> (i32, i32) {
    %c0_i32 = arith.constant 0 : i32
    %c0_i32_0 = arith.constant 0 : i32
    %c0_i32_1 = arith.constant 0 : i32
    return %c0_i32, %c0_i32_0 : i32, i32
  }
  func.func @transform_4(%arg0: i32, %arg1: i32) -> (i32, i32) {
    %c0_i32 = arith.constant 0 : i32
    %c0_i32_0 = arith.constant 0 : i32
    %c0_i32_1 = arith.constant 0 : i32
    return %c0_i32, %c0_i32_0 : i32, i32
  }
  func.func @transform_5(%arg0: i32, %arg1: i32) -> (i32, i32) {
    %c0_i32 = arith.constant 0 : i32
    %c0_i32_0 = arith.constant 0 : i32
    %c0_i32_1 = arith.constant 0 : i32
    return %c0_i32, %c0_i32_0 : i32, i32
  }
  func.func @transform_6(%arg0: i32, %arg1: i32) -> (i32, i32) {
    %c0_i32 = arith.constant 0 : i32
    %c0_i32_0 = arith.constant 0 : i32
    %c0_i32_1 = arith.constant 0 : i32
    return %c0_i32, %c0_i32_0 : i32, i32
  }
  func.func @transform_7(%arg0: i32, %arg1: i32) -> (i32, i32, i32, i32) {
    %c0_i32 = arith.constant 0 : i32
    %c0_i32_0 = arith.constant 0 : i32
    %c0_i32_1 = arith.constant 0 : i32
    return %arg0, %arg1, %c0_i32, %c0_i32_0 : i32, i32, i32, i32
  }
  func.func @transform_8(%arg0: i32, %arg1: i32) -> (i32, i32, i32, i32) {
    %c0_i32 = arith.constant 0 : i32
    %c0_i32_0 = arith.constant 0 : i32
    %c0_i32_1 = arith.constant 0 : i32
    return %arg0, %arg1, %c0_i32, %c0_i32_0 : i32, i32, i32, i32
  }
}

</mosaic_0001>

<llo_original>
// kernel: _mobile_block_forward.1
$region0: #{_mobile_block_forward.1}
  #allocation0 [shape = 'u32[]', space=smem, size = 0x4, offset = 0x4, fixed_abs, tag = 'smem constant byte address 0x4 - core index']
  #allocation1 [shape = 'u32[144,128]{1,0:T(1,128)}', space=vmem, size = 0x12000, scoped, tag = 'internal scratch']
  #allocation2 [shape = 'f32[10,18,32]{2,1,0:T(8,128)}', space=vmem, size = 0x1e000, scoped, tag = 'scratch operand']
  %s0 = inlined_call_operand.vmem [shape: f32[2,18,18,8], index: 0, kind: input, shape index: {}]
  %s1 = inlined_call_operand.vmem [shape: f32[8,32], index: 1, kind: input, shape index: {}]
  %s2 = inlined_call_operand.vmem [shape: f32[1,32], index: 2, kind: input, shape index: {}]
  %s3 = inlined_call_operand.vmem [shape: f32[9,32], index: 3, kind: input, shape index: {}]
  %s4 = inlined_call_operand.vmem [shape: f32[1,32], index: 4, kind: input, shape index: {}]
  %s5 = inlined_call_operand.vmem [shape: f32[32,8], index: 5, kind: input, shape index: {}]
  %s6 = inlined_call_operand.vmem [shape: f32[1,8], index: 6, kind: input, shape index: {}]
  %s7 = inlined_call_operand.vmem [shape: f32[2,16,16,8], index: 7, kind: input, shape index: {}, may-alias: {7,8}]
  %s8 = inlined_call_operand.vmem [shape: f32[2,16,16,8], index: 8, kind: output, shape index: {}, may-alias: {7,8}]
  %s9 = sld [smem:[#allocation0]]
  $region65: #{_mobile_block_forward.1} parent=0
    _
  %s11 = ssub.s32 1, %s9
  %s12 = scalar_select 0, %s11, %s9
  loop: start=0, step=1, limit=6
  $region2: #{_mobile_block_forward.1} parent=0 // loop_pre_header
    _
  $region3: #{_mobile_block_forward.1} parent=0 // loop_header
    %s14 = sphi 0, %s18
    %p15 = scmp.ge.s32.totalorder %s14, 6
    %s21 = sphi 0, %s33
    %s22 = sphi 0, %s29
    %s23 = sphi 0, %s21
    %s24 = sphi 0, %s22
    %s25 = sphi 0, %s23
    %s26 = sphi 0, %s24
    %s36 = sphi 0, %s38
    %s39 = sphi 0, %s36
    %s40 = sphi 0, %s39
    %s56 = sphi 0, %s40
    %s60 = sphi 0, %s60
    %s62 = sphi 0, %s60
    %s63 = sphi 0, %s62
    %s77 = sphi 0, %s63
    %s81 = sphi 0, %s81
    %s83 = sphi 0, %s81
    %s84 = sphi 0, %s83
    %s98 = sphi 0, %s84
    %s102 = sphi 0, %s102
    %s104 = sphi 0, %s102
    %s105 = sphi 0, %s104
    %s119 = sphi 0, %s105
    %s123 = sphi 0, %s123
    %s125 = sphi 0, %s123
    %s126 = sphi 0, %s125
    %s140 = sphi 0, %s126
    %s144 = sphi 0, %s144
    %s146 = sphi 0, %s144
    %s147 = sphi 0, %s146
    %s161 = sphi 0, %s147
    %s165 = sphi 0, %s165
    %s167 = sphi 0, %s165
    %s168 = sphi 0, %s167
    %s182 = sphi 0, %s168
    %s190 = sphi 0, %s192
    %s193 = sphi 0, %s190
    %s194 = sphi 0, %s193
    %s210 = sphi 0, %s194
    %s218 = sphi 0, %s220
    %s221 = sphi 0, %s218
    %s222 = sphi 0, %s221
    %s238 = sphi 0, %s222
  $region4: #{_mobile_block_forward.1} parent=0 // loop_header_branch
    %17 = sbr.rel (%p15) target = $region8
  $region5: #{_mobile_block_forward.1} parent=0 // loop_body
    %s19 = ssub.s32 %s14, 1
    %s20 = ssub.s32 %s14, 2
    %s27 = sadd.s32 1, %s22
    %p28 = scmp.ge.s32.totalorder %s27, 2
    %s29 = scalar_select %p28, 0, %s27
    %s30 = sadd.s32 1, %s21
    %s31 = scalar_select %p28, %s30, %s21
    %p32 = scmp.ge.s32.totalorder %s31, 2
    %s33 = scalar_select %p32, 0, %s31
    %s34 = ssub.s32 %s21, %s33
    %p35 = scmp.eq.s32.totalorder %s34, 0
    %s37 = sadd.s32 %s36, 1
    %s38 = scalar_select %p35, %s36, %s37
    %p41 = pneg %p35
    %p42 = scmp.eq.s32.totalorder %s14, 3
    %p43 = por %p41, %p42
    %p44 = scmp.ne.s32.totalorder %s36, %s39
    %p45 = scmp.eq.s32.totalorder %s14, 0
    %p46 = por %p44, %p45
    %p47 = scmp.ne.s32.totalorder %s36, %s39
    %p48 = scmp.eq.s32.totalorder %s19, 3
    %p49 = por %p47, %p48
    %p50 = scmp.ne.s32.totalorder %s39, %s40
    %p51 = scmp.eq.s32.totalorder %s19, 0
    %p52 = por %p50, %p51
    %p53 = scmp.ne.s32.totalorder %s39, %s40
    %p54 = scmp.eq.s32.totalorder %s20, 3
    %p55 = por %p53, %p54
    %p57 = scmp.ne.s32.totalorder %s40, %s56
    %p58 = scmp.eq.s32.totalorder %s20, 0
    %p59 = por %p57, %p58
    %s61 = sadd.s32 %s60, 1
    %p64 = scmp.eq.s32.totalorder %s14, 3
    %p65 = scmp.ne.s32.totalorder %s60, %s62
    %p66 = scmp.eq.s32.totalorder %s14, 0
    %p67 = por %p65, %p66
    %p68 = scmp.ne.s32.totalorder %s60, %s62
    %p69 = scmp.eq.s32.totalorder %s19, 3
    %p70 = por %p68, %p69
    %p71 = scmp.ne.s32.totalorder %s62, %s63
    %p72 = scmp.eq.s32.totalorder %s19, 0
    %p73 = por %p71, %p72
    %p74 = scmp.ne.s32.totalorder %s62, %s63
    %p75 = scmp.eq.s32.totalorder %s20, 3
    %p76 = por %p74, %p75
    %p78 = scmp.ne.s32.totalorder %s63, %s77
    %p79 = scmp.eq.s32.totalorder %s20, 0
    %p80 = por %p78, %p79
    %s82 = sadd.s32 %s81, 1
    %p85 = scmp.eq.s32.totalorder %s14, 3
    %p86 = scmp.ne.s32.totalorder %s81, %s83
    %p87 = scmp.eq.s32.totalorder %s14, 0
    %p88 = por %p86, %p87
    %p89 = scmp.ne.s32.totalorder %s81, %s83
    %p90 = scmp.eq.s32.totalorder %s19, 3
    %p91 = por %p89, %p90
    %p92 = scmp.ne.s32.totalorder %s83, %s84
    %p93 = scmp.eq.s32.totalorder %s19, 0
    %p94 = por %p92, %p93
    %p95 = scmp.ne.s32.totalorder %s83, %s84
    %p96 = scmp.eq.s32.totalorder %s20, 3
    %p97 = por %p95, %p96
    %p99 = scmp.ne.s32.totalorder %s84, %s98
    %p100 = scmp.eq.s32.totalorder %s20, 0
    %p101 = por %p99, %p100
    %s103 = sadd.s32 %s102, 1
    %p106 = scmp.eq.s32.totalorder %s14, 3
    %p107 = scmp.ne.s32.totalorder %s102, %s104
    %p108 = scmp.eq.s32.totalorder %s14, 0
    %p109 = por %p107, %p108
    %p110 = scmp.ne.s32.totalorder %s102, %s104
    %p111 = scmp.eq.s32.totalorder %s19, 3
    %p112 = por %p110, %p111
    %p113 = scmp.ne.s32.totalorder %s104, %s105
    %p114 = scmp.eq.s32.totalorder %s19, 0
    %p115 = por %p113, %p114
    %p116 = scmp.ne.s32.totalorder %s104, %s105
    %p117 = scmp.eq.s32.totalorder %s20, 3
    %p118 = por %p116, %p117
    %p120 = scmp.ne.s32.totalorder %s105, %s119
    %p121 = scmp.eq.s32.totalorder %s20, 0
    %p122 = por %p120, %p121
    %s124 = sadd.s32 %s123, 1
    %p127 = scmp.eq.s32.totalorder %s14, 3
    %p128 = scmp.ne.s32.totalorder %s123, %s125
    %p129 = scmp.eq.s32.totalorder %s14, 0
    %p130 = por %p128, %p129
    %p131 = scmp.ne.s32.totalorder %s123, %s125
    %p132 = scmp.eq.s32.totalorder %s19, 3
    %p133 = por %p131, %p132
    %p134 = scmp.ne.s32.totalorder %s125, %s126
    %p135 = scmp.eq.s32.totalorder %s19, 0
    %p136 = por %p134, %p135
    %p137 = scmp.ne.s32.totalorder %s125, %s126
    %p138 = scmp.eq.s32.totalorder %s20, 3
    %p139 = por %p137, %p138
    %p141 = scmp.ne.s32.totalorder %s126, %s140
    %p142 = scmp.eq.s32.totalorder %s20, 0
    %p143 = por %p141, %p142
    %s145 = sadd.s32 %s144, 1
    %p148 = scmp.eq.s32.totalorder %s14, 3
    %p149 = scmp.ne.s32.totalorder %s144, %s146
    %p150 = scmp.eq.s32.totalorder %s14, 0
    %p151 = por %p149, %p150
    %p152 = scmp.ne.s32.totalorder %s144, %s146
    %p153 = scmp.eq.s32.totalorder %s19, 3
    %p154 = por %p152, %p153
    %p155 = scmp.ne.s32.totalorder %s146, %s147
    %p156 = scmp.eq.s32.totalorder %s19, 0
    %p157 = por %p155, %p156
    %p158 = scmp.ne.s32.totalorder %s146, %s147
    %p159 = scmp.eq.s32.totalorder %s20, 3
    %p160 = por %p158, %p159
    %p162 = scmp.ne.s32.totalorder %s147, %s161
    %p163 = scmp.eq.s32.totalorder %s20, 0
    %p164 = por %p162, %p163
    %s166 = sadd.s32 %s165, 1
    %p169 = scmp.eq.s32.totalorder %s14, 3
    %p170 = scmp.ne.s32.totalorder %s165, %s167
    %p171 = scmp.eq.s32.totalorder %s14, 0
    %p172 = por %p170, %p171
    %p173 = scmp.ne.s32.totalorder %s165, %s167
    %p174 = scmp.eq.s32.totalorder %s19, 3
    %p175 = por %p173, %p174
    %p176 = scmp.ne.s32.totalorder %s167, %s168
    %p177 = scmp.eq.s32.totalorder %s19, 0
    %p178 = por %p176, %p177
    %p179 = scmp.ne.s32.totalorder %s167, %s168
    %p180 = scmp.eq.s32.totalorder %s20, 3
    %p181 = por %p179, %p180
    %p183 = scmp.ne.s32.totalorder %s168, %s182
    %p184 = scmp.eq.s32.totalorder %s20, 0
    %p185 = por %p183, %p184
    %s186 = ssub.s32 %s21, %s33
    %s187 = ssub.s32 %s22, %s29
    %s188 = sor.u32 %s186, %s187
    %p189 = scmp.eq.s32.totalorder %s188, 0
    %s191 = sadd.s32 %s190, 1
    %s192 = scalar_select %p189, %s190, %s191
    %p195 = pneg %p189
    %p196 = scmp.eq.s32.totalorder %s14, 3
    %p197 = por %p195, %p196
    %p198 = scmp.ne.s32.totalorder %s190, %s193
    %p199 = scmp.eq.s32.totalorder %s14, 0
    %p200 = por %p198, %p199
    %p201 = scmp.ne.s32.totalorder %s190, %s193
    %p202 = scmp.eq.s32.totalorder %s19, 3
    %p203 = por %p201, %p202
    %p204 = scmp.ne.s32.totalorder %s193, %s194
    %p205 = scmp.eq.s32.totalorder %s19, 0
    %p206 = por %p204, %p205
    %p207 = scmp.ne.s32.totalorder %s193, %s194
    %p208 = scmp.eq.s32.totalorder %s20, 3
    %p209 = por %p207, %p208
    %p211 = scmp.ne.s32.totalorder %s194, %s210
    %p212 = scmp.eq.s32.totalorder %s20, 0
    %p213 = por %p211, %p212
    %s214 = ssub.s32 %s21, %s33
    %s215 = ssub.s32 %s22, %s29
    %s216 = sor.u32 %s214, %s215
    %p217 = scmp.eq.s32.totalorder %s216, 0
    %s219 = sadd.s32 %s218, 1
    %s220 = scalar_select %p217, %s218, %s219
    %p223 = pneg %p217
    %p224 = scmp.eq.s32.totalorder %s14, 3
    %p225 = por %p223, %p224
    %p226 = scmp.ne.s32.totalorder %s218, %s221
    %p227 = scmp.eq.s32.totalorder %s14, 0
    %p228 = por %p226, %p227
    %p229 = scmp.ne.s32.totalorder %s218, %s221
    %p230 = scmp.eq.s32.totalorder %s19, 3
    %p231 = por %p229, %p230
    %p232 = scmp.ne.s32.totalorder %s221, %s222
    %p233 = scmp.eq.s32.totalorder %s19, 0
    %p234 = por %p232, %p233
    %p235 = scmp.ne.s32.totalorder %s221, %s222
    %p236 = scmp.eq.s32.totalorder %s20, 3
    %p237 = por %p235, %p236
    %p239 = scmp.ne.s32.totalorder %s222, %s238
    %p240 = scmp.eq.s32.totalorder %s20, 0
    %p241 = por %p239, %p240
    %p242 = scmp.le.s32.totalorder 1, %s14
    %p243 = scmp.lt.s32.totalorder %s14, 5
    %p244 = pnand %p242, %p243
    %p245 = pneg %p244
    // Predicated region
    $region9: #{_mobile_block_forward.1} parent=5 // pred_check
      _
    $region10: #{_mobile_block_forward.1} parent=5 // pred_check_branch
      %247 = sbr.rel (%p244) target = $region12
    $region11: #{_mobile_block_forward.1} parent=5 // pred_region
      %s248 = ssub.s32 %s14, 1
      // Predicated region
      $region13: #{_mobile_block_forward.1} parent=11 // pred_check
        %p249 = pneg %p73
      $region14: #{_mobile_block_forward.1} parent=11 // pred_check_branch
        %251 = sbr.rel (%p249) target = $region16
      $region15: #{_mobile_block_forward.1} parent=11 // pred_region
        _
      $region16: #{_mobile_block_forward.1} parent=11 // pred_fallthru
        _
      // Predicated region
      $region17: #{_mobile_block_forward.1} parent=11 // pred_check
        %p252 = pneg %p94
      $region18: #{_mobile_block_forward.1} parent=11 // pred_check_branch
        %254 = sbr.rel (%p252) target = $region20
      $region19: #{_mobile_block_forward.1} parent=11 // pred_region
        _
      $region20: #{_mobile_block_forward.1} parent=11 // pred_fallthru
        _
      // Predicated region
      $region21: #{_mobile_block_forward.1} parent=11 // pred_check
        %p255 = pneg %p115
      $region22: #{_mobile_block_forward.1} parent=11 // pred_check_branch
        %257 = sbr.rel (%p255) target = $region24
      $region23: #{_mobile_block_forward.1} parent=11 // pred_region
        _
      $region24: #{_mobile_block_forward.1} parent=11 // pred_fallthru
        _
      // Predicated region
      $region25: #{_mobile_block_forward.1} parent=11 // pred_check
        %p258 = pneg %p136
      $region26: #{_mobile_block_forward.1} parent=11 // pred_check_branch
        %260 = sbr.rel (%p258) target = $region28
      $region27: #{_mobile_block_forward.1} parent=11 // pred_region
        _
      $region28: #{_mobile_block_forward.1} parent=11 // pred_fallthru
        _
      // Predicated region
      $region29: #{_mobile_block_forward.1} parent=11 // pred_check
        %p261 = pneg %p157
      $region30: #{_mobile_block_forward.1} parent=11 // pred_check_branch
        %263 = sbr.rel (%p261) target = $region32
      $region31: #{_mobile_block_forward.1} parent=11 // pred_region
        _
      $region32: #{_mobile_block_forward.1} parent=11 // pred_fallthru
        _
      // Predicated region
      $region33: #{_mobile_block_forward.1} parent=11 // pred_check
        %p264 = pneg %p178
      $region34: #{_mobile_block_forward.1} parent=11 // pred_check_branch
        %266 = sbr.rel (%p264) target = $region36
      $region35: #{_mobile_block_forward.1} parent=11 // pred_region
        _
      $region36: #{_mobile_block_forward.1} parent=11 // pred_fallthru
        _
    $region12: #{_mobile_block_forward.1} parent=5 // pred_fallthru
      _
    %p267 = scmp.lt.s32.totalorder %s14, 4
    // Predicated region
    $region37: #{_mobile_block_forward.1} parent=5 // pred_check
      %p268 = pneg %p267
    $region38: #{_mobile_block_forward.1} parent=5 // pred_check_branch
      %270 = sbr.rel (%p268) target = $region40
    $region39: #{_mobile_block_forward.1} parent=5 // pred_region
      // Predicated region
      $region41: #{_mobile_block_forward.1} parent=39 // pred_check
        %p271 = pneg %p46
      $region42: #{_mobile_block_forward.1} parent=39 // pred_check_branch
        %273 = sbr.rel (%p271) target = $region44
      $region43: #{_mobile_block_forward.1} parent=39 // pred_region
        %p274 = scmp.lt.s32.totalorder %s21, 1
        %s275 = scalar_select %p274, %s21, 1
        %s276 = smul.addr %s275, 54
        %s277 = smul.addr %s276, 8
        %s278 = scalar_lea.vmem %s0, %s277
      $region44: #{_mobile_block_forward.1} parent=39 // pred_fallthru
        _
      // Predicated region
      $region45: #{_mobile_block_forward.1} parent=39 // pred_check
        %p279 = pneg %p200
      $region46: #{_mobile_block_forward.1} parent=39 // pred_check_branch
        %281 = sbr.rel (%p279) target = $region48
      $region47: #{_mobile_block_forward.1} parent=39 // pred_region
        %s282 = smul.u32 8, %s22
        %p283 = scmp.lt.s32.totalorder %s21, 1
        %s284 = scalar_select %p283, %s21, 1
        %p285 = scmp.lt.s32.totalorder %s282, 15
        %s286 = scalar_select %p285, %s282, 15
        %s287 = smul.addr %s286, 2
        %s288 = smul.addr %s284, 32
        %s289 = sadd.s32 %s287, %s288
        %s290 = smul.addr %s289, 8
        %s291 = scalar_lea.vmem %s7, %s290
        %s292 = smul.u32 8, %s22
      $region48: #{_mobile_block_forward.1} parent=39 // pred_fallthru
        _
    $region40: #{_mobile_block_forward.1} parent=5 // pred_fallthru
      _
    %p293 = scmp.le.s32.totalorder 1, %s14
    %p294 = scmp.lt.s32.totalorder %s14, 5
    %p295 = pnand %p293, %p294
    %p296 = pneg %p295
    // Predicated region
    $region49: #{_mobile_block_forward.1} parent=5 // pred_check
      _
    $region50: #{_mobile_block_forward.1} parent=5 // pred_check_branch
      %298 = sbr.rel (%p295) target = $region52
    $region51: #{_mobile_block_forward.1} parent=5 // pred_region
      %s299 = ssub.s32 %s14, 1
      %p300 = scmp.lt.s32.totalorder %s23, 1
      %s301 = scalar_select %p300, %s23, 1
      %s302 = smul.addr %s301, 54
      %s303 = smul.addr %s302, 8
      %s304 = scalar_lea.vmem %s0, %s303
      %p305 = pneg %p52
      %p306 = pneg %p49
      %p307 = pneg %p73
      %p308 = pneg %p70
      %p309 = pneg %p94
      %p310 = pneg %p91
      %p311 = pneg %p115
      %p312 = pneg %p112
      %p313 = pneg %p136
      %p314 = pneg %p133
      %p315 = pneg %p157
      %p316 = pneg %p154
      %p317 = pneg %p178
      %p318 = pneg %p175
      %s319 = smul.u32 8, %s24
      %p320 = scmp.lt.s32.totalorder %s23, 1
      %s321 = scalar_select %p320, %s23, 1
      %p322 = scmp.lt.s32.totalorder %s319, 15
      %s323 = scalar_select %p322, %s319, 15
      %s324 = smul.addr %s323, 2
      %s325 = smul.addr %s321, 32
      %s326 = sadd.s32 %s324, %s325
      %s327 = smul.addr %s326, 8
      %s328 = scalar_lea.vmem %s7, %s327
      %p329 = pneg %p206
      %p330 = pneg %p203
      %p331 = pneg %p234
      %p332 = pneg %p231
      %s333 = smul.u32 8, %s24
      %p334 = scmp.lt.s32.totalorder %s23, 1
      %s335 = scalar_select %p334, %s23, 1
      %p336 = scmp.lt.s32.totalorder %s333, 15
      %s337 = scalar_select %p336, %s333, 15
      %s338 = smul.addr %s337, 2
      %s339 = smul.addr %s335, 32
      %s340 = sadd.s32 %s338, %s339
      %s341 = smul.addr %s340, 8
      %s342 = scalar_lea.vmem %s8, %s341
      %p343 = scmp.lt.s32.totalorder %s23, 1
      %s344 = scalar_select %p343, %s23, 1
      %s345 = smul.addr %s344, 54
      %s346 = smul.addr %s345, 8
      %s347 = scalar_lea.vmem %s0, %s346
      %s348 = smul.u32 8, %s24
      %p349 = scmp.lt.s32.totalorder %s23, 1
      %s350 = scalar_select %p349, %s23, 1
      %p351 = scmp.lt.s32.totalorder %s348, 15
      %s352 = scalar_select %p351, %s348, 15
      %s353 = smul.addr %s352, 2
      %s354 = smul.addr %s350, 32
      %s355 = sadd.s32 %s353, %s354
      %s356 = smul.addr %s355, 8
      %s357 = scalar_lea.vmem %s7, %s356
      %s358 = smul.u32 8, %s24
      %s359 = smul.u32 8, %s24
      %p360 = scmp.lt.s32.totalorder %s23, 1
      %s361 = scalar_select %p360, %s23, 1
      %p362 = scmp.lt.s32.totalorder %s359, 15
      %s363 = scalar_select %p362, %s359, 15
      %s364 = smul.addr %s363, 2
      %s365 = smul.addr %s361, 32
      %s366 = sadd.s32 %s364, %s365
      %s367 = smul.addr %s366, 8
      %s368 = scalar_lea.vmem %s8, %s367
      %s369 = smul.u32 8, %s24
      %s370 = smul.u32 %s24, 8
      %s371 = smul.u32 %s370, 24
      %s372 = scalar_lea.vmem %s347, %s371
      %v373 = vld [vmem:[%s372] sm:$0xff]
      %v374 = vld [vmem:[%s372 + $0x8] sm:$0xff]
      %v375 = vld [vmem:[%s372 + $0x10] sm:$0x3]
      %v376 = vld [vmem:[%s372 + $0x18] sm:$0xff]
      %v377 = vld [vmem:[%s372 + $0x20] sm:$0xff]
      %v378 = vld [vmem:[%s372 + $0x28] sm:$0x3]
      %v379 = vld [vmem:[%s372 + $0x30] sm:$0xff]
      %v380 = vld [vmem:[%s372 + $0x38] sm:$0xff]
      %v381 = vld [vmem:[%s372 + $0x40] sm:$0x3]
      %v382 = vld [vmem:[%s372 + $0x48] sm:$0xff]
      %v383 = vld [vmem:[%s372 + $0x50] sm:$0xff]
      %v384 = vld [vmem:[%s372 + $0x58] sm:$0x3]
      %v385 = vld [vmem:[%s372 + $0x60] sm:$0xff]
      %v386 = vld [vmem:[%s372 + $0x68] sm:$0xff]
      %v387 = vld [vmem:[%s372 + $0x70] sm:$0x3]
      %v388 = vld [vmem:[%s372 + $0x78] sm:$0xff]
      %v389 = vld [vmem:[%s372 + $0x80] sm:$0xff]
      %v390 = vld [vmem:[%s372 + $0x88] sm:$0x3]
      %v391 = vld [vmem:[%s372 + $0x90] sm:$0xff]
      %v392 = vld [vmem:[%s372 + $0x98] sm:$0xff]
      %v393 = vld [vmem:[%s372 + $0xa0] sm:$0x3]
      %v394 = vld [vmem:[%s372 + $0xa8] sm:$0xff]
      %v395 = vld [vmem:[%s372 + $0xb0] sm:$0xff]
      %v396 = vld [vmem:[%s372 + $0xb8] sm:$0x3]
      %v397 = vld [vmem:[%s372 + $0xc0] sm:$0xff]
      %v398 = vld [vmem:[%s372 + $0xc8] sm:$0xff]
      %v399 = vld [vmem:[%s372 + $0xd0] sm:$0x3]
      %v400 = vld [vmem:[%s372 + $0xd8] sm:$0xff]
      %v401 = vld [vmem:[%s372 + $0xe0] sm:$0xff]
      %v402 = vld [vmem:[%s372 + $0xe8] sm:$0x3]
      %v433 = vcombine.high %v373, %v373
      %v435 = vunpack.c.l.s4 1983009808
      %v436 = vunpack.c.0.s8 %v435
      %v437 = vlaneseq
      %v438 = vshrl.u32 %v437, 7
      %v439 = vsub.s32 %v436, %v438
      %v440 = vrot.slane %v373, %v439
      %v442 = vunpack.c.l.s4 1983009808
      %v443 = vunpack.c.0.s8 %v442
      %v444 = vlaneseq
      %v445 = vshrl.u32 %v444, 7
      %v446 = vsub.s32 %v443, %v445
      %v447 = vrot.slane %v433, %v446
      %v448 = vcombine.high %v440, %v440
      %v449 = vcombine.high %v447, %v447
      %v450 = vcombine.high %v374, %v374
      %v452 = vunpack.c.l.s4 1983009808
      %v453 = vunpack.c.0.s8 %v452
      %v454 = vlaneseq
      %v455 = vshrl.u32 %v454, 7
      %v456 = vsub.s32 %v453, %v455
      %v457 = vrot.slane %v374, %v456
      %v459 = vunpack.c.l.s4 1983009808
      %v460 = vunpack.c.0.s8 %v459
      %v461 = vlaneseq
      %v462 = vshrl.u32 %v461, 7
      %v463 = vsub.s32 %v460, %v462
      %v464 = vrot.slane %v450, %v463
      %v465 = vcombine.high %v457, %v457
      %v466 = vcombine.high %v464, %v464
      %v468 = vunpack.c.l.s4 1983009808
      %v469 = vunpack.c.0.s8 %v468
      %v470 = vlaneseq
      %v471 = vshrl.u32 %v470, 7
      %v472 = vsub.s32 %v469, %v471
      %v473 = vrot.slane %v375, %v472
      %v474 = vcombine.high %v376, %v376
      %v476 = vunpack.c.l.s4 1983009808
      %v477 = vunpack.c.0.s8 %v476
      %v478 = vlaneseq
      %v479 = vshrl.u32 %v478, 7
      %v480 = vsub.s32 %v477, %v479
      %v481 = vrot.slane %v376, %v480
      %v483 = vunpack.c.l.s4 1983009808
      %v484 = vunpack.c.0.s8 %v483
      %v485 = vlaneseq
      %v486 = vshrl.u32 %v485, 7
      %v487 = vsub.s32 %v484, %v486
      %v488 = vrot.slane %v474, %v487
      %v489 = vcombine.high %v481, %v481
      %v490 = vcombine.high %v488, %v488
      %v491 = vcombine.high %v377, %v377
      %v493 = vunpack.c.l.s4 1983009808
      %v494 = vunpack.c.0.s8 %v493
      %v495 = vlaneseq
      %v496 = vshrl.u32 %v495, 7
      %v497 = vsub.s32 %v494, %v496
      %v498 = vrot.slane %v377, %v497
      %v500 = vunpack.c.l.s4 1983009808
      %v501 = vunpack.c.0.s8 %v500
      %v502 = vlaneseq
      %v503 = vshrl.u32 %v502, 7
      %v504 = vsub.s32 %v501, %v503
      %v505 = vrot.slane %v491, %v504
      %v506 = vcombine.high %v498, %v498
      %v507 = vcombine.high %v505, %v505
      %v509 = vunpack.c.l.s4 1983009808
      %v510 = vunpack.c.0.s8 %v509
      %v511 = vlaneseq
      %v512 = vshrl.u32 %v511, 7
      %v513 = vsub.s32 %v510, %v512
      %v514 = vrot.slane %v378, %v513
      %v515 = vcombine.high %v379, %v379
      %v517 = vunpack.c.l.s4 1983009808
      %v518 = vunpack.c.0.s8 %v517
      %v519 = vlaneseq
      %v520 = vshrl.u32 %v519, 7
      %v521 = vsub.s32 %v518, %v520
      %v522 = vrot.slane %v379, %v521
      %v524 = vunpack.c.l.s4 1983009808
      %v525 = vunpack.c.0.s8 %v524
      %v526 = vlaneseq
      %v527 = vshrl.u32 %v526, 7
      %v528 = vsub.s32 %v525, %v527
      %v529 = vrot.slane %v515, %v528
      %v530 = vcombine.high %v522, %v522
      %v531 = vcombine.high %v529, %v529
      %v532 = vcombine.high %v380, %v380
      %v534 = vunpack.c.l.s4 1983009808
      %v535 = vunpack.c.0.s8 %v534
      %v536 = vlaneseq
      %v537 = vshrl.u32 %v536, 7
      %v538 = vsub.s32 %v535, %v537
      %v539 = vrot.slane %v380, %v538
      %v541 = vunpack.c.l.s4 1983009808
      %v542 = vunpack.c.0.s8 %v541
      %v543 = vlaneseq
      %v544 = vshrl.u32 %v543, 7
      %v545 = vsub.s32 %v542, %v544
      %v546 = vrot.slane %v532, %v545
      %v547 = vcombine.high %v539, %v539
      %v548 = vcombine.high %v546, %v546
      %v550 = vunpack.c.l.s4 1983009808
      %v551 = vunpack.c.0.s8 %v550
      %v552 = vlaneseq
      %v553 = vshrl.u32 %v552, 7
      %v554 = vsub.s32 %v551, %v553
      %v555 = vrot.slane %v381, %v554
      %v556 = vcombine.high %v382, %v382
      %v558 = vunpack.c.l.s4 1983009808
      %v559 = vunpack.c.0.s8 %v558
      %v560 = vlaneseq
      %v561 = vshrl.u32 %v560, 7
      %v562 = vsub.s32 %v559, %v561
      %v563 = vrot.slane %v382, %v562
      %v565 = vunpack.c.l.s4 1983009808
      %v566 = vunpack.c.0.s8 %v565
      %v567 = vlaneseq
      %v568 = vshrl.u32 %v567, 7
      %v569 = vsub.s32 %v566, %v568
      %v570 = vrot.slane %v556, %v569
      %v571 = vcombine.high %v563, %v563
      %v572 = vcombine.high %v570, %v570
      %v573 = vcombine.high %v383, %v383
      %v575 = vunpack.c.l.s4 1983009808
      %v576 = vunpack.c.0.s8 %v575
      %v577 = vlaneseq
      %v578 = vshrl.u32 %v577, 7
      %v579 = vsub.s32 %v576, %v578
      %v580 = vrot.slane %v383, %v579
      %v582 = vunpack.c.l.s4 1983009808
      %v583 = vunpack.c.0.s8 %v582
      %v584 = vlaneseq
      %v585 = vshrl.u32 %v584, 7
      %v586 = vsub.s32 %v583, %v585
      %v587 = vrot.slane %v573, %v586
      %v588 = vcombine.high %v580, %v580
      %v589 = vcombine.high %v587, %v587
      %v591 = vunpack.c.l.s4 1983009808
      %v592 = vunpack.c.0.s8 %v591
      %v593 = vlaneseq
      %v594 = vshrl.u32 %v593, 7
      %v595 = vsub.s32 %v592, %v594
      %v596 = vrot.slane %v384, %v595
      %v597 = vcombine.high %v385, %v385
      %v599 = vunpack.c.l.s4 1983009808
      %v600 = vunpack.c.0.s8 %v599
      %v601 = vlaneseq
      %v602 = vshrl.u32 %v601, 7
      %v603 = vsub.s32 %v600, %v602
      %v604 = vrot.slane %v385, %v603
      %v606 = vunpack.c.l.s4 1983009808
      %v607 = vunpack.c.0.s8 %v606
      %v608 = vlaneseq
      %v609 = vshrl.u32 %v608, 7
      %v610 = vsub.s32 %v607, %v609
      %v611 = vrot.slane %v597, %v610
      %v612 = vcombine.high %v604, %v604
      %v613 = vcombine.high %v611, %v611
      %v614 = vcombine.high %v386, %v386
      %v616 = vunpack.c.l.s4 1983009808
      %v617 = vunpack.c.0.s8 %v616
      %v618 = vlaneseq
      %v619 = vshrl.u32 %v618, 7
      %v620 = vsub.s32 %v617, %v619
      %v621 = vrot.slane %v386, %v620
      %v623 = vunpack.c.l.s4 1983009808
      %v624 = vunpack.c.0.s8 %v623
      %v625 = vlaneseq
      %v626 = vshrl.u32 %v625, 7
      %v627 = vsub.s32 %v624, %v626
      %v628 = vrot.slane %v614, %v627
      %v629 = vcombine.high %v621, %v621
      %v630 = vcombine.high %v628, %v628
      %v632 = vunpack.c.l.s4 1983009808
      %v633 = vunpack.c.0.s8 %v632
      %v634 = vlaneseq
      %v635 = vshrl.u32 %v634, 7
      %v636 = vsub.s32 %v633, %v635
      %v637 = vrot.slane %v387, %v636
      %v638 = vcombine.high %v388, %v388
      %v640 = vunpack.c.l.s4 1983009808
      %v641 = vunpack.c.0.s8 %v640
      %v642 = vlaneseq
      %v643 = vshrl.u32 %v642, 7
      %v644 = vsub.s32 %v641, %v643
      %v645 = vrot.slane %v388, %v644
      %v647 = vunpack.c.l.s4 1983009808
      %v648 = vunpack.c.0.s8 %v647
      %v649 = vlaneseq
      %v650 = vshrl.u32 %v649, 7
      %v651 = vsub.s32 %v648, %v650
      %v652 = vrot.slane %v638, %v651
      %v653 = vcombine.high %v645, %v645
      %v654 = vcombine.high %v652, %v652
      %v655 = vcombine.high %v389, %v389
      %v657 = vunpack.c.l.s4 1983009808
      %v658 = vunpack.c.0.s8 %v657
      %v659 = vlaneseq
      %v660 = vshrl.u32 %v659, 7
      %v661 = vsub.s32 %v658, %v660
      %v662 = vrot.slane %v389, %v661
      %v664 = vunpack.c.l.s4 1983009808
      %v665 = vunpack.c.0.s8 %v664
      %v666 = vlaneseq
      %v667 = vshrl.u32 %v666, 7
      %v668 = vsub.s32 %v665, %v667
      %v669 = vrot.slane %v655, %v668
      %v670 = vcombine.high %v662, %v662
      %v671 = vcombine.high %v669, %v669
      %v673 = vunpack.c.l.s4 1983009808
      %v674 = vunpack.c.0.s8 %v673
      %v675 = vlaneseq
      %v676 = vshrl.u32 %v675, 7
      %v677 = vsub.s32 %v674, %v676
      %v678 = vrot.slane %v390, %v677
      %v679 = vcombine.high %v391, %v391
      %v681 = vunpack.c.l.s4 1983009808
      %v682 = vunpack.c.0.s8 %v681
      %v683 = vlaneseq
      %v684 = vshrl.u32 %v683, 7
      %v685 = vsub.s32 %v682, %v684
      %v686 = vrot.slane %v391, %v685
      %v688 = vunpack.c.l.s4 1983009808
      %v689 = vunpack.c.0.s8 %v688
      %v690 = vlaneseq
      %v691 = vshrl.u32 %v690, 7
      %v692 = vsub.s32 %v689, %v691
      %v693 = vrot.slane %v679, %v692
      %v694 = vcombine.high %v686, %v686
      %v695 = vcombine.high %v693, %v693
      %v696 = vcombine.high %v392, %v392
      %v698 = vunpack.c.l.s4 1983009808
      %v699 = vunpack.c.0.s8 %v698
      %v700 = vlaneseq
      %v701 = vshrl.u32 %v700, 7
      %v702 = vsub.s32 %v699, %v701
      %v703 = vrot.slane %v392, %v702
      %v705 = vunpack.c.l.s4 1983009808
      %v706 = vunpack.c.0.s8 %v705
      %v707 = vlaneseq
      %v708 = vshrl.u32 %v707, 7
      %v709 = vsub.s32 %v706, %v708
      %v710 = vrot.slane %v696, %v709
      %v711 = vcombine.high %v703, %v703
      %v712 = vcombine.high %v710, %v710
      %v714 = vunpack.c.l.s4 1983009808
      %v715 = vunpack.c.0.s8 %v714
      %v716 = vlaneseq
      %v717 = vshrl.u32 %v716, 7
      %v718 = vsub.s32 %v715, %v717
      %v719 = vrot.slane %v393, %v718
      %v720 = vcombine.high %v394, %v394
      %v722 = vunpack.c.l.s4 1983009808
      %v723 = vunpack.c.0.s8 %v722
      %v724 = vlaneseq
      %v725 = vshrl.u32 %v724, 7
      %v726 = vsub.s32 %v723, %v725
      %v727 = vrot.slane %v394, %v726
      %v729 = vunpack.c.l.s4 1983009808
      %v730 = vunpack.c.0.s8 %v729
      %v731 = vlaneseq
      %v732 = vshrl.u32 %v731, 7
      %v733 = vsub.s32 %v730, %v732
      %v734 = vrot.slane %v720, %v733
      %v735 = vcombine.high %v727, %v727
      %v736 = vcombine.high %v734, %v734
      %v737 = vcombine.high %v395, %v395
      %v739 = vunpack.c.l.s4 1983009808
      %v740 = vunpack.c.0.s8 %v739
      %v741 = vlaneseq
      %v742 = vshrl.u32 %v741, 7
      %v743 = vsub.s32 %v740, %v742
      %v744 = vrot.slane %v395, %v743
      %v746 = vunpack.c.l.s4 1983009808
      %v747 = vunpack.c.0.s8 %v746
      %v748 = vlaneseq
      %v749 = vshrl.u32 %v748, 7
      %v750 = vsub.s32 %v747, %v749
      %v751 = vrot.slane %v737, %v750
      %v752 = vcombine.high %v744, %v744
      %v753 = vcombine.high %v751, %v751
      %v755 = vunpack.c.l.s4 1983009808
      %v756 = vunpack.c.0.s8 %v755
      %v757 = vlaneseq
      %v758 = vshrl.u32 %v757, 7
      %v759 = vsub.s32 %v756, %v758
      %v760 = vrot.slane %v396, %v759
      %v761 = vcombine.high %v397, %v397
      %v763 = vunpack.c.l.s4 1983009808
      %v764 = vunpack.c.0.s8 %v763
      %v765 = vlaneseq
      %v766 = vshrl.u32 %v765, 7
      %v767 = vsub.s32 %v764, %v766
      %v768 = vrot.slane %v397, %v767
      %v770 = vunpack.c.l.s4 1983009808
      %v771 = vunpack.c.0.s8 %v770
      %v772 = vlaneseq
      %v773 = vshrl.u32 %v772, 7
      %v774 = vsub.s32 %v771, %v773
      %v775 = vrot.slane %v761, %v774
      %v776 = vcombine.high %v768, %v768
      %v777 = vcombine.high %v775, %v775
      %v778 = vcombine.high %v398, %v398
      %v780 = vunpack.c.l.s4 1983009808
      %v781 = vunpack.c.0.s8 %v780
      %v782 = vlaneseq
      %v783 = vshrl.u32 %v782, 7
      %v784 = vsub.s32 %v781, %v783
      %v785 = vrot.slane %v398, %v784
      %v787 = vunpack.c.l.s4 1983009808
      %v788 = vunpack.c.0.s8 %v787
      %v789 = vlaneseq
      %v790 = vshrl.u32 %v789, 7
      %v791 = vsub.s32 %v788, %v790
      %v792 = vrot.slane %v778, %v791
      %v793 = vcombine.high %v785, %v785
      %v794 = vcombine.high %v792, %v792
      %v796 = vunpack.c.l.s4 1983009808
      %v797 = vunpack.c.0.s8 %v796
      %v798 = vlaneseq
      %v799 = vshrl.u32 %v798, 7
      %v800 = vsub.s32 %v797, %v799
      %v801 = vrot.slane %v399, %v800
      %v802 = vcombine.high %v400, %v400
      %v804 = vunpack.c.l.s4 1983009808
      %v805 = vunpack.c.0.s8 %v804
      %v806 = vlaneseq
      %v807 = vshrl.u32 %v806, 7
      %v808 = vsub.s32 %v805, %v807
      %v809 = vrot.slane %v400, %v808
      %v811 = vunpack.c.l.s4 1983009808
      %v812 = vunpack.c.0.s8 %v811
      %v813 = vlaneseq
      %v814 = vshrl.u32 %v813, 7
      %v815 = vsub.s32 %v812, %v814
      %v816 = vrot.slane %v802, %v815
      %v817 = vcombine.high %v809, %v809
      %v818 = vcombine.high %v816, %v816
      %v819 = vcombine.high %v401, %v401
      %v821 = vunpack.c.l.s4 1983009808
      %v822 = vunpack.c.0.s8 %v821
      %v823 = vlaneseq
      %v824 = vshrl.u32 %v823, 7
      %v825 = vsub.s32 %v822, %v824
      %v826 = vrot.slane %v401, %v825
      %v828 = vunpack.c.l.s4 1983009808
      %v829 = vunpack.c.0.s8 %v828
      %v830 = vlaneseq
      %v831 = vshrl.u32 %v830, 7
      %v832 = vsub.s32 %v829, %v831
      %v833 = vrot.slane %v819, %v832
      %v834 = vcombine.high %v826, %v826
      %v835 = vcombine.high %v833, %v833
      %v837 = vunpack.c.l.s4 1983009808
      %v838 = vunpack.c.0.s8 %v837
      %v839 = vlaneseq
      %v840 = vshrl.u32 %v839, 7
      %v841 = vsub.s32 %v838, %v840
      %v842 = vrot.slane %v402, %v841
      %v843 = vld [vmem:[%s1] sm:$0xff]
      %v844 = vld [vmem:[%s2] sm:$0x1]
      %v846 = vlaneseq
      %v847 = vshrl.u32 %v846, 7
      %v848 = vsub.s32 0, %v847
      %v849 = vrot.slane %v844, %v848
      %v851 = vcombine.low %v440, %v448
      %v852 = vcombine.low %v447, %v449
      %v854 = vunpack.c.l.s4 1983009808
      %v855 = vunpack.c.0.s8 %v854
      %v856 = vlaneseq
      %v857 = vshrl.u32 %v856, 7
      %v858 = vsub.s32 %v855, %v857
      %v859 = vrot.slane %v851, %v858
      %v861 = vunpack.c.l.s4 1983009808
      %v862 = vunpack.c.0.s8 %v861
      %v863 = vlaneseq
      %v864 = vshrl.u32 %v863, 7
      %v865 = vsub.s32 %v862, %v864
      %v866 = vrot.slane %v852, %v865
      %v867 = vcombine.low %v859, %v866
      %v868 = vcombine.low %v457, %v465
      %v869 = vcombine.low %v464, %v466
      %v871 = vunpack.c.l.s4 1983009808
      %v872 = vunpack.c.0.s8 %v871
      %v873 = vlaneseq
      %v874 = vshrl.u32 %v873, 7
      %v875 = vsub.s32 %v872, %v874
      %v876 = vrot.slane %v868, %v875
      %v878 = vunpack.c.l.s4 1983009808
      %v879 = vunpack.c.0.s8 %v878
      %v880 = vlaneseq
      %v881 = vshrl.u32 %v880, 7
      %v882 = vsub.s32 %v879, %v881
      %v883 = vrot.slane %v869, %v882
      %v884 = vcombine.low %v876, %v883
      %v885 = vcombine.low %v473, %v481
      %v886 = vcombine.low %v489, %v488
      %v888 = vunpack.c.l.s4 1983009808
      %v889 = vunpack.c.0.s8 %v888
      %v890 = vlaneseq
      %v891 = vshrl.u32 %v890, 7
      %v892 = vsub.s32 %v889, %v891
      %v893 = vrot.slane %v885, %v892
      %v895 = vunpack.c.l.s4 1983009808
      %v896 = vunpack.c.0.s8 %v895
      %v897 = vlaneseq
      %v898 = vshrl.u32 %v897, 7
      %v899 = vsub.s32 %v896, %v898
      %v900 = vrot.slane %v886, %v899
      %v901 = vcombine.low %v893, %v900
      %v902 = vcombine.low %v490, %v498
      %v903 = vcombine.low %v506, %v505
      %v905 = vunpack.c.l.s4 1983009808
      %v906 = vunpack.c.0.s8 %v905
      %v907 = vlaneseq
      %v908 = vshrl.u32 %v907, 7
      %v909 = vsub.s32 %v906, %v908
      %v910 = vrot.slane %v902, %v909
      %v912 = vunpack.c.l.s4 1983009808
      %v913 = vunpack.c.0.s8 %v912
      %v914 = vlaneseq
      %v915 = vshrl.u32 %v914, 7
      %v916 = vsub.s32 %v913, %v915
      %v917 = vrot.slane %v903, %v916
      %v918 = vcombine.low %v910, %v917
      %v919 = vcombine.low %v507, %v514
      %v920 = vcombine.low %v522, %v530
      %v922 = vunpack.c.l.s4 1983009808
      %v923 = vunpack.c.0.s8 %v922
      %v924 = vlaneseq
      %v925 = vshrl.u32 %v924, 7
      %v926 = vsub.s32 %v923, %v925
      %v927 = vrot.slane %v919, %v926
      %v929 = vunpack.c.l.s4 1983009808
      %v930 = vunpack.c.0.s8 %v929
      %v931 = vlaneseq
      %v932 = vshrl.u32 %v931, 7
      %v933 = vsub.s32 %v930, %v932
      %v934 = vrot.slane %v920, %v933
      %v935 = vcombine.low %v927, %v934
      %v936 = vcombine.low %v529, %v531
      %v937 = vcombine.low %v539, %v547
      %v939 = vunpack.c.l.s4 1983009808
      %v940 = vunpack.c.0.s8 %v939
      %v941 = vlaneseq
      %v942 = vshrl.u32 %v941, 7
      %v943 = vsub.s32 %v940, %v942
      %v944 = vrot.slane %v936, %v943
      %v946 = vunpack.c.l.s4 1983009808
      %v947 = vunpack.c.0.s8 %v946
      %v948 = vlaneseq
      %v949 = vshrl.u32 %v948, 7
      %v950 = vsub.s32 %v947, %v949
      %v951 = vrot.slane %v937, %v950
      %v952 = vcombine.low %v944, %v951
      %v953 = vcombine.low %v546, %v548
      %v954 = vcombine.low %v555, %v563
      %v956 = vunpack.c.l.s4 1983009808
      %v957 = vunpack.c.0.s8 %v956
      %v958 = vlaneseq
      %v959 = vshrl.u32 %v958, 7
      %v960 = vsub.s32 %v957, %v959
      %v961 = vrot.slane %v953, %v960
      %v963 = vunpack.c.l.s4 1983009808
      %v964 = vunpack.c.0.s8 %v963
      %v965 = vlaneseq
      %v966 = vshrl.u32 %v965, 7
      %v967 = vsub.s32 %v964, %v966
      %v968 = vrot.slane %v954, %v967
      %v969 = vcombine.low %v961, %v968
      %v970 = vcombine.low %v571, %v570
      %v971 = vcombine.low %v572, %v580
      %v973 = vunpack.c.l.s4 1983009808
      %v974 = vunpack.c.0.s8 %v973
      %v975 = vlaneseq
      %v976 = vshrl.u32 %v975, 7
      %v977 = vsub.s32 %v974, %v976
      %v978 = vrot.slane %v970, %v977
      %v980 = vunpack.c.l.s4 1983009808
      %v981 = vunpack.c.0.s8 %v980
      %v982 = vlaneseq
      %v983 = vshrl.u32 %v982, 7
      %v984 = vsub.s32 %v981, %v983
      %v985 = vrot.slane %v971, %v984
      %v986 = vcombine.low %v978, %v985
      %v987 = vcombine.low %v588, %v587
      %v988 = vcombine.low %v589, %v596
      %v990 = vunpack.c.l.s4 1983009808
      %v991 = vunpack.c.0.s8 %v990
      %v992 = vlaneseq
      %v993 = vshrl.u32 %v992, 7
      %v994 = vsub.s32 %v991, %v993
      %v995 = vrot.slane %v987, %v994
      %v997 = vunpack.c.l.s4 1983009808
      %v998 = vunpack.c.0.s8 %v997
      %v999 = vlaneseq
      %v1000 = vshrl.u32 %v999, 7
      %v1001 = vsub.s32 %v998, %v1000
      %v1002 = vrot.slane %v988, %v1001
      %v1003 = vcombine.low %v995, %v1002
      %v1004 = vcombine.low %v604, %v612
      %v1005 = vcombine.low %v611, %v613
      %v1007 = vunpack.c.l.s4 1983009808
      %v1008 = vunpack.c.0.s8 %v1007
      %v1009 = vlaneseq
      %v1010 = vshrl.u32 %v1009, 7
      %v1011 = vsub.s32 %v1008, %v1010
      %v1012 = vrot.slane %v1004, %v1011
      %v1014 = vunpack.c.l.s4 1983009808
      %v1015 = vunpack.c.0.s8 %v1014
      %v1016 = vlaneseq
      %v1017 = vshrl.u32 %v1016, 7
      %v1018 = vsub.s32 %v1015, %v1017
      %v1019 = vrot.slane %v1005, %v1018
      %v1020 = vcombine.low %v1012, %v1019
      %v1021 = vcombine.low %v621, %v629
      %v1022 = vcombine.low %v628, %v630
      %v1024 = vunpack.c.l.s4 1983009808
      %v1025 = vunpack.c.0.s8 %v1024
      %v1026 = vlaneseq
      %v1027 = vshrl.u32 %v1026, 7
      %v1028 = vsub.s32 %v1025, %v1027
      %v1029 = vrot.slane %v1021, %v1028
      %v1031 = vunpack.c.l.s4 1983009808
      %v1032 = vunpack.c.0.s8 %v1031
      %v1033 = vlaneseq
      %v1034 = vshrl.u32 %v1033, 7
      %v1035 = vsub.s32 %v1032, %v1034
      %v1036 = vrot.slane %v1022, %v1035
      %v1037 = vcombine.low %v1029, %v1036
      %v1038 = vcombine.low %v637, %v645
      %v1039 = vcombine.low %v653, %v652
      %v1041 = vunpack.c.l.s4 1983009808
      %v1042 = vunpack.c.0.s8 %v1041
      %v1043 = vlaneseq
      %v1044 = vshrl.u32 %v1043, 7
      %v1045 = vsub.s32 %v1042, %v1044
      %v1046 = vrot.slane %v1038, %v1045
      %v1048 = vunpack.c.l.s4 1983009808
      %v1049 = vunpack.c.0.s8 %v1048
      %v1050 = vlaneseq
      %v1051 = vshrl.u32 %v1050, 7
      %v1052 = vsub.s32 %v1049, %v1051
      %v1053 = vrot.slane %v1039, %v1052
      %v1054 = vcombine.low %v1046, %v1053
      %v1055 = vcombine.low %v654, %v662
      %v1056 = vcombine.low %v670, %v669
      %v1058 = vunpack.c.l.s4 1983009808
      %v1059 = vunpack.c.0.s8 %v1058
      %v1060 = vlaneseq
      %v1061 = vshrl.u32 %v1060, 7
      %v1062 = vsub.s32 %v1059, %v1061
      %v1063 = vrot.slane %v1055, %v1062
      %v1065 = vunpack.c.l.s4 1983009808
      %v1066 = vunpack.c.0.s8 %v1065
      %v1067 = vlaneseq
      %v1068 = vshrl.u32 %v1067, 7
      %v1069 = vsub.s32 %v1066, %v1068
      %v1070 = vrot.slane %v1056, %v1069
      %v1071 = vcombine.low %v1063, %v1070
      %v1072 = vcombine.low %v671, %v678
      %v1073 = vcombine.low %v686, %v694
      %v1075 = vunpack.c.l.s4 1983009808
      %v1076 = vunpack.c.0.s8 %v1075
      %v1077 = vlaneseq
      %v1078 = vshrl.u32 %v1077, 7
      %v1079 = vsub.s32 %v1076, %v1078
      %v1080 = vrot.slane %v1072, %v1079
      %v1082 = vunpack.c.l.s4 1983009808
      %v1083 = vunpack.c.0.s8 %v1082
      %v1084 = vlaneseq
      %v1085 = vshrl.u32 %v1084, 7
      %v1086 = vsub.s32 %v1083, %v1085
      %v1087 = vrot.slane %v1073, %v1086
      %v1088 = vcombine.low %v1080, %v1087
      %v1089 = vcombine.low %v693, %v695
      %v1090 = vcombine.low %v703, %v711
      %v1092 = vunpack.c.l.s4 1983009808
      %v1093 = vunpack.c.0.s8 %v1092
      %v1094 = vlaneseq
      %v1095 = vshrl.u32 %v1094, 7
      %v1096 = vsub.s32 %v1093, %v1095
      %v1097 = vrot.slane %v1089, %v1096
      %v1099 = vunpack.c.l.s4 1983009808
      %v1100 = vunpack.c.0.s8 %v1099
      %v1101 = vlaneseq
      %v1102 = vshrl.u32 %v1101, 7
      %v1103 = vsub.s32 %v1100, %v1102
      %v1104 = vrot.slane %v1090, %v1103
      %v1105 = vcombine.low %v1097, %v1104
      %v1106 = vcombine.low %v710, %v712
      %v1107 = vcombine.low %v719, %v727
      %v1109 = vunpack.c.l.s4 1983009808
      %v1110 = vunpack.c.0.s8 %v1109
      %v1111 = vlaneseq
      %v1112 = vshrl.u32 %v1111, 7
      %v1113 = vsub.s32 %v1110, %v1112
      %v1114 = vrot.slane %v1106, %v1113
      %v1116 = vunpack.c.l.s4 1983009808
      %v1117 = vunpack.c.0.s8 %v1116
      %v1118 = vlaneseq
      %v1119 = vshrl.u32 %v1118, 7
      %v1120 = vsub.s32 %v1117, %v1119
      %v1121 = vrot.slane %v1107, %v1120
      %v1122 = vcombine.low %v1114, %v1121
      %v1123 = vcombine.low %v735, %v734
      %v1124 = vcombine.low %v736, %v744
      %v1126 = vunpack.c.l.s4 1983009808
      %v1127 = vunpack.c.0.s8 %v1126
      %v1128 = vlaneseq
      %v1129 = vshrl.u32 %v1128, 7
      %v1130 = vsub.s32 %v1127, %v1129
      %v1131 = vrot.slane %v1123, %v1130
      %v1133 = vunpack.c.l.s4 1983009808
      %v1134 = vunpack.c.0.s8 %v1133
      %v1135 = vlaneseq
      %v1136 = vshrl.u32 %v1135, 7
      %v1137 = vsub.s32 %v1134, %v1136
      %v1138 = vrot.slane %v1124, %v1137
      %v1139 = vcombine.low %v1131, %v1138
      %v1140 = vcombine.low %v752, %v751
      %v1141 = vcombine.low %v753, %v760
      %v1143 = vunpack.c.l.s4 1983009808
      %v1144 = vunpack.c.0.s8 %v1143
      %v1145 = vlaneseq
      %v1146 = vshrl.u32 %v1145, 7
      %v1147 = vsub.s32 %v1144, %v1146
      %v1148 = vrot.slane %v1140, %v1147
      %v1150 = vunpack.c.l.s4 1983009808
      %v1151 = vunpack.c.0.s8 %v1150
      %v1152 = vlaneseq
      %v1153 = vshrl.u32 %v1152, 7
      %v1154 = vsub.s32 %v1151, %v1153
      %v1155 = vrot.slane %v1141, %v1154
      %v1156 = vcombine.low %v1148, %v1155
      %v1157 = vcombine.low %v768, %v776
      %v1158 = vcombine.low %v775, %v777
      %v1160 = vunpack.c.l.s4 1983009808
      %v1161 = vunpack.c.0.s8 %v1160
      %v1162 = vlaneseq
      %v1163 = vshrl.u32 %v1162, 7
      %v1164 = vsub.s32 %v1161, %v1163
      %v1165 = vrot.slane %v1157, %v1164
      %v1167 = vunpack.c.l.s4 1983009808
      %v1168 = vunpack.c.0.s8 %v1167
      %v1169 = vlaneseq
      %v1170 = vshrl.u32 %v1169, 7
      %v1171 = vsub.s32 %v1168, %v1170
      %v1172 = vrot.slane %v1158, %v1171
      %v1173 = vcombine.low %v1165, %v1172
      %v1174 = vcombine.low %v785, %v793
      %v1175 = vcombine.low %v792, %v794
      %v1177 = vunpack.c.l.s4 1983009808
      %v1178 = vunpack.c.0.s8 %v1177
      %v1179 = vlaneseq
      %v1180 = vshrl.u32 %v1179, 7
      %v1181 = vsub.s32 %v1178, %v1180
      %v1182 = vrot.slane %v1174, %v1181
      %v1184 = vunpack.c.l.s4 1983009808
      %v1185 = vunpack.c.0.s8 %v1184
      %v1186 = vlaneseq
      %v1187 = vshrl.u32 %v1186, 7
      %v1188 = vsub.s32 %v1185, %v1187
      %v1189 = vrot.slane %v1175, %v1188
      %v1190 = vcombine.low %v1182, %v1189
      %v1191 = vcombine.low %v801, %v809
      %v1192 = vcombine.low %v817, %v816
      %v1194 = vunpack.c.l.s4 1983009808
      %v1195 = vunpack.c.0.s8 %v1194
      %v1196 = vlaneseq
      %v1197 = vshrl.u32 %v1196, 7
      %v1198 = vsub.s32 %v1195, %v1197
      %v1199 = vrot.slane %v1191, %v1198
      %v1201 = vunpack.c.l.s4 1983009808
      %v1202 = vunpack.c.0.s8 %v1201
      %v1203 = vlaneseq
      %v1204 = vshrl.u32 %v1203, 7
      %v1205 = vsub.s32 %v1202, %v1204
      %v1206 = vrot.slane %v1192, %v1205
      %v1207 = vcombine.low %v1199, %v1206
      %v1208 = vcombine.low %v818, %v826
      %v1209 = vcombine.low %v834, %v833
      %v1211 = vunpack.c.l.s4 1983009808
      %v1212 = vunpack.c.0.s8 %v1211
      %v1213 = vlaneseq
      %v1214 = vshrl.u32 %v1213, 7
      %v1215 = vsub.s32 %v1212, %v1214
      %v1216 = vrot.slane %v1208, %v1215
      %v1218 = vunpack.c.l.s4 1983009808
      %v1219 = vunpack.c.0.s8 %v1218
      %v1220 = vlaneseq
      %v1221 = vshrl.u32 %v1220, 7
      %v1222 = vsub.s32 %v1219, %v1221
      %v1223 = vrot.slane %v1209, %v1222
      %v1224 = vcombine.low %v1216, %v1223
      %v1225 = vcombine.low %v835, %v842
      %v1227 = vunpack.c.l.s4 1983009808
      %v1228 = vunpack.c.0.s8 %v1227
      %v1229 = vlaneseq
      %v1230 = vshrl.u32 %v1229, 7
      %v1231 = vsub.s32 %v1228, %v1230
      %v1232 = vrot.slane %v1225, %v1231
      %vm1233 = vcmask 64512
      %v1234 = vsel %vm1233, %v867, 0
      %v1236 = vsel %vm1233, %v884, 0
      %v1238 = vsel %vm1233, %v901, 0
      %v1240 = vsel %vm1233, %v918, 0
      %v1242 = vsel %vm1233, %v935, 0
      %v1244 = vsel %vm1233, %v952, 0
      %v1246 = vsel %vm1233, %v969, 0
      %v1248 = vsel %vm1233, %v986, 0
      %v1250 = vsel %vm1233, %v1003, 0
      %v1252 = vsel %vm1233, %v1020, 0
      %v1254 = vsel %vm1233, %v1037, 0
      %v1256 = vsel %vm1233, %v1054, 0
      %v1258 = vsel %vm1233, %v1071, 0
      %v1260 = vsel %vm1233, %v1088, 0
      %v1262 = vsel %vm1233, %v1105, 0
      %v1264 = vsel %vm1233, %v1122, 0
      %v1266 = vsel %vm1233, %v1139, 0
      %v1268 = vsel %vm1233, %v1156, 0
      %v1270 = vsel %vm1233, %v1173, 0
      %v1272 = vsel %vm1233, %v1190, 0
      %v1274 = vsel %vm1233, %v1207, 0
      %v1276 = vsel %vm1233, %v1224, 0
      %v1278 = vsel %vm1233, %v1232, 0
      %1280 = vmatprep.subr.mxu0 0.0
      %1281 = vmatpush1.msra.mxu0 %v843
      %1282 = vmatprep.subr.mxu0 0.0
      %1283 = vmatpush1.msra.mxu0 0.0
      %1284 = vmatprep.subr.mxu0 0.0
      %1285 = vmatpush1.msra.mxu0 0.0
      %1286 = vmatprep.subr.mxu0 0.0
      %1287 = vmatpush1.msra.mxu0 0.0
      %1288 = vmatprep.subr.mxu0 0.0
      %1289 = vmatpush1.msra.mxu0 0.0
      %1290 = vmatprep.subr.mxu0 0.0
      %1291 = vmatpush1.msra.mxu0 0.0
      %1292 = vmatprep.subr.mxu0 0.0
      %1293 = vmatpush1.msra.mxu0 0.0
      %1294 = vmatprep.subr.mxu0 0.0
      %1295 = vmatpush1.msra.mxu0 0.0
      %1296 = vmatprep.subr.mxu0 0.0
      %1297 = vmatpush1.msra.mxu0 0.0
      %1298 = vmatprep.subr.mxu0 0.0
      %1299 = vmatpush1.msra.mxu0 0.0
      %1300 = vmatprep.subr.mxu0 0.0
      %1301 = vmatpush1.msra.mxu0 0.0
      %1302 = vmatprep.subr.mxu0 0.0
      %1303 = vmatpush1.msra.mxu0 0.0
      %1304 = vmatprep.subr.mxu0 0.0
      %1305 = vmatpush1.msra.mxu0 0.0
      %1306 = vmatprep.subr.mxu0 0.0
      %1307 = vmatpush1.msra.mxu0 0.0
      %1308 = vmatprep.subr.mxu0 0.0
      %1309 = vmatpush1.msra.mxu0 0.0
      %1310 = vmatprep.subr.mxu0 0.0
      %1311 = vmatpush1.msra.mxu0 0.0
      %1312 = vmatprep.subr.mxu0 0.0
      %1313 = vmatpush1.msra.mxu0 0.0
      %1314 = vmatprep.subr.mxu0 0.0
      %1315 = vmatpush1.msra.mxu0 0.0
      %1316 = vmatprep.subr.mxu0 0.0
      %1317 = vmatpush1.msra.mxu0 0.0
      %1318 = vmatprep.subr.mxu0 0.0
      %1319 = vmatpush1.msra.mxu0 0.0
      %1320 = vmatprep.subr.mxu0 0.0
      %1321 = vmatpush1.msra.mxu0 0.0
      %1322 = vmatprep.subr.mxu0 0.0
      %1323 = vmatpush1.msra.mxu0 0.0
      %1324 = vmatprep.subr.mxu0 0.0
      %1325 = vmatpush1.msra.mxu0 0.0
      %1326 = vmatprep.subr.mxu0 0.0
      %1327 = vmatpush1.msra.mxu0 0.0
      %1328 = vmatprep.subr.mxu0 0.0
      %1329 = vmatpush1.msra.mxu0 0.0
      %1330 = vmatprep.subr.mxu0 0.0
      %1331 = vmatpush1.msra.mxu0 0.0
      %1332 = vmatprep.subr.mxu0 0.0
      %1333 = vmatpush1.msra.mxu0 0.0
      %1334 = vmatprep.subr.mxu0 0.0
      %1335 = vmatpush1.msra.mxu0 0.0
      %1336 = vmatprep.subr.mxu0 0.0
      %1337 = vmatpush1.msra.mxu0 0.0
      %1338 = vmatprep.subr.mxu0 0.0
      %1339 = vmatpush1.msra.mxu0 0.0
      %1340 = vmatprep.subr.mxu0 0.0
      %1341 = vmatpush1.msra.mxu0 0.0
      %1342 = vmatprep.subr.mxu0 0.0
      %1343 = vmatpush1.msra.mxu0 0.0
      %1344 = vmatprep.mubr.f32.mxu0 0.0
      %1345 = vmatmul.mubr.f32.gmra.mrb[0].mxu0 %v1234
      %v1346 = vpop.f32.mrb[0].mxu0
      %v1347 = vadd.f32 %v849, %v1346
      %v1348 = vpop.f32.mrb[0].mxu0
      %1349 = vmatprep.mubr.f32.mxu0 0.0
      %1350 = vmatmul.mubr.f32.gmra.mrb[0].mxu0 %v1236
      %v1351 = vpop.f32.mrb[0].mxu0
      %v1352 = vadd.f32 %v849, %v1351
      %v1353 = vpop.f32.mrb[0].mxu0
      %1354 = vmatprep.mubr.f32.mxu0 0.0
      %1355 = vmatmul.mubr.f32.gmra.mrb[0].mxu0 %v1238
      %v1356 = vpop.f32.mrb[0].mxu0
      %v1357 = vadd.f32 %v849, %v1356
      %v1358 = vpop.f32.mrb[0].mxu0
      %1359 = vmatprep.mubr.f32.mxu0 0.0
      %1360 = vmatmul.mubr.f32.gmra.mrb[0].mxu0 %v1240
      %v1361 = vpop.f32.mrb[0].mxu0
      %v1362 = vadd.f32 %v849, %v1361
      %v1363 = vpop.f32.mrb[0].mxu0
      %1364 = vmatprep.mubr.f32.mxu0 0.0
      %1365 = vmatmul.mubr.f32.gmra.mrb[0].mxu0 %v1242
      %v1366 = vpop.f32.mrb[0].mxu0
      %v1367 = vadd.f32 %v849, %v1366
      %v1368 = vpop.f32.mrb[0].mxu0
      %1369 = vmatprep.mubr.f32.mxu0 0.0
      %1370 = vmatmul.mubr.f32.gmra.mrb[0].mxu0 %v1244
      %v1371 = vpop.f32.mrb[0].mxu0
      %v1372 = vadd.f32 %v849, %v1371
      %v1373 = vpop.f32.mrb[0].mxu0
      %1374 = vmatprep.mubr.f32.mxu0 0.0
      %1375 = vmatmul.mubr.f32.gmra.mrb[0].mxu0 %v1246
      %v1376 = vpop.f32.mrb[0].mxu0
      %v1377 = vadd.f32 %v849, %v1376
      %v1378 = vpop.f32.mrb[0].mxu0
      %1379 = vmatprep.mubr.f32.mxu0 0.0
      %1380 = vmatmul.mubr.f32.gmra.mrb[0].mxu0 %v1248
      %v1381 = vpop.f32.mrb[0].mxu0
      %v1382 = vadd.f32 %v849, %v1381
      %v1383 = vpop.f32.mrb[0].mxu0
      %1384 = vmatprep.mubr.f32.mxu0 0.0
      %1385 = vmatmul.mubr.f32.gmra.mrb[0].mxu0 %v1250
      %v1386 = vpop.f32.mrb[0].mxu0
      %v1387 = vadd.f32 %v849, %v1386
      %v1388 = vpop.f32.mrb[0].mxu0
      %1389 = vmatprep.mubr.f32.mxu0 0.0
      %1390 = vmatmul.mubr.f32.gmra.mrb[0].mxu0 %v1252
      %v1391 = vpop.f32.mrb[0].mxu0
      %v1392 = vadd.f32 %v849, %v1391
      %v1393 = vpop.f32.mrb[0].mxu0
      %1394 = vmatprep.mubr.f32.mxu0 0.0
      %1395 = vmatmul.mubr.f32.gmra.mrb[0].mxu0 %v1254
      %v1396 = vpop.f32.mrb[0].mxu0
      %v1397 = vadd.f32 %v849, %v1396
      %v1398 = vpop.f32.mrb[0].mxu0
      %1399 = vmatprep.mubr.f32.mxu0 0.0
      %1400 = vmatmul.mubr.f32.gmra.mrb[0].mxu0 %v1256
      %v1401 = vpop.f32.mrb[0].mxu0
      %v1402 = vadd.f32 %v849, %v1401
      %v1403 = vpop.f32.mrb[0].mxu0
      %1404 = vmatprep.mubr.f32.mxu0 0.0
      %1405 = vmatmul.mubr.f32.gmra.mrb[0].mxu0 %v1258
      %v1406 = vpop.f32.mrb[0].mxu0
      %v1407 = vadd.f32 %v849, %v1406
      %v1408 = vpop.f32.mrb[0].mxu0
      %1409 = vmatprep.mubr.f32.mxu0 0.0
      %1410 = vmatmul.mubr.f32.gmra.mrb[0].mxu0 %v1260
      %v1411 = vpop.f32.mrb[0].mxu0
      %v1412 = vadd.f32 %v849, %v1411
      %v1413 = vpop.f32.mrb[0].mxu0
      %1414 = vmatprep.mubr.f32.mxu0 0.0
      %1415 = vmatmul.mubr.f32.gmra.mrb[0].mxu0 %v1262
      %v1416 = vpop.f32.mrb[0].mxu0
      %v1417 = vadd.f32 %v849, %v1416
      %v1418 = vpop.f32.mrb[0].mxu0
      %1419 = vmatprep.mubr.f32.mxu0 0.0
      %1420 = vmatmul.mubr.f32.gmra.mrb[0].mxu0 %v1264
      %v1421 = vpop.f32.mrb[0].mxu0
      %v1422 = vadd.f32 %v849, %v1421
      %v1423 = vpop.f32.mrb[0].mxu0
      %1424 = vmatprep.mubr.f32.mxu0 0.0
      %1425 = vmatmul.mubr.f32.gmra.mrb[0].mxu0 %v1266
      %v1426 = vpop.f32.mrb[0].mxu0
      %v1427 = vadd.f32 %v849, %v1426
      %v1428 = vpop.f32.mrb[0].mxu0
      %1429 = vmatprep.mubr.f32.mxu0 0.0
      %1430 = vmatmul.mubr.f32.gmra.mrb[0].mxu0 %v1268
      %v1431 = vpop.f32.mrb[0].mxu0
      %v1432 = vadd.f32 %v849, %v1431
      %v1433 = vpop.f32.mrb[0].mxu0
      %1434 = vmatprep.mubr.f32.mxu0 0.0
      %1435 = vmatmul.mubr.f32.gmra.mrb[0].mxu0 %v1270
      %v1436 = vpop.f32.mrb[0].mxu0
      %v1437 = vadd.f32 %v849, %v1436
      %v1438 = vpop.f32.mrb[0].mxu0
      %1439 = vmatprep.mubr.f32.mxu0 0.0
      %1440 = vmatmul.mubr.f32.gmra.mrb[0].mxu0 %v1272
      %v1441 = vpop.f32.mrb[0].mxu0
      %v1442 = vadd.f32 %v849, %v1441
      %v1443 = vpop.f32.mrb[0].mxu0
      %1444 = vmatprep.mubr.f32.mxu0 0.0
      %1445 = vmatmul.mubr.f32.gmra.mrb[0].mxu0 %v1274
      %v1446 = vpop.f32.mrb[0].mxu0
      %v1447 = vadd.f32 %v849, %v1446
      %v1448 = vpop.f32.mrb[0].mxu0
      %1449 = vmatprep.mubr.f32.mxu0 0.0
      %1450 = vmatmul.mubr.f32.gmra.mrb[0].mxu0 %v1276
      %v1451 = vpop.f32.mrb[0].mxu0
      %v1452 = vadd.f32 %v849, %v1451
      %v1453 = vpop.f32.mrb[0].mxu0
      %1454 = vmatprep.mubr.f32.mxu0 0.0
      %1455 = vmatmul.mubr.f32.gmra.mrb[0].mxu0 %v1278
      %v1456 = vpop.f32.mrb[0].mxu0
      %v1457 = vadd.f32 %v849, %v1456
      %v1458 = vpop.f32.mrb[0].mxu0
      %1459 = vdwg.mxu0
      %v1460 = vmax.f32 %v1347, 0.0
      %v1461 = vmax.f32 %v1352, 0.0
      %v1462 = vmax.f32 %v1357, 0.0
      %v1463 = vmax.f32 %v1362, 0.0
      %v1464 = vmax.f32 %v1367, 0.0
      %v1465 = vmax.f32 %v1372, 0.0
      %v1466 = vmax.f32 %v1377, 0.0
      %v1467 = vmax.f32 %v1382, 0.0
      %v1468 = vmax.f32 %v1387, 0.0
      %v1469 = vmax.f32 %v1392, 0.0
      %v1470 = vmax.f32 %v1397, 0.0
      %v1471 = vmax.f32 %v1402, 0.0
      %v1472 = vmax.f32 %v1407, 0.0
      %v1473 = vmax.f32 %v1412, 0.0
      %v1474 = vmax.f32 %v1417, 0.0
      %v1475 = vmax.f32 %v1422, 0.0
      %v1476 = vmax.f32 %v1427, 0.0
      %v1477 = vmax.f32 %v1432, 0.0
      %v1478 = vmax.f32 %v1437, 0.0
      %v1479 = vmax.f32 %v1442, 0.0
      %v1480 = vmax.f32 %v1447, 0.0
      %v1481 = vmax.f32 %v1452, 0.0
      %v1482 = vmax.f32 %v1457, 0.0
      %v1506 = vcombine.high %v1460, %v1460
      %v1508 = vunpack.c.l.s4 1983009808
      %v1509 = vunpack.c.0.s8 %v1508
      %v1510 = vlaneseq
      %v1511 = vshrl.u32 %v1510, 7
      %v1512 = vsub.s32 %v1509, %v1511
      %v1513 = vrot.slane %v1460, %v1512
      %v1515 = vunpack.c.l.s4 1983009808
      %v1516 = vunpack.c.0.s8 %v1515
      %v1517 = vlaneseq
      %v1518 = vshrl.u32 %v1517, 7
      %v1519 = vsub.s32 %v1516, %v1518
      %v1520 = vrot.slane %v1506, %v1519
      %v1521 = vcombine.high %v1513, %v1513
      %v1522 = vcombine.high %v1520, %v1520
      %v1523 = vcombine.high %v1461, %v1461
      %v1525 = vunpack.c.l.s4 1983009808
      %v1526 = vunpack.c.0.s8 %v1525
      %v1527 = vlaneseq
      %v1528 = vshrl.u32 %v1527, 7
      %v1529 = vsub.s32 %v1526, %v1528
      %v1530 = vrot.slane %v1461, %v1529
      %v1532 = vunpack.c.l.s4 1983009808
      %v1533 = vunpack.c.0.s8 %v1532
      %v1534 = vlaneseq
      %v1535 = vshrl.u32 %v1534, 7
      %v1536 = vsub.s32 %v1533, %v1535
      %v1537 = vrot.slane %v1523, %v1536
      %v1538 = vcombine.high %v1530, %v1530
      %v1539 = vcombine.high %v1537, %v1537
      %v1540 = vcombine.high %v1462, %v1462
      %v1542 = vunpack.c.l.s4 1983009808
      %v1543 = vunpack.c.0.s8 %v1542
      %v1544 = vlaneseq
      %v1545 = vshrl.u32 %v1544, 7
      %v1546 = vsub.s32 %v1543, %v1545
      %v1547 = vrot.slane %v1462, %v1546
      %v1549 = vunpack.c.l.s4 1983009808
      %v1550 = vunpack.c.0.s8 %v1549
      %v1551 = vlaneseq
      %v1552 = vshrl.u32 %v1551, 7
      %v1553 = vsub.s32 %v1550, %v1552
      %v1554 = vrot.slane %v1540, %v1553
      %v1555 = vcombine.high %v1547, %v1547
      %v1556 = vcombine.high %v1554, %v1554
      %v1557 = vcombine.high %v1463, %v1463
      %v1559 = vunpack.c.l.s4 1983009808
      %v1560 = vunpack.c.0.s8 %v1559
      %v1561 = vlaneseq
      %v1562 = vshrl.u32 %v1561, 7
      %v1563 = vsub.s32 %v1560, %v1562
      %v1564 = vrot.slane %v1463, %v1563
      %v1566 = vunpack.c.l.s4 1983009808
      %v1567 = vunpack.c.0.s8 %v1566
      %v1568 = vlaneseq
      %v1569 = vshrl.u32 %v1568, 7
      %v1570 = vsub.s32 %v1567, %v1569
      %v1571 = vrot.slane %v1557, %v1570
      %v1572 = vcombine.high %v1564, %v1564
      %v1573 = vcombine.high %v1571, %v1571
      %v1574 = vcombine.high %v1464, %v1464
      %v1576 = vunpack.c.l.s4 1983009808
      %v1577 = vunpack.c.0.s8 %v1576
      %v1578 = vlaneseq
      %v1579 = vshrl.u32 %v1578, 7
      %v1580 = vsub.s32 %v1577, %v1579
      %v1581 = vrot.slane %v1464, %v1580
      %v1583 = vunpack.c.l.s4 1983009808
      %v1584 = vunpack.c.0.s8 %v1583
      %v1585 = vlaneseq
      %v1586 = vshrl.u32 %v1585, 7
      %v1587 = vsub.s32 %v1584, %v1586
      %v1588 = vrot.slane %v1574, %v1587
      %v1589 = vcombine.high %v1581, %v1581
      %v1590 = vcombine.high %v1588, %v1588
      %v1591 = vcombine.high %v1465, %v1465
      %v1593 = vunpack.c.l.s4 1983009808
      %v1594 = vunpack.c.0.s8 %v1593
      %v1595 = vlaneseq
      %v1596 = vshrl.u32 %v1595, 7
      %v1597 = vsub.s32 %v1594, %v1596
      %v1598 = vrot.slane %v1465, %v1597
      %v1600 = vunpack.c.l.s4 1983009808
      %v1601 = vunpack.c.0.s8 %v1600
      %v1602 = vlaneseq
      %v1603 = vshrl.u32 %v1602, 7
      %v1604 = vsub.s32 %v1601, %v1603
      %v1605 = vrot.slane %v1591, %v1604
      %v1606 = vcombine.high %v1598, %v1598
      %v1607 = vcombine.high %v1605, %v1605
      %v1608 = vcombine.high %v1466, %v1466
      %v1610 = vunpack.c.l.s4 1983009808
      %v1611 = vunpack.c.0.s8 %v1610
      %v1612 = vlaneseq
      %v1613 = vshrl.u32 %v1612, 7
      %v1614 = vsub.s32 %v1611, %v1613
      %v1615 = vrot.slane %v1466, %v1614
      %v1617 = vunpack.c.l.s4 1983009808
      %v1618 = vunpack.c.0.s8 %v1617
      %v1619 = vlaneseq
      %v1620 = vshrl.u32 %v1619, 7
      %v1621 = vsub.s32 %v1618, %v1620
      %v1622 = vrot.slane %v1608, %v1621
      %v1623 = vcombine.high %v1615, %v1615
      %v1624 = vcombine.high %v1622, %v1622
      %v1625 = vcombine.high %v1467, %v1467
      %v1627 = vunpack.c.l.s4 1983009808
      %v1628 = vunpack.c.0.s8 %v1627
      %v1629 = vlaneseq
      %v1630 = vshrl.u32 %v1629, 7
      %v1631 = vsub.s32 %v1628, %v1630
      %v1632 = vrot.slane %v1467, %v1631
      %v1634 = vunpack.c.l.s4 1983009808
      %v1635 = vunpack.c.0.s8 %v1634
      %v1636 = vlaneseq
      %v1637 = vshrl.u32 %v1636, 7
      %v1638 = vsub.s32 %v1635, %v1637
      %v1639 = vrot.slane %v1625, %v1638
      %v1640 = vcombine.high %v1632, %v1632
      %v1641 = vcombine.high %v1639, %v1639
      %v1642 = vcombine.high %v1468, %v1468
      %v1644 = vunpack.c.l.s4 1983009808
      %v1645 = vunpack.c.0.s8 %v1644
      %v1646 = vlaneseq
      %v1647 = vshrl.u32 %v1646, 7
      %v1648 = vsub.s32 %v1645, %v1647
      %v1649 = vrot.slane %v1468, %v1648
      %v1651 = vunpack.c.l.s4 1983009808
      %v1652 = vunpack.c.0.s8 %v1651
      %v1653 = vlaneseq
      %v1654 = vshrl.u32 %v1653, 7
      %v1655 = vsub.s32 %v1652, %v1654
      %v1656 = vrot.slane %v1642, %v1655
      %v1657 = vcombine.high %v1649, %v1649
      %v1658 = vcombine.high %v1656, %v1656
      %v1659 = vcombine.high %v1469, %v1469
      %v1661 = vunpack.c.l.s4 1983009808
      %v1662 = vunpack.c.0.s8 %v1661
      %v1663 = vlaneseq
      %v1664 = vshrl.u32 %v1663, 7
      %v1665 = vsub.s32 %v1662, %v1664
      %v1666 = vrot.slane %v1469, %v1665
      %v1668 = vunpack.c.l.s4 1983009808
      %v1669 = vunpack.c.0.s8 %v1668
      %v1670 = vlaneseq
      %v1671 = vshrl.u32 %v1670, 7
      %v1672 = vsub.s32 %v1669, %v1671
      %v1673 = vrot.slane %v1659, %v1672
      %v1674 = vcombine.high %v1666, %v1666
      %v1675 = vcombine.high %v1673, %v1673
      %v1676 = vcombine.high %v1470, %v1470
      %v1678 = vunpack.c.l.s4 1983009808
      %v1679 = vunpack.c.0.s8 %v1678
      %v1680 = vlaneseq
      %v1681 = vshrl.u32 %v1680, 7
      %v1682 = vsub.s32 %v1679, %v1681
      %v1683 = vrot.slane %v1470, %v1682
      %v1685 = vunpack.c.l.s4 1983009808
      %v1686 = vunpack.c.0.s8 %v1685
      %v1687 = vlaneseq
      %v1688 = vshrl.u32 %v1687, 7
      %v1689 = vsub.s32 %v1686, %v1688
      %v1690 = vrot.slane %v1676, %v1689
      %v1691 = vcombine.high %v1683, %v1683
      %v1692 = vcombine.high %v1690, %v1690
      %v1693 = vcombine.high %v1471, %v1471
      %v1695 = vunpack.c.l.s4 1983009808
      %v1696 = vunpack.c.0.s8 %v1695
      %v1697 = vlaneseq
      %v1698 = vshrl.u32 %v1697, 7
      %v1699 = vsub.s32 %v1696, %v1698
      %v1700 = vrot.slane %v1471, %v1699
      %v1702 = vunpack.c.l.s4 1983009808
      %v1703 = vunpack.c.0.s8 %v1702
      %v1704 = vlaneseq
      %v1705 = vshrl.u32 %v1704, 7
      %v1706 = vsub.s32 %v1703, %v1705
      %v1707 = vrot.slane %v1693, %v1706
      %v1708 = vcombine.high %v1700, %v1700
      %v1709 = vcombine.high %v1707, %v1707
      %v1710 = vcombine.high %v1472, %v1472
      %v1712 = vunpack.c.l.s4 1983009808
      %v1713 = vunpack.c.0.s8 %v1712
      %v1714 = vlaneseq
      %v1715 = vshrl.u32 %v1714, 7
      %v1716 = vsub.s32 %v1713, %v1715
      %v1717 = vrot.slane %v1472, %v1716
      %v1719 = vunpack.c.l.s4 1983009808
      %v1720 = vunpack.c.0.s8 %v1719
      %v1721 = vlaneseq
      %v1722 = vshrl.u32 %v1721, 7
      %v1723 = vsub.s32 %v1720, %v1722
      %v1724 = vrot.slane %v1710, %v1723
      %v1725 = vcombine.high %v1717, %v1717
      %v1726 = vcombine.high %v1724, %v1724
      %v1727 = vcombine.high %v1473, %v1473
      %v1729 = vunpack.c.l.s4 1983009808
      %v1730 = vunpack.c.0.s8 %v1729
      %v1731 = vlaneseq
      %v1732 = vshrl.u32 %v1731, 7
      %v1733 = vsub.s32 %v1730, %v1732
      %v1734 = vrot.slane %v1473, %v1733
      %v1736 = vunpack.c.l.s4 1983009808
      %v1737 = vunpack.c.0.s8 %v1736
      %v1738 = vlaneseq
      %v1739 = vshrl.u32 %v1738, 7
      %v1740 = vsub.s32 %v1737, %v1739
      %v1741 = vrot.slane %v1727, %v1740
      %v1742 = vcombine.high %v1734, %v1734
      %v1743 = vcombine.high %v1741, %v1741
      %v1744 = vcombine.high %v1474, %v1474
      %v1746 = vunpack.c.l.s4 1983009808
      %v1747 = vunpack.c.0.s8 %v1746
      %v1748 = vlaneseq
      %v1749 = vshrl.u32 %v1748, 7
      %v1750 = vsub.s32 %v1747, %v1749
      %v1751 = vrot.slane %v1474, %v1750
      %v1753 = vunpack.c.l.s4 1983009808
      %v1754 = vunpack.c.0.s8 %v1753
      %v1755 = vlaneseq
      %v1756 = vshrl.u32 %v1755, 7
      %v1757 = vsub.s32 %v1754, %v1756
      %v1758 = vrot.slane %v1744, %v1757
      %v1759 = vcombine.high %v1751, %v1751
      %v1760 = vcombine.high %v1758, %v1758
      %v1761 = vcombine.high %v1475, %v1475
      %v1763 = vunpack.c.l.s4 1983009808
      %v1764 = vunpack.c.0.s8 %v1763
      %v1765 = vlaneseq
      %v1766 = vshrl.u32 %v1765, 7
      %v1767 = vsub.s32 %v1764, %v1766
      %v1768 = vrot.slane %v1475, %v1767
      %v1770 = vunpack.c.l.s4 1983009808
      %v1771 = vunpack.c.0.s8 %v1770
      %v1772 = vlaneseq
      %v1773 = vshrl.u32 %v1772, 7
      %v1774 = vsub.s32 %v1771, %v1773
      %v1775 = vrot.slane %v1761, %v1774
      %v1776 = vcombine.high %v1768, %v1768
      %v1777 = vcombine.high %v1775, %v1775
      %v1778 = vcombine.high %v1476, %v1476
      %v1780 = vunpack.c.l.s4 1983009808
      %v1781 = vunpack.c.0.s8 %v1780
      %v1782 = vlaneseq
      %v1783 = vshrl.u32 %v1782, 7
      %v1784 = vsub.s32 %v1781, %v1783
      %v1785 = vrot.slane %v1476, %v1784
      %v1787 = vunpack.c.l.s4 1983009808
      %v1788 = vunpack.c.0.s8 %v1787
      %v1789 = vlaneseq
      %v1790 = vshrl.u32 %v1789, 7
      %v1791 = vsub.s32 %v1788, %v1790
      %v1792 = vrot.slane %v1778, %v1791
      %v1793 = vcombine.high %v1785, %v1785
      %v1794 = vcombine.high %v1792, %v1792
      %v1795 = vcombine.high %v1477, %v1477
      %v1797 = vunpack.c.l.s4 1983009808
      %v1798 = vunpack.c.0.s8 %v1797
      %v1799 = vlaneseq
      %v1800 = vshrl.u32 %v1799, 7
      %v1801 = vsub.s32 %v1798, %v1800
      %v1802 = vrot.slane %v1477, %v1801
      %v1804 = vunpack.c.l.s4 1983009808
      %v1805 = vunpack.c.0.s8 %v1804
      %v1806 = vlaneseq
      %v1807 = vshrl.u32 %v1806, 7
      %v1808 = vsub.s32 %v1805, %v1807
      %v1809 = vrot.slane %v1795, %v1808
      %v1810 = vcombine.high %v1802, %v1802
      %v1811 = vcombine.high %v1809, %v1809
      %v1812 = vcombine.high %v1478, %v1478
      %v1814 = vunpack.c.l.s4 1983009808
      %v1815 = vunpack.c.0.s8 %v1814
      %v1816 = vlaneseq
      %v1817 = vshrl.u32 %v1816, 7
      %v1818 = vsub.s32 %v1815, %v1817
      %v1819 = vrot.slane %v1478, %v1818
      %v1821 = vunpack.c.l.s4 1983009808
      %v1822 = vunpack.c.0.s8 %v1821
      %v1823 = vlaneseq
      %v1824 = vshrl.u32 %v1823, 7
      %v1825 = vsub.s32 %v1822, %v1824
      %v1826 = vrot.slane %v1812, %v1825
      %v1827 = vcombine.high %v1819, %v1819
      %v1828 = vcombine.high %v1826, %v1826
      %v1829 = vcombine.high %v1479, %v1479
      %v1831 = vunpack.c.l.s4 1983009808
      %v1832 = vunpack.c.0.s8 %v1831
      %v1833 = vlaneseq
      %v1834 = vshrl.u32 %v1833, 7
      %v1835 = vsub.s32 %v1832, %v1834
      %v1836 = vrot.slane %v1479, %v1835
      %v1838 = vunpack.c.l.s4 1983009808
      %v1839 = vunpack.c.0.s8 %v1838
      %v1840 = vlaneseq
      %v1841 = vshrl.u32 %v1840, 7
      %v1842 = vsub.s32 %v1839, %v1841
      %v1843 = vrot.slane %v1829, %v1842
      %v1844 = vcombine.high %v1836, %v1836
      %v1845 = vcombine.high %v1843, %v1843
      %v1846 = vcombine.high %v1480, %v1480
      %v1848 = vunpack.c.l.s4 1983009808
      %v1849 = vunpack.c.0.s8 %v1848
      %v1850 = vlaneseq
      %v1851 = vshrl.u32 %v1850, 7
      %v1852 = vsub.s32 %v1849, %v1851
      %v1853 = vrot.slane %v1480, %v1852
      %v1855 = vunpack.c.l.s4 1983009808
      %v1856 = vunpack.c.0.s8 %v1855
      %v1857 = vlaneseq
      %v1858 = vshrl.u32 %v1857, 7
      %v1859 = vsub.s32 %v1856, %v1858
      %v1860 = vrot.slane %v1846, %v1859
      %v1861 = vcombine.high %v1853, %v1853
      %v1862 = vcombine.high %v1860, %v1860
      %v1863 = vcombine.high %v1481, %v1481
      %v1865 = vunpack.c.l.s4 1983009808
      %v1866 = vunpack.c.0.s8 %v1865
      %v1867 = vlaneseq
      %v1868 = vshrl.u32 %v1867, 7
      %v1869 = vsub.s32 %v1866, %v1868
      %v1870 = vrot.slane %v1481, %v1869
      %v1872 = vunpack.c.l.s4 1983009808
      %v1873 = vunpack.c.0.s8 %v1872
      %v1874 = vlaneseq
      %v1875 = vshrl.u32 %v1874, 7
      %v1876 = vsub.s32 %v1873, %v1875
      %v1877 = vrot.slane %v1863, %v1876
      %v1878 = vcombine.high %v1870, %v1870
      %v1879 = vcombine.high %v1877, %v1877
      %v1881 = vunpack.c.l.s4 1983009808
      %v1882 = vunpack.c.0.s8 %v1881
      %v1883 = vlaneseq
      %v1884 = vshrl.u32 %v1883, 7
      %v1885 = vsub.s32 %v1882, %v1884
      %v1886 = vrot.slane %v1482, %v1885
      %v1887 = vcombine.high %v1886, %v1886
      %v1888 = vstv %s370
      %v1889 = vadd.s32 %v1888, 1
      %v1890 = vadd.s32 %v1888, 2
      %v1891 = vadd.s32 %v1888, 3
      %v1892 = vadd.s32 %v1888, 4
      %v1893 = vadd.s32 %v1888, 5
      %v1894 = vadd.s32 %v1888, 6
      %v1895 = vadd.s32 %v1888, 7
      %v1896 = vadd.s32 %v1888, 8
      %v1897 = vadd.s32 %v1888, 9
      %v1898 = vlaneseq
      %v1899 = vshrl.u32 %v1898, 7
      %v1900 = vadd.s32 %v1899, 8
      %v1901 = vadd.s32 %v1899, 16
      %vm1902 = vcmp.ge.s32.totalorder %v1888, 1
      %vm1903 = vcmp.ge.s32.totalorder %v1889, 1
      %vm1904 = vcmp.ge.s32.totalorder %v1890, 1
      %vm1905 = vcmp.ge.s32.totalorder %v1891, 1
      %vm1906 = vcmp.ge.s32.totalorder %v1892, 1
      %vm1907 = vcmp.ge.s32.totalorder %v1893, 1
      %vm1908 = vcmp.ge.s32.totalorder %v1894, 1
      %vm1909 = vcmp.ge.s32.totalorder %v1895, 1
      %vm1910 = vcmp.ge.s32.totalorder %v1896, 1
      %vm1911 = vcmp.ge.s32.totalorder %v1897, 1
      %vm1912 = vcmp.lt.s32.totalorder %v1888, 17
      %vm1913 = vcmp.lt.s32.totalorder %v1889, 17
      %vm1914 = vcmp.lt.s32.totalorder %v1890, 17
      %vm1915 = vcmp.lt.s32.totalorder %v1891, 17
      %vm1916 = vcmp.lt.s32.totalorder %v1892, 17
      %vm1917 = vcmp.lt.s32.totalorder %v1893, 17
      %vm1918 = vcmp.lt.s32.totalorder %v1894, 17
      %vm1919 = vcmp.lt.s32.totalorder %v1895, 17
      %vm1920 = vcmp.lt.s32.totalorder %v1896, 17
      %vm1921 = vcmp.lt.s32.totalorder %v1897, 17
      %vm1922 = vmand %vm1902, %vm1912
      %vm1923 = vmand %vm1903, %vm1913
      %vm1924 = vmand %vm1904, %vm1914
      %vm1925 = vmand %vm1905, %vm1915
      %vm1926 = vmand %vm1906, %vm1916
      %vm1927 = vmand %vm1907, %vm1917
      %vm1928 = vmand %vm1908, %vm1918
      %vm1929 = vmand %vm1909, %vm1919
      %vm1930 = vmand %vm1910, %vm1920
      %vm1931 = vmand %vm1911, %vm1921
      %vm1932 = vcmp.ge.s32.totalorder %v1899, 1
      %vm1933 = vcmp.ge.s32.totalorder %v1900, 1
      %vm1934 = vcmp.ge.s32.totalorder %v1901, 1
      %vm1935 = vmand %vm1922, %vm1932
      %vm1936 = vmand %vm1922, %vm1933
      %vm1937 = vmand %vm1922, %vm1934
      %vm1938 = vmand %vm1923, %vm1932
      %vm1939 = vmand %vm1923, %vm1933
      %vm1940 = vmand %vm1923, %vm1934
      %vm1941 = vmand %vm1924, %vm1932
      %vm1942 = vmand %vm1924, %vm1933
      %vm1943 = vmand %vm1924, %vm1934
      %vm1944 = vmand %vm1925, %vm1932
      %vm1945 = vmand %vm1925, %vm1933
      %vm1946 = vmand %vm1925, %vm1934
      %vm1947 = vmand %vm1926, %vm1932
      %vm1948 = vmand %vm1926, %vm1933
      %vm1949 = vmand %vm1926, %vm1934
      %vm1950 = vmand %vm1927, %vm1932
      %vm1951 = vmand %vm1927, %vm1933
      %vm1952 = vmand %vm1927, %vm1934
      %vm1953 = vmand %vm1928, %vm1932
      %vm1954 = vmand %vm1928, %vm1933
      %vm1955 = vmand %vm1928, %vm1934
      %vm1956 = vmand %vm1929, %vm1932
      %vm1957 = vmand %vm1929, %vm1933
      %vm1958 = vmand %vm1929, %vm1934
      %vm1959 = vmand %vm1930, %vm1932
      %vm1960 = vmand %vm1930, %vm1933
      %vm1961 = vmand %vm1930, %vm1934
      %vm1962 = vmand %vm1931, %vm1932
      %vm1963 = vmand %vm1931, %vm1933
      %vm1964 = vmand %vm1931, %vm1934
      %vm1965 = vcmp.lt.s32.totalorder %v1899, 17
      %vm1966 = vcmp.lt.s32.totalorder %v1900, 17
      %vm1967 = vcmp.lt.s32.totalorder %v1901, 17
      %vm1968 = vmand %vm1935, %vm1965
      %vm1969 = vmand %vm1936, %vm1966
      %vm1970 = vmand %vm1937, %vm1967
      %vm1971 = vmand %vm1938, %vm1965
      %vm1972 = vmand %vm1939, %vm1966
      %vm1973 = vmand %vm1940, %vm1967
      %vm1974 = vmand %vm1941, %vm1965
      %vm1975 = vmand %vm1942, %vm1966
      %vm1976 = vmand %vm1943, %vm1967
      %vm1977 = vmand %vm1944, %vm1965
      %vm1978 = vmand %vm1945, %vm1966
      %vm1979 = vmand %vm1946, %vm1967
      %vm1980 = vmand %vm1947, %vm1965
      %vm1981 = vmand %vm1948, %vm1966
      %vm1982 = vmand %vm1949, %vm1967
      %vm1983 = vmand %vm1950, %vm1965
      %vm1984 = vmand %vm1951, %vm1966
      %vm1985 = vmand %vm1952, %vm1967
      %vm1986 = vmand %vm1953, %vm1965
      %vm1987 = vmand %vm1954, %vm1966
      %vm1988 = vmand %vm1955, %vm1967
      %vm1989 = vmand %vm1956, %vm1965
      %vm1990 = vmand %vm1957, %vm1966
      %vm1991 = vmand %vm1958, %vm1967
      %vm1992 = vmand %vm1959, %vm1965
      %vm1993 = vmand %vm1960, %vm1966
      %vm1994 = vmand %vm1961, %vm1967
      %vm1995 = vmand %vm1962, %vm1965
      %vm1996 = vmand %vm1963, %vm1966
      %vm1997 = vmand %vm1964, %vm1967
      %v1998 = vsel %vm1968, 1, 0
      %v1999 = vsel %vm1969, 1, 0
      %v2000 = vsel %vm1970, 1, 0
      %v2001 = vsel %vm1971, 1, 0
      %v2002 = vsel %vm1972, 1, 0
      %v2003 = vsel %vm1973, 1, 0
      %v2004 = vsel %vm1974, 1, 0
      %v2005 = vsel %vm1975, 1, 0
      %v2006 = vsel %vm1976, 1, 0
      %v2007 = vsel %vm1977, 1, 0
      %v2008 = vsel %vm1978, 1, 0
      %v2009 = vsel %vm1979, 1, 0
      %v2010 = vsel %vm1980, 1, 0
      %v2011 = vsel %vm1981, 1, 0
      %v2012 = vsel %vm1982, 1, 0
      %v2013 = vsel %vm1983, 1, 0
      %v2014 = vsel %vm1984, 1, 0
      %v2015 = vsel %vm1985, 1, 0
      %v2016 = vsel %vm1986, 1, 0
      %v2017 = vsel %vm1987, 1, 0
      %v2018 = vsel %vm1988, 1, 0
      %v2019 = vsel %vm1989, 1, 0
      %v2020 = vsel %vm1990, 1, 0
      %v2021 = vsel %vm1991, 1, 0
      %v2022 = vsel %vm1992, 1, 0
      %v2023 = vsel %vm1993, 1, 0
      %v2024 = vsel %vm1994, 1, 0
      %v2025 = vsel %vm1995, 1, 0
      %v2026 = vsel %vm1996, 1, 0
      %v2027 = vsel %vm1997, 1, 0
      %vm2028 = vcmp.eq.s32.totalorder %v1998, 1
      %vm2029 = vcmp.eq.s32.totalorder %v1999, 1
      %vm2030 = vcmp.eq.s32.totalorder %v2000, 1
      %vm2031 = vcmp.eq.s32.totalorder %v2001, 1
      %vm2032 = vcmp.eq.s32.totalorder %v2002, 1
      %vm2033 = vcmp.eq.s32.totalorder %v2003, 1
      %vm2034 = vcmp.eq.s32.totalorder %v2004, 1
      %vm2035 = vcmp.eq.s32.totalorder %v2005, 1
      %vm2036 = vcmp.eq.s32.totalorder %v2006, 1
      %vm2037 = vcmp.eq.s32.totalorder %v2007, 1
      %vm2038 = vcmp.eq.s32.totalorder %v2008, 1
      %vm2039 = vcmp.eq.s32.totalorder %v2009, 1
      %vm2040 = vcmp.eq.s32.totalorder %v2010, 1
      %vm2041 = vcmp.eq.s32.totalorder %v2011, 1
      %vm2042 = vcmp.eq.s32.totalorder %v2012, 1
      %vm2043 = vcmp.eq.s32.totalorder %v2013, 1
      %vm2044 = vcmp.eq.s32.totalorder %v2014, 1
      %vm2045 = vcmp.eq.s32.totalorder %v2015, 1
      %vm2046 = vcmp.eq.s32.totalorder %v2016, 1
      %vm2047 = vcmp.eq.s32.totalorder %v2017, 1
      %vm2048 = vcmp.eq.s32.totalorder %v2018, 1
      %vm2049 = vcmp.eq.s32.totalorder %v2019, 1
      %vm2050 = vcmp.eq.s32.totalorder %v2020, 1
      %vm2051 = vcmp.eq.s32.totalorder %v2021, 1
      %vm2052 = vcmp.eq.s32.totalorder %v2022, 1
      %vm2053 = vcmp.eq.s32.totalorder %v2023, 1
      %vm2054 = vcmp.eq.s32.totalorder %v2024, 1
      %vm2055 = vcmp.eq.s32.totalorder %v2025, 1
      %vm2056 = vcmp.eq.s32.totalorder %v2026, 1
      %vm2057 = vcmp.eq.s32.totalorder %v2027, 1
      %v2058 = vcombine.low %v1513, %v1521
      %v2059 = vcombine.low %v1520, %v1522
      %v2061 = vunpack.c.l.s4 1983009808
      %v2062 = vunpack.c.0.s8 %v2061
      %v2063 = vlaneseq
      %v2064 = vshrl.u32 %v2063, 7
      %v2065 = vsub.s32 %v2062, %v2064
      %v2066 = vrot.slane %v2058, %v2065
      %v2068 = vunpack.c.l.s4 1983009808
      %v2069 = vunpack.c.0.s8 %v2068
      %v2070 = vlaneseq
      %v2071 = vshrl.u32 %v2070, 7
      %v2072 = vsub.s32 %v2069, %v2071
      %v2073 = vrot.slane %v2059, %v2072
      %v2074 = vcombine.low %v2066, %v2073
      %v2075 = vcombine.low %v1530, %v1538
      %v2076 = vcombine.low %v1537, %v1539
      %v2078 = vunpack.c.l.s4 1983009808
      %v2079 = vunpack.c.0.s8 %v2078
      %v2080 = vlaneseq
      %v2081 = vshrl.u32 %v2080, 7
      %v2082 = vsub.s32 %v2079, %v2081
      %v2083 = vrot.slane %v2075, %v2082
      %v2085 = vunpack.c.l.s4 1983009808
      %v2086 = vunpack.c.0.s8 %v2085
      %v2087 = vlaneseq
      %v2088 = vshrl.u32 %v2087, 7
      %v2089 = vsub.s32 %v2086, %v2088
      %v2090 = vrot.slane %v2076, %v2089
      %v2091 = vcombine.low %v2083, %v2090
      %v2093 = vunpack.c.l.s4 1983009808
      %v2094 = vunpack.c.0.s8 %v2093
      %v2095 = vlaneseq
      %v2096 = vshrl.u32 %v2095, 7
      %v2097 = vsub.s32 %v2094, %v2096
      %v2098 = vrot.slane %v1547, %v2097
      %v2099 = vcombine.low %v1555, %v1554
      %v2100 = vcombine.low %v1556, %v1564
      %v2102 = vunpack.c.l.s4 1983009808
      %v2103 = vunpack.c.0.s8 %v2102
      %v2104 = vlaneseq
      %v2105 = vshrl.u32 %v2104, 7
      %v2106 = vsub.s32 %v2103, %v2105
      %v2107 = vrot.slane %v2099, %v2106
      %v2109 = vunpack.c.l.s4 1983009808
      %v2110 = vunpack.c.0.s8 %v2109
      %v2111 = vlaneseq
      %v2112 = vshrl.u32 %v2111, 7
      %v2113 = vsub.s32 %v2110, %v2112
      %v2114 = vrot.slane %v2100, %v2113
      %v2115 = vcombine.low %v2107, %v2114
      %v2116 = vcombine.low %v1572, %v1571
      %v2117 = vcombine.low %v1573, %v1581
      %v2119 = vunpack.c.l.s4 1983009808
      %v2120 = vunpack.c.0.s8 %v2119
      %v2121 = vlaneseq
      %v2122 = vshrl.u32 %v2121, 7
      %v2123 = vsub.s32 %v2120, %v2122
      %v2124 = vrot.slane %v2116, %v2123
      %v2126 = vunpack.c.l.s4 1983009808
      %v2127 = vunpack.c.0.s8 %v2126
      %v2128 = vlaneseq
      %v2129 = vshrl.u32 %v2128, 7
      %v2130 = vsub.s32 %v2127, %v2129
      %v2131 = vrot.slane %v2117, %v2130
      %v2132 = vcombine.low %v2124, %v2131
      %v2134 = vunpack.c.l.s4 1983009808
      %v2135 = vunpack.c.0.s8 %v2134
      %v2136 = vlaneseq
      %v2137 = vshrl.u32 %v2136, 7
      %v2138 = vsub.s32 %v2135, %v2137
      %v2139 = vrot.slane %v1589, %v2138
      %v2140 = vcombine.low %v1588, %v1590
      %v2141 = vcombine.low %v1598, %v1606
      %v2143 = vunpack.c.l.s4 1983009808
      %v2144 = vunpack.c.0.s8 %v2143
      %v2145 = vlaneseq
      %v2146 = vshrl.u32 %v2145, 7
      %v2147 = vsub.s32 %v2144, %v2146
      %v2148 = vrot.slane %v2140, %v2147
      %v2150 = vunpack.c.l.s4 1983009808
      %v2151 = vunpack.c.0.s8 %v2150
      %v2152 = vlaneseq
      %v2153 = vshrl.u32 %v2152, 7
      %v2154 = vsub.s32 %v2151, %v2153
      %v2155 = vrot.slane %v2141, %v2154
      %v2156 = vcombine.low %v2148, %v2155
      %v2157 = vcombine.low %v1605, %v1607
      %v2158 = vcombine.low %v1615, %v1623
      %v2160 = vunpack.c.l.s4 1983009808
      %v2161 = vunpack.c.0.s8 %v2160
      %v2162 = vlaneseq
      %v2163 = vshrl.u32 %v2162, 7
      %v2164 = vsub.s32 %v2161, %v2163
      %v2165 = vrot.slane %v2157, %v2164
      %v2167 = vunpack.c.l.s4 1983009808
      %v2168 = vunpack.c.0.s8 %v2167
      %v2169 = vlaneseq
      %v2170 = vshrl.u32 %v2169, 7
      %v2171 = vsub.s32 %v2168, %v2170
      %v2172 = vrot.slane %v2158, %v2171
      %v2173 = vcombine.low %v2165, %v2172
      %v2175 = vunpack.c.l.s4 1983009808
      %v2176 = vunpack.c.0.s8 %v2175
      %v2177 = vlaneseq
      %v2178 = vshrl.u32 %v2177, 7
      %v2179 = vsub.s32 %v2176, %v2178
      %v2180 = vrot.slane %v1622, %v2179
      %v2181 = vcombine.low %v1624, %v1632
      %v2182 = vcombine.low %v1640, %v1639
      %v2184 = vunpack.c.l.s4 1983009808
      %v2185 = vunpack.c.0.s8 %v2184
      %v2186 = vlaneseq
      %v2187 = vshrl.u32 %v2186, 7
      %v2188 = vsub.s32 %v2185, %v2187
      %v2189 = vrot.slane %v2181, %v2188
      %v2191 = vunpack.c.l.s4 1983009808
      %v2192 = vunpack.c.0.s8 %v2191
      %v2193 = vlaneseq
      %v2194 = vshrl.u32 %v2193, 7
      %v2195 = vsub.s32 %v2192, %v2194
      %v2196 = vrot.slane %v2182, %v2195
      %v2197 = vcombine.low %v2189, %v2196
      %v2198 = vcombine.low %v1641, %v1649
      %v2199 = vcombine.low %v1657, %v1656
      %v2201 = vunpack.c.l.s4 1983009808
      %v2202 = vunpack.c.0.s8 %v2201
      %v2203 = vlaneseq
      %v2204 = vshrl.u32 %v2203, 7
      %v2205 = vsub.s32 %v2202, %v2204
      %v2206 = vrot.slane %v2198, %v2205
      %v2208 = vunpack.c.l.s4 1983009808
      %v2209 = vunpack.c.0.s8 %v2208
      %v2210 = vlaneseq
      %v2211 = vshrl.u32 %v2210, 7
      %v2212 = vsub.s32 %v2209, %v2211
      %v2213 = vrot.slane %v2199, %v2212
      %v2214 = vcombine.low %v2206, %v2213
      %v2216 = vunpack.c.l.s4 1983009808
      %v2217 = vunpack.c.0.s8 %v2216
      %v2218 = vlaneseq
      %v2219 = vshrl.u32 %v2218, 7
      %v2220 = vsub.s32 %v2217, %v2219
      %v2221 = vrot.slane %v1658, %v2220
      %v2222 = vcombine.low %v1666, %v1674
      %v2223 = vcombine.low %v1673, %v1675
      %v2225 = vunpack.c.l.s4 1983009808
      %v2226 = vunpack.c.0.s8 %v2225
      %v2227 = vlaneseq
      %v2228 = vshrl.u32 %v2227, 7
      %v2229 = vsub.s32 %v2226, %v2228
      %v2230 = vrot.slane %v2222, %v2229
      %v2232 = vunpack.c.l.s4 1983009808
      %v2233 = vunpack.c.0.s8 %v2232
      %v2234 = vlaneseq
      %v2235 = vshrl.u32 %v2234, 7
      %v2236 = vsub.s32 %v2233, %v2235
      %v2237 = vrot.slane %v2223, %v2236
      %v2238 = vcombine.low %v2230, %v2237
      %v2239 = vcombine.low %v1683, %v1691
      %v2240 = vcombine.low %v1690, %v1692
      %v2242 = vunpack.c.l.s4 1983009808
      %v2243 = vunpack.c.0.s8 %v2242
      %v2244 = vlaneseq
      %v2245 = vshrl.u32 %v2244, 7
      %v2246 = vsub.s32 %v2243, %v2245
      %v2247 = vrot.slane %v2239, %v2246
      %v2249 = vunpack.c.l.s4 1983009808
      %v2250 = vunpack.c.0.s8 %v2249
      %v2251 = vlaneseq
      %v2252 = vshrl.u32 %v2251, 7
      %v2253 = vsub.s32 %v2250, %v2252
      %v2254 = vrot.slane %v2240, %v2253
      %v2255 = vcombine.low %v2247, %v2254
      %v2257 = vunpack.c.l.s4 1983009808
      %v2258 = vunpack.c.0.s8 %v2257
      %v2259 = vlaneseq
      %v2260 = vshrl.u32 %v2259, 7
      %v2261 = vsub.s32 %v2258, %v2260
      %v2262 = vrot.slane %v1700, %v2261
      %v2263 = vcombine.low %v1708, %v1707
      %v2264 = vcombine.low %v1709, %v1717
      %v2266 = vunpack.c.l.s4 1983009808
      %v2267 = vunpack.c.0.s8 %v2266
      %v2268 = vlaneseq
      %v2269 = vshrl.u32 %v2268, 7
      %v2270 = vsub.s32 %v2267, %v2269
      %v2271 = vrot.slane %v2263, %v2270
      %v2273 = vunpack.c.l.s4 1983009808
      %v2274 = vunpack.c.0.s8 %v2273
      %v2275 = vlaneseq
      %v2276 = vshrl.u32 %v2275, 7
      %v2277 = vsub.s32 %v2274, %v2276
      %v2278 = vrot.slane %v2264, %v2277
      %v2279 = vcombine.low %v2271, %v2278
      %v2280 = vcombine.low %v1725, %v1724
      %v2281 = vcombine.low %v1726, %v1734
      %v2283 = vunpack.c.l.s4 1983009808
      %v2284 = vunpack.c.0.s8 %v2283
      %v2285 = vlaneseq
      %v2286 = vshrl.u32 %v2285, 7
      %v2287 = vsub.s32 %v2284, %v2286
      %v2288 = vrot.slane %v2280, %v2287
      %v2290 = vunpack.c.l.s4 1983009808
      %v2291 = vunpack.c.0.s8 %v2290
      %v2292 = vlaneseq
      %v2293 = vshrl.u32 %v2292, 7
      %v2294 = vsub.s32 %v2291, %v2293
      %v2295 = vrot.slane %v2281, %v2294
      %v2296 = vcombine.low %v2288, %v2295
      %v2298 = vunpack.c.l.s4 1983009808
      %v2299 = vunpack.c.0.s8 %v2298
      %v2300 = vlaneseq
      %v2301 = vshrl.u32 %v2300, 7
      %v2302 = vsub.s32 %v2299, %v2301
      %v2303 = vrot.slane %v1742, %v2302
      %v2304 = vcombine.low %v1741, %v1743
      %v2305 = vcombine.low %v1751, %v1759
      %v2307 = vunpack.c.l.s4 1983009808
      %v2308 = vunpack.c.0.s8 %v2307
      %v2309 = vlaneseq
      %v2310 = vshrl.u32 %v2309, 7
      %v2311 = vsub.s32 %v2308, %v2310
      %v2312 = vrot.slane %v2304, %v2311
      %v2314 = vunpack.c.l.s4 1983009808
      %v2315 = vunpack.c.0.s8 %v2314
      %v2316 = vlaneseq
      %v2317 = vshrl.u32 %v2316, 7
      %v2318 = vsub.s32 %v2315, %v2317
      %v2319 = vrot.slane %v2305, %v2318
      %v2320 = vcombine.low %v2312, %v2319
      %v2321 = vcombine.low %v1758, %v1760
      %v2322 = vcombine.low %v1768, %v1776
      %v2324 = vunpack.c.l.s4 1983009808
      %v2325 = vunpack.c.0.s8 %v2324
      %v2326 = vlaneseq
      %v2327 = vshrl.u32 %v2326, 7
      %v2328 = vsub.s32 %v2325, %v2327
      %v2329 = vrot.slane %v2321, %v2328
      %v2331 = vunpack.c.l.s4 1983009808
      %v2332 = vunpack.c.0.s8 %v2331
      %v2333 = vlaneseq
      %v2334 = vshrl.u32 %v2333, 7
      %v2335 = vsub.s32 %v2332, %v2334
      %v2336 = vrot.slane %v2322, %v2335
      %v2337 = vcombine.low %v2329, %v2336
      %v2339 = vunpack.c.l.s4 1983009808
      %v2340 = vunpack.c.0.s8 %v2339
      %v2341 = vlaneseq
      %v2342 = vshrl.u32 %v2341, 7
      %v2343 = vsub.s32 %v2340, %v2342
      %v2344 = vrot.slane %v1775, %v2343
      %v2345 = vcombine.low %v1777, %v1785
      %v2346 = vcombine.low %v1793, %v1792
      %v2348 = vunpack.c.l.s4 1983009808
      %v2349 = vunpack.c.0.s8 %v2348
      %v2350 = vlaneseq
      %v2351 = vshrl.u32 %v2350, 7
      %v2352 = vsub.s32 %v2349, %v2351
      %v2353 = vrot.slane %v2345, %v2352
      %v2355 = vunpack.c.l.s4 1983009808
      %v2356 = vunpack.c.0.s8 %v2355
      %v2357 = vlaneseq
      %v2358 = vshrl.u32 %v2357, 7
      %v2359 = vsub.s32 %v2356, %v2358
      %v2360 = vrot.slane %v2346, %v2359
      %v2361 = vcombine.low %v2353, %v2360
      %v2362 = vcombine.low %v1794, %v1802
      %v2363 = vcombine.low %v1810, %v1809
      %v2365 = vunpack.c.l.s4 1983009808
      %v2366 = vunpack.c.0.s8 %v2365
      %v2367 = vlaneseq
      %v2368 = vshrl.u32 %v2367, 7
      %v2369 = vsub.s32 %v2366, %v2368
      %v2370 = vrot.slane %v2362, %v2369
      %v2372 = vunpack.c.l.s4 1983009808
      %v2373 = vunpack.c.0.s8 %v2372
      %v2374 = vlaneseq
      %v2375 = vshrl.u32 %v2374, 7
      %v2376 = vsub.s32 %v2373, %v2375
      %v2377 = vrot.slane %v2363, %v2376
      %v2378 = vcombine.low %v2370, %v2377
      %v2380 = vunpack.c.l.s4 1983009808
      %v2381 = vunpack.c.0.s8 %v2380
      %v2382 = vlaneseq
      %v2383 = vshrl.u32 %v2382, 7
      %v2384 = vsub.s32 %v2381, %v2383
      %v2385 = vrot.slane %v1811, %v2384
      %v2386 = vcombine.low %v1819, %v1827
      %v2387 = vcombine.low %v1826, %v1828
      %v2389 = vunpack.c.l.s4 1983009808
      %v2390 = vunpack.c.0.s8 %v2389
      %v2391 = vlaneseq
      %v2392 = vshrl.u32 %v2391, 7
      %v2393 = vsub.s32 %v2390, %v2392
      %v2394 = vrot.slane %v2386, %v2393
      %v2396 = vunpack.c.l.s4 1983009808
      %v2397 = vunpack.c.0.s8 %v2396
      %v2398 = vlaneseq
      %v2399 = vshrl.u32 %v2398, 7
      %v2400 = vsub.s32 %v2397, %v2399
      %v2401 = vrot.slane %v2387, %v2400
      %v2402 = vcombine.low %v2394, %v2401
      %v2403 = vcombine.low %v1836, %v1844
      %v2404 = vcombine.low %v1843, %v1845
      %v2406 = vunpack.c.l.s4 1983009808
      %v2407 = vunpack.c.0.s8 %v2406
      %v2408 = vlaneseq
      %v2409 = vshrl.u32 %v2408, 7
      %v2410 = vsub.s32 %v2407, %v2409
      %v2411 = vrot.slane %v2403, %v2410
      %v2413 = vunpack.c.l.s4 1983009808
      %v2414 = vunpack.c.0.s8 %v2413
      %v2415 = vlaneseq
      %v2416 = vshrl.u32 %v2415, 7
      %v2417 = vsub.s32 %v2414, %v2416
      %v2418 = vrot.slane %v2404, %v2417
      %v2419 = vcombine.low %v2411, %v2418
      %v2421 = vunpack.c.l.s4 1983009808
      %v2422 = vunpack.c.0.s8 %v2421
      %v2423 = vlaneseq
      %v2424 = vshrl.u32 %v2423, 7
      %v2425 = vsub.s32 %v2422, %v2424
      %v2426 = vrot.slane %v1853, %v2425
      %v2427 = vcombine.low %v1861, %v1860
      %v2428 = vcombine.low %v1862, %v1870
      %v2430 = vunpack.c.l.s4 1983009808
      %v2431 = vunpack.c.0.s8 %v2430
      %v2432 = vlaneseq
      %v2433 = vshrl.u32 %v2432, 7
      %v2434 = vsub.s32 %v2431, %v2433
      %v2435 = vrot.slane %v2427, %v2434
      %v2437 = vunpack.c.l.s4 1983009808
      %v2438 = vunpack.c.0.s8 %v2437
      %v2439 = vlaneseq
      %v2440 = vshrl.u32 %v2439, 7
      %v2441 = vsub.s32 %v2438, %v2440
      %v2442 = vrot.slane %v2428, %v2441
      %v2443 = vcombine.low %v2435, %v2442
      %v2444 = vcombine.low %v1878, %v1877
      %v2445 = vcombine.low %v1879, %v1886
      %v2447 = vunpack.c.l.s4 1983009808
      %v2448 = vunpack.c.0.s8 %v2447
      %v2449 = vlaneseq
      %v2450 = vshrl.u32 %v2449, 7
      %v2451 = vsub.s32 %v2448, %v2450
      %v2452 = vrot.slane %v2444, %v2451
      %v2454 = vunpack.c.l.s4 1983009808
      %v2455 = vunpack.c.0.s8 %v2454
      %v2456 = vlaneseq
      %v2457 = vshrl.u32 %v2456, 7
      %v2458 = vsub.s32 %v2455, %v2457
      %v2459 = vrot.slane %v2445, %v2458
      %v2460 = vcombine.low %v2452, %v2459
      %v2462 = vunpack.c.l.s4 1983009808
      %v2463 = vunpack.c.0.s8 %v2462
      %v2464 = vlaneseq
      %v2465 = vshrl.u32 %v2464, 7
      %v2466 = vsub.s32 %v2463, %v2465
      %v2467 = vrot.slane %v1887, %v2466
      %v2498 = vsel %vm2028, %v2074, 0.0
      %v2499 = vsel %vm2029, %v2091, 0.0
      %v2500 = vsel %vm2030, %v2098, 0.0
      %v2501 = vsel %vm2031, %v2115, 0.0
      %v2502 = vsel %vm2032, %v2132, 0.0
      %v2503 = vsel %vm2033, %v2139, 0.0
      %v2504 = vsel %vm2034, %v2156, 0.0
      %v2505 = vsel %vm2035, %v2173, 0.0
      %v2506 = vsel %vm2036, %v2180, 0.0
      %v2507 = vsel %vm2037, %v2197, 0.0
      %v2508 = vsel %vm2038, %v2214, 0.0
      %v2509 = vsel %vm2039, %v2221, 0.0
      %v2510 = vsel %vm2040, %v2238, 0.0
      %v2511 = vsel %vm2041, %v2255, 0.0
      %v2512 = vsel %vm2042, %v2262, 0.0
      %v2513 = vsel %vm2043, %v2279, 0.0
      %v2514 = vsel %vm2044, %v2296, 0.0
      %v2515 = vsel %vm2045, %v2303, 0.0
      %v2516 = vsel %vm2046, %v2320, 0.0
      %v2517 = vsel %vm2047, %v2337, 0.0
      %v2518 = vsel %vm2048, %v2344, 0.0
      %v2519 = vsel %vm2049, %v2361, 0.0
      %v2520 = vsel %vm2050, %v2378, 0.0
      %v2521 = vsel %vm2051, %v2385, 0.0
      %v2522 = vsel %vm2052, %v2402, 0.0
      %v2523 = vsel %vm2053, %v2419, 0.0
      %v2524 = vsel %vm2054, %v2426, 0.0
      %v2525 = vsel %vm2055, %v2443, 0.0
      %v2526 = vsel %vm2056, %v2460, 0.0
      %v2527 = vsel %vm2057, %v2467, 0.0
      %vm2528 = vcmask 261120
      %2529 = vst.msk [vmem:[#allocation2] sm:$0xff] %vm2528, %v2498
      %2530 = vst.msk [vmem:[#allocation2 + $0x8] sm:$0xff] %vm2528, %v2499
      %vm2531 = vcmask 254976
      %2532 = vst.msk [vmem:[#allocation2 + $0x10] sm:$0x3] %vm2531, %v2500
      %2533 = vst.msk [vmem:[#allocation2 + $0x18] sm:$0xff] %vm2528, %v2501
      %2534 = vst.msk [vmem:[#allocation2 + $0x20] sm:$0xff] %vm2528, %v2502
      %2535 = vst.msk [vmem:[#allocation2 + $0x28] sm:$0x3] %vm2531, %v2503
      %2536 = vst.msk [vmem:[#allocation2 + $0x30] sm:$0xff] %vm2528, %v2504
      %2537 = vst.msk [vmem:[#allocation2 + $0x38] sm:$0xff] %vm2528, %v2505
      %2538 = vst.msk [vmem:[#allocation2 + $0x40] sm:$0x3] %vm2531, %v2506
      %2539 = vst.msk [vmem:[#allocation2 + $0x48] sm:$0xff] %vm2528, %v2507
      %2540 = vst.msk [vmem:[#allocation2 + $0x50] sm:$0xff] %vm2528, %v2508
      %2541 = vst.msk [vmem:[#allocation2 + $0x58] sm:$0x3] %vm2531, %v2509
      %2542 = vst.msk [vmem:[#allocation2 + $0x60] sm:$0xff] %vm2528, %v2510
      %2543 = vst.msk [vmem:[#allocation2 + $0x68] sm:$0xff] %vm2528, %v2511
      %2544 = vst.msk [vmem:[#allocation2 + $0x70] sm:$0x3] %vm2531, %v2512
      %2545 = vst.msk [vmem:[#allocation2 + $0x78] sm:$0xff] %vm2528, %v2513
      %2546 = vst.msk [vmem:[#allocation2 + $0x80] sm:$0xff] %vm2528, %v2514
      %2547 = vst.msk [vmem:[#allocation2 + $0x88] sm:$0x3] %vm2531, %v2515
      %2548 = vst.msk [vmem:[#allocation2 + $0x90] sm:$0xff] %vm2528, %v2516
      %2549 = vst.msk [vmem:[#allocation2 + $0x98] sm:$0xff] %vm2528, %v2517
      %2550 = vst.msk [vmem:[#allocation2 + $0xa0] sm:$0x3] %vm2531, %v2518
      %2551 = vst.msk [vmem:[#allocation2 + $0xa8] sm:$0xff] %vm2528, %v2519
      %2552 = vst.msk [vmem:[#allocation2 + $0xb0] sm:$0xff] %vm2528, %v2520
      %2553 = vst.msk [vmem:[#allocation2 + $0xb8] sm:$0x3] %vm2531, %v2521
      %2554 = vst.msk [vmem:[#allocation2 + $0xc0] sm:$0xff] %vm2528, %v2522
      %2555 = vst.msk [vmem:[#allocation2 + $0xc8] sm:$0xff] %vm2528, %v2523
      %2556 = vst.msk [vmem:[#allocation2 + $0xd0] sm:$0x3] %vm2531, %v2524
      %2557 = vst.msk [vmem:[#allocation2 + $0xd8] sm:$0xff] %vm2528, %v2525
      %2558 = vst.msk [vmem:[#allocation2 + $0xe0] sm:$0xff] %vm2528, %v2526
      %2559 = vst.msk [vmem:[#allocation2 + $0xe8] sm:$0x3] %vm2531, %v2527
      %v2560 = vld [vmem:[%s3] sm:$0xff]
      %v2561 = vld [vmem:[%s3 + $0x8] sm:$0x1]
      %v2562 = vld [vmem:[#allocation2] sm:$0xff]
      %v2563 = vld [vmem:[#allocation2 + $0x8] sm:$0xff]
      %v2564 = vld [vmem:[#allocation2 + $0x18] sm:$0xff]
      %v2565 = vld [vmem:[#allocation2 + $0x20] sm:$0xff]
      %v2566 = vld [vmem:[#allocation2 + $0x30] sm:$0xff]
      %v2567 = vld [vmem:[#allocation2 + $0x38] sm:$0xff]
      %v2568 = vld [vmem:[#allocation2 + $0x48] sm:$0xff]
      %v2569 = vld [vmem:[#allocation2 + $0x50] sm:$0xff]
      %v2570 = vld [vmem:[#allocation2 + $0x60] sm:$0xff]
      %v2571 = vld [vmem:[#allocation2 + $0x68] sm:$0xff]
      %v2572 = vld [vmem:[#allocation2 + $0x78] sm:$0xff]
      %v2573 = vld [vmem:[#allocation2 + $0x80] sm:$0xff]
      %v2574 = vld [vmem:[#allocation2 + $0x90] sm:$0xff]
      %v2575 = vld [vmem:[#allocation2 + $0x98] sm:$0xff]
      %v2576 = vld [vmem:[#allocation2 + $0xa8] sm:$0xff]
      %v2577 = vld [vmem:[#allocation2 + $0xb0] sm:$0xff]
      %v2578 = vlaneseq
      %v2579 = vshrl.u32 %v2578, 7
      %v2580 = vsub.s32 0, %v2579
      %v2581 = vrot.slane %v2560, %v2580
      %v2582 = vmul.f32 %v2562, %v2581
      %v2583 = vmul.f32 %v2563, %v2581
      %v2584 = vmul.f32 %v2564, %v2581
      %v2585 = vmul.f32 %v2565, %v2581
      %v2586 = vmul.f32 %v2566, %v2581
      %v2587 = vmul.f32 %v2567, %v2581
      %v2588 = vmul.f32 %v2568, %v2581
      %v2589 = vmul.f32 %v2569, %v2581
      %v2590 = vmul.f32 %v2570, %v2581
      %v2591 = vmul.f32 %v2571, %v2581
      %v2592 = vmul.f32 %v2572, %v2581
      %v2593 = vmul.f32 %v2573, %v2581
      %v2594 = vmul.f32 %v2574, %v2581
      %v2595 = vmul.f32 %v2575, %v2581
      %v2596 = vmul.f32 %v2576, %v2581
      %v2597 = vmul.f32 %v2577, %v2581
      %v2598 = vadd.f32 %v2582, 0.0
      %v2599 = vadd.f32 %v2583, 0.0
      %v2600 = vadd.f32 %v2584, 0.0
      %v2601 = vadd.f32 %v2585, 0.0
      %v2602 = vadd.f32 %v2586, 0.0
      %v2603 = vadd.f32 %v2587, 0.0
      %v2604 = vadd.f32 %v2588, 0.0
      %v2605 = vadd.f32 %v2589, 0.0
      %v2606 = vadd.f32 %v2590, 0.0
      %v2607 = vadd.f32 %v2591, 0.0
      %v2608 = vadd.f32 %v2592, 0.0
      %v2609 = vadd.f32 %v2593, 0.0
      %v2610 = vadd.f32 %v2594, 0.0
      %v2611 = vadd.f32 %v2595, 0.0
      %v2612 = vadd.f32 %v2596, 0.0
      %v2613 = vadd.f32 %v2597, 0.0
      %v2614 = vld [vmem:[#allocation2 + $0x1] sm:$0xff]
      %v2615 = vld [vmem:[#allocation2 + $0x9] sm:$0xff]
      %v2616 = vld [vmem:[#allocation2 + $0x19] sm:$0xff]
      %v2617 = vld [vmem:[#allocation2 + $0x21] sm:$0xff]
      %v2618 = vld [vmem:[#allocation2 + $0x31] sm:$0xff]
      %v2619 = vld [vmem:[#allocation2 + $0x39] sm:$0xff]
      %v2620 = vld [vmem:[#allocation2 + $0x49] sm:$0xff]
      %v2621 = vld [vmem:[#allocation2 + $0x51] sm:$0xff]
      %v2622 = vld [vmem:[#allocation2 + $0x61] sm:$0xff]
      %v2623 = vld [vmem:[#allocation2 + $0x69] sm:$0xff]
      %v2624 = vld [vmem:[#allocation2 + $0x79] sm:$0xff]
      %v2625 = vld [vmem:[#allocation2 + $0x81] sm:$0xff]
      %v2626 = vld [vmem:[#allocation2 + $0x91] sm:$0xff]
      %v2627 = vld [vmem:[#allocation2 + $0x99] sm:$0xff]
      %v2628 = vld [vmem:[#allocation2 + $0xa9] sm:$0xff]
      %v2629 = vld [vmem:[#allocation2 + $0xb1] sm:$0xff]
      %v2630 = vlaneseq
      %v2631 = vshrl.u32 %v2630, 7
      %v2632 = vsub.s32 1, %v2631
      %v2633 = vrot.slane %v2560, %v2632
      %v2634 = vmul.f32 %v2614, %v2633
      %v2635 = vmul.f32 %v2615, %v2633
      %v2636 = vmul.f32 %v2616, %v2633
      %v2637 = vmul.f32 %v2617, %v2633
      %v2638 = vmul.f32 %v2618, %v2633
      %v2639 = vmul.f32 %v2619, %v2633
      %v2640 = vmul.f32 %v2620, %v2633
      %v2641 = vmul.f32 %v2621, %v2633
      %v2642 = vmul.f32 %v2622, %v2633
      %v2643 = vmul.f32 %v2623, %v2633
      %v2644 = vmul.f32 %v2624, %v2633
      %v2645 = vmul.f32 %v2625, %v2633
      %v2646 = vmul.f32 %v2626, %v2633
      %v2647 = vmul.f32 %v2627, %v2633
      %v2648 = vmul.f32 %v2628, %v2633
      %v2649 = vmul.f32 %v2629, %v2633
      %v2650 = vadd.f32 %v2598, %v2634
      %v2651 = vadd.f32 %v2599, %v2635
      %v2652 = vadd.f32 %v2600, %v2636
      %v2653 = vadd.f32 %v2601, %v2637
      %v2654 = vadd.f32 %v2602, %v2638
      %v2655 = vadd.f32 %v2603, %v2639
      %v2656 = vadd.f32 %v2604, %v2640
      %v2657 = vadd.f32 %v2605, %v2641
      %v2658 = vadd.f32 %v2606, %v2642
      %v2659 = vadd.f32 %v2607, %v2643
      %v2660 = vadd.f32 %v2608, %v2644
      %v2661 = vadd.f32 %v2609, %v2645
      %v2662 = vadd.f32 %v2610, %v2646
      %v2663 = vadd.f32 %v2611, %v2647
      %v2664 = vadd.f32 %v2612, %v2648
      %v2665 = vadd.f32 %v2613, %v2649
      %v2666 = vld [vmem:[#allocation2 + $0x2] sm:$0xff]
      %v2667 = vld [vmem:[#allocation2 + $0xa] sm:$0xff]
      %v2668 = vld [vmem:[#allocation2 + $0x1a] sm:$0xff]
      %v2669 = vld [vmem:[#allocation2 + $0x22] sm:$0xff]
      %v2670 = vld [vmem:[#allocation2 + $0x32] sm:$0xff]
      %v2671 = vld [vmem:[#allocation2 + $0x3a] sm:$0xff]
      %v2672 = vld [vmem:[#allocation2 + $0x4a] sm:$0xff]
      %v2673 = vld [vmem:[#allocation2 + $0x52] sm:$0xff]
      %v2674 = vld [vmem:[#allocation2 + $0x62] sm:$0xff]
      %v2675 = vld [vmem:[#allocation2 + $0x6a] sm:$0xff]
      %v2676 = vld [vmem:[#allocation2 + $0x7a] sm:$0xff]
      %v2677 = vld [vmem:[#allocation2 + $0x82] sm:$0xff]
      %v2678 = vld [vmem:[#allocation2 + $0x92] sm:$0xff]
      %v2679 = vld [vmem:[#allocation2 + $0x9a] sm:$0xff]
      %v2680 = vld [vmem:[#allocation2 + $0xaa] sm:$0xff]
      %v2681 = vld [vmem:[#allocation2 + $0xb2] sm:$0xff]
      %v2682 = vlaneseq
      %v2683 = vshrl.u32 %v2682, 7
      %v2684 = vsub.s32 2, %v2683
      %v2685 = vrot.slane %v2560, %v2684
      %v2686 = vmul.f32 %v2666, %v2685
      %v2687 = vmul.f32 %v2667, %v2685
      %v2688 = vmul.f32 %v2668, %v2685
      %v2689 = vmul.f32 %v2669, %v2685
      %v2690 = vmul.f32 %v2670, %v2685
      %v2691 = vmul.f32 %v2671, %v2685
      %v2692 = vmul.f32 %v2672, %v2685
      %v2693 = vmul.f32 %v2673, %v2685
      %v2694 = vmul.f32 %v2674, %v2685
      %v2695 = vmul.f32 %v2675, %v2685
      %v2696 = vmul.f32 %v2676, %v2685
      %v2697 = vmul.f32 %v2677, %v2685
      %v2698 = vmul.f32 %v2678, %v2685
      %v2699 = vmul.f32 %v2679, %v2685
      %v2700 = vmul.f32 %v2680, %v2685
      %v2701 = vmul.f32 %v2681, %v2685
      %v2702 = vadd.f32 %v2650, %v2686
      %v2703 = vadd.f32 %v2651, %v2687
      %v2704 = vadd.f32 %v2652, %v2688
      %v2705 = vadd.f32 %v2653, %v2689
      %v2706 = vadd.f32 %v2654, %v2690
      %v2707 = vadd.f32 %v2655, %v2691
      %v2708 = vadd.f32 %v2656, %v2692
      %v2709 = vadd.f32 %v2657, %v2693
      %v2710 = vadd.f32 %v2658, %v2694
      %v2711 = vadd.f32 %v2659, %v2695
      %v2712 = vadd.f32 %v2660, %v2696
      %v2713 = vadd.f32 %v2661, %v2697
      %v2714 = vadd.f32 %v2662, %v2698
      %v2715 = vadd.f32 %v2663, %v2699
      %v2716 = vadd.f32 %v2664, %v2700
      %v2717 = vadd.f32 %v2665, %v2701
      %s2718 = scalar_lea.vmem [#allocation2], 24
      %v2719 = vld [vmem:[%s2718] sm:$0xff]
      %v2720 = vld [vmem:[%s2718 + $0x8] sm:$0xff]
      %v2721 = vld [vmem:[%s2718 + $0x18] sm:$0xff]
      %v2722 = vld [vmem:[%s2718 + $0x20] sm:$0xff]
      %v2723 = vld [vmem:[%s2718 + $0x30] sm:$0xff]
      %v2724 = vld [vmem:[%s2718 + $0x38] sm:$0xff]
      %v2725 = vld [vmem:[%s2718 + $0x48] sm:$0xff]
      %v2726 = vld [vmem:[%s2718 + $0x50] sm:$0xff]
      %v2727 = vld [vmem:[%s2718 + $0x60] sm:$0xff]
      %v2728 = vld [vmem:[%s2718 + $0x68] sm:$0xff]
      %v2729 = vld [vmem:[%s2718 + $0x78] sm:$0xff]
      %v2730 = vld [vmem:[%s2718 + $0x80] sm:$0xff]
      %v2731 = vld [vmem:[%s2718 + $0x90] sm:$0xff]
      %v2732 = vld [vmem:[%s2718 + $0x98] sm:$0xff]
      %v2733 = vld [vmem:[%s2718 + $0xa8] sm:$0xff]
      %v2734 = vld [vmem:[%s2718 + $0xb0] sm:$0xff]
      %v2735 = vlaneseq
      %v2736 = vshrl.u32 %v2735, 7
      %v2737 = vsub.s32 3, %v2736
      %v2738 = vrot.slane %v2560, %v2737
      %v2739 = vmul.f32 %v2719, %v2738
      %v2740 = vmul.f32 %v2720, %v2738
      %v2741 = vmul.f32 %v2721, %v2738
      %v2742 = vmul.f32 %v2722, %v2738
      %v2743 = vmul.f32 %v2723, %v2738
      %v2744 = vmul.f32 %v2724, %v2738
      %v2745 = vmul.f32 %v2725, %v2738
      %v2746 = vmul.f32 %v2726, %v2738
      %v2747 = vmul.f32 %v2727, %v2738
      %v2748 = vmul.f32 %v2728, %v2738
      %v2749 = vmul.f32 %v2729, %v2738
      %v2750 = vmul.f32 %v2730, %v2738
      %v2751 = vmul.f32 %v2731, %v2738
      %v2752 = vmul.f32 %v2732, %v2738
      %v2753 = vmul.f32 %v2733, %v2738
      %v2754 = vmul.f32 %v2734, %v2738
      %v2755 = vadd.f32 %v2702, %v2739
      %v2756 = vadd.f32 %v2703, %v2740
      %v2757 = vadd.f32 %v2704, %v2741
      %v2758 = vadd.f32 %v2705, %v2742
      %v2759 = vadd.f32 %v2706, %v2743
      %v2760 = vadd.f32 %v2707, %v2744
      %v2761 = vadd.f32 %v2708, %v2745
      %v2762 = vadd.f32 %v2709, %v2746
      %v2763 = vadd.f32 %v2710, %v2747
      %v2764 = vadd.f32 %v2711, %v2748
      %v2765 = vadd.f32 %v2712, %v2749
      %v2766 = vadd.f32 %v2713, %v2750
      %v2767 = vadd.f32 %v2714, %v2751
      %v2768 = vadd.f32 %v2715, %v2752
      %v2769 = vadd.f32 %v2716, %v2753
      %v2770 = vadd.f32 %v2717, %v2754
      %v2771 = vld [vmem:[%s2718 + $0x1] sm:$0xff]
      %v2772 = vld [vmem:[%s2718 + $0x9] sm:$0xff]
      %v2773 = vld [vmem:[%s2718 + $0x19] sm:$0xff]
      %v2774 = vld [vmem:[%s2718 + $0x21] sm:$0xff]
      %v2775 = vld [vmem:[%s2718 + $0x31] sm:$0xff]
      %v2776 = vld [vmem:[%s2718 + $0x39] sm:$0xff]
      %v2777 = vld [vmem:[%s2718 + $0x49] sm:$0xff]
      %v2778 = vld [vmem:[%s2718 + $0x51] sm:$0xff]
      %v2779 = vld [vmem:[%s2718 + $0x61] sm:$0xff]
      %v2780 = vld [vmem:[%s2718 + $0x69] sm:$0xff]
      %v2781 = vld [vmem:[%s2718 + $0x79] sm:$0xff]
      %v2782 = vld [vmem:[%s2718 + $0x81] sm:$0xff]
      %v2783 = vld [vmem:[%s2718 + $0x91] sm:$0xff]
      %v2784 = vld [vmem:[%s2718 + $0x99] sm:$0xff]
      %v2785 = vld [vmem:[%s2718 + $0xa9] sm:$0xff]
      %v2786 = vld [vmem:[%s2718 + $0xb1] sm:$0xff]
      %v2787 = vlaneseq
      %v2788 = vshrl.u32 %v2787, 7
      %v2789 = vsub.s32 4, %v2788
      %v2790 = vrot.slane %v2560, %v2789
      %v2791 = vmul.f32 %v2771, %v2790
      %v2792 = vmul.f32 %v2772, %v2790
      %v2793 = vmul.f32 %v2773, %v2790
      %v2794 = vmul.f32 %v2774, %v2790
      %v2795 = vmul.f32 %v2775, %v2790
      %v2796 = vmul.f32 %v2776, %v2790
      %v2797 = vmul.f32 %v2777, %v2790
      %v2798 = vmul.f32 %v2778, %v2790
      %v2799 = vmul.f32 %v2779, %v2790
      %v2800 = vmul.f32 %v2780, %v2790
      %v2801 = vmul.f32 %v2781, %v2790
      %v2802 = vmul.f32 %v2782, %v2790
      %v2803 = vmul.f32 %v2783, %v2790
      %v2804 = vmul.f32 %v2784, %v2790
      %v2805 = vmul.f32 %v2785, %v2790
      %v2806 = vmul.f32 %v2786, %v2790
      %v2807 = vadd.f32 %v2755, %v2791
      %v2808 = vadd.f32 %v2756, %v2792
      %v2809 = vadd.f32 %v2757, %v2793
      %v2810 = vadd.f32 %v2758, %v2794
      %v2811 = vadd.f32 %v2759, %v2795
      %v2812 = vadd.f32 %v2760, %v2796
      %v2813 = vadd.f32 %v2761, %v2797
      %v2814 = vadd.f32 %v2762, %v2798
      %v2815 = vadd.f32 %v2763, %v2799
      %v2816 = vadd.f32 %v2764, %v2800
      %v2817 = vadd.f32 %v2765, %v2801
      %v2818 = vadd.f32 %v2766, %v2802
      %v2819 = vadd.f32 %v2767, %v2803
      %v2820 = vadd.f32 %v2768, %v2804
      %v2821 = vadd.f32 %v2769, %v2805
      %v2822 = vadd.f32 %v2770, %v2806
      %v2823 = vld [vmem:[%s2718 + $0x2] sm:$0xff]
      %v2824 = vld [vmem:[%s2718 + $0xa] sm:$0xff]
      %v2825 = vld [vmem:[%s2718 + $0x1a] sm:$0xff]
      %v2826 = vld [vmem:[%s2718 + $0x22] sm:$0xff]
      %v2827 = vld [vmem:[%s2718 + $0x32] sm:$0xff]
      %v2828 = vld [vmem:[%s2718 + $0x3a] sm:$0xff]
      %v2829 = vld [vmem:[%s2718 + $0x4a] sm:$0xff]
      %v2830 = vld [vmem:[%s2718 + $0x52] sm:$0xff]
      %v2831 = vld [vmem:[%s2718 + $0x62] sm:$0xff]
      %v2832 = vld [vmem:[%s2718 + $0x6a] sm:$0xff]
      %v2833 = vld [vmem:[%s2718 + $0x7a] sm:$0xff]
      %v2834 = vld [vmem:[%s2718 + $0x82] sm:$0xff]
      %v2835 = vld [vmem:[%s2718 + $0x92] sm:$0xff]
      %v2836 = vld [vmem:[%s2718 + $0x9a] sm:$0xff]
      %v2837 = vld [vmem:[%s2718 + $0xaa] sm:$0xff]
      %v2838 = vld [vmem:[%s2718 + $0xb2] sm:$0xff]
      %v2839 = vlaneseq
      %v2840 = vshrl.u32 %v2839, 7
      %v2841 = vsub.s32 5, %v2840
      %v2842 = vrot.slane %v2560, %v2841
      %v2843 = vmul.f32 %v2823, %v2842
      %v2844 = vmul.f32 %v2824, %v2842
      %v2845 = vmul.f32 %v2825, %v2842
      %v2846 = vmul.f32 %v2826, %v2842
      %v2847 = vmul.f32 %v2827, %v2842
      %v2848 = vmul.f32 %v2828, %v2842
      %v2849 = vmul.f32 %v2829, %v2842
      %v2850 = vmul.f32 %v2830, %v2842
      %v2851 = vmul.f32 %v2831, %v2842
      %v2852 = vmul.f32 %v2832, %v2842
      %v2853 = vmul.f32 %v2833, %v2842
      %v2854 = vmul.f32 %v2834, %v2842
      %v2855 = vmul.f32 %v2835, %v2842
      %v2856 = vmul.f32 %v2836, %v2842
      %v2857 = vmul.f32 %v2837, %v2842
      %v2858 = vmul.f32 %v2838, %v2842
      %v2859 = vadd.f32 %v2807, %v2843
      %v2860 = vadd.f32 %v2808, %v2844
      %v2861 = vadd.f32 %v2809, %v2845
      %v2862 = vadd.f32 %v2810, %v2846
      %v2863 = vadd.f32 %v2811, %v2847
      %v2864 = vadd.f32 %v2812, %v2848
      %v2865 = vadd.f32 %v2813, %v2849
      %v2866 = vadd.f32 %v2814, %v2850
      %v2867 = vadd.f32 %v2815, %v2851
      %v2868 = vadd.f32 %v2816, %v2852
      %v2869 = vadd.f32 %v2817, %v2853
      %v2870 = vadd.f32 %v2818, %v2854
      %v2871 = vadd.f32 %v2819, %v2855
      %v2872 = vadd.f32 %v2820, %v2856
      %v2873 = vadd.f32 %v2821, %v2857
      %v2874 = vadd.f32 %v2822, %v2858
      %s2875 = scalar_lea.vmem [#allocation2], 48
      %v2876 = vld [vmem:[%s2875] sm:$0xff]
      %v2877 = vld [vmem:[%s2875 + $0x8] sm:$0xff]
      %v2878 = vld [vmem:[%s2875 + $0x18] sm:$0xff]
      %v2879 = vld [vmem:[%s2875 + $0x20] sm:$0xff]
      %v2880 = vld [vmem:[%s2875 + $0x30] sm:$0xff]
      %v2881 = vld [vmem:[%s2875 + $0x38] sm:$0xff]
      %v2882 = vld [vmem:[%s2875 + $0x48] sm:$0xff]
      %v2883 = vld [vmem:[%s2875 + $0x50] sm:$0xff]
      %v2884 = vld [vmem:[%s2875 + $0x60] sm:$0xff]
      %v2885 = vld [vmem:[%s2875 + $0x68] sm:$0xff]
      %v2886 = vld [vmem:[%s2875 + $0x78] sm:$0xff]
      %v2887 = vld [vmem:[%s2875 + $0x80] sm:$0xff]
      %v2888 = vld [vmem:[%s2875 + $0x90] sm:$0xff]
      %v2889 = vld [vmem:[%s2875 + $0x98] sm:$0xff]
      %v2890 = vld [vmem:[%s2875 + $0xa8] sm:$0xff]
      %v2891 = vld [vmem:[%s2875 + $0xb0] sm:$0xff]
      %v2892 = vlaneseq
      %v2893 = vshrl.u32 %v2892, 7
      %v2894 = vsub.s32 6, %v2893
      %v2895 = vrot.slane %v2560, %v2894
      %v2896 = vmul.f32 %v2876, %v2895
      %v2897 = vmul.f32 %v2877, %v2895
      %v2898 = vmul.f32 %v2878, %v2895
      %v2899 = vmul.f32 %v2879, %v2895
      %v2900 = vmul.f32 %v2880, %v2895
      %v2901 = vmul.f32 %v2881, %v2895
      %v2902 = vmul.f32 %v2882, %v2895
      %v2903 = vmul.f32 %v2883, %v2895
      %v2904 = vmul.f32 %v2884, %v2895
      %v2905 = vmul.f32 %v2885, %v2895
      %v2906 = vmul.f32 %v2886, %v2895
      %v2907 = vmul.f32 %v2887, %v2895
      %v2908 = vmul.f32 %v2888, %v2895
      %v2909 = vmul.f32 %v2889, %v2895
      %v2910 = vmul.f32 %v2890, %v2895
      %v2911 = vmul.f32 %v2891, %v2895
      %v2912 = vadd.f32 %v2859, %v2896
      %v2913 = vadd.f32 %v2860, %v2897
      %v2914 = vadd.f32 %v2861, %v2898
      %v2915 = vadd.f32 %v2862, %v2899
      %v2916 = vadd.f32 %v2863, %v2900
      %v2917 = vadd.f32 %v2864, %v2901
      %v2918 = vadd.f32 %v2865, %v2902
      %v2919 = vadd.f32 %v2866, %v2903
      %v2920 = vadd.f32 %v2867, %v2904
      %v2921 = vadd.f32 %v2868, %v2905
      %v2922 = vadd.f32 %v2869, %v2906
      %v2923 = vadd.f32 %v2870, %v2907
      %v2924 = vadd.f32 %v2871, %v2908
      %v2925 = vadd.f32 %v2872, %v2909
      %v2926 = vadd.f32 %v2873, %v2910
      %v2927 = vadd.f32 %v2874, %v2911
      %v2928 = vld [vmem:[%s2875 + $0x1] sm:$0xff]
      %v2929 = vld [vmem:[%s2875 + $0x9] sm:$0xff]
      %v2930 = vld [vmem:[%s2875 + $0x19] sm:$0xff]
      %v2931 = vld [vmem:[%s2875 + $0x21] sm:$0xff]
      %v2932 = vld [vmem:[%s2875 + $0x31] sm:$0xff]
      %v2933 = vld [vmem:[%s2875 + $0x39] sm:$0xff]
      %v2934 = vld [vmem:[%s2875 + $0x49] sm:$0xff]
      %v2935 = vld [vmem:[%s2875 + $0x51] sm:$0xff]
      %v2936 = vld [vmem:[%s2875 + $0x61] sm:$0xff]
      %v2937 = vld [vmem:[%s2875 + $0x69] sm:$0xff]
      %v2938 = vld [vmem:[%s2875 + $0x79] sm:$0xff]
      %v2939 = vld [vmem:[%s2875 + $0x81] sm:$0xff]
      %v2940 = vld [vmem:[%s2875 + $0x91] sm:$0xff]
      %v2941 = vld [vmem:[%s2875 + $0x99] sm:$0xff]
      %v2942 = vld [vmem:[%s2875 + $0xa9] sm:$0xff]
      %v2943 = vld [vmem:[%s2875 + $0xb1] sm:$0xff]
      %v2944 = vlaneseq
      %v2945 = vshrl.u32 %v2944, 7
      %v2946 = vsub.s32 7, %v2945
      %v2947 = vrot.slane %v2560, %v2946
      %v2948 = vmul.f32 %v2928, %v2947
      %v2949 = vmul.f32 %v2929, %v2947
      %v2950 = vmul.f32 %v2930, %v2947
      %v2951 = vmul.f32 %v2931, %v2947
      %v2952 = vmul.f32 %v2932, %v2947
      %v2953 = vmul.f32 %v2933, %v2947
      %v2954 = vmul.f32 %v2934, %v2947
      %v2955 = vmul.f32 %v2935, %v2947
      %v2956 = vmul.f32 %v2936, %v2947
      %v2957 = vmul.f32 %v2937, %v2947
      %v2958 = vmul.f32 %v2938, %v2947
      %v2959 = vmul.f32 %v2939, %v2947
      %v2960 = vmul.f32 %v2940, %v2947
      %v2961 = vmul.f32 %v2941, %v2947
      %v2962 = vmul.f32 %v2942, %v2947
      %v2963 = vmul.f32 %v2943, %v2947
      %v2964 = vadd.f32 %v2912, %v2948
      %v2965 = vadd.f32 %v2913, %v2949
      %v2966 = vadd.f32 %v2914, %v2950
      %v2967 = vadd.f32 %v2915, %v2951
      %v2968 = vadd.f32 %v2916, %v2952
      %v2969 = vadd.f32 %v2917, %v2953
      %v2970 = vadd.f32 %v2918, %v2954
      %v2971 = vadd.f32 %v2919, %v2955
      %v2972 = vadd.f32 %v2920, %v2956
      %v2973 = vadd.f32 %v2921, %v2957
      %v2974 = vadd.f32 %v2922, %v2958
      %v2975 = vadd.f32 %v2923, %v2959
      %v2976 = vadd.f32 %v2924, %v2960
      %v2977 = vadd.f32 %v2925, %v2961
      %v2978 = vadd.f32 %v2926, %v2962
      %v2979 = vadd.f32 %v2927, %v2963
      %v2980 = vld [vmem:[%s2875 + $0x2] sm:$0xff]
      %v2981 = vld [vmem:[%s2875 + $0xa] sm:$0xff]
      %v2982 = vld [vmem:[%s2875 + $0x1a] sm:$0xff]
      %v2983 = vld [vmem:[%s2875 + $0x22] sm:$0xff]
      %v2984 = vld [vmem:[%s2875 + $0x32] sm:$0xff]
      %v2985 = vld [vmem:[%s2875 + $0x3a] sm:$0xff]
      %v2986 = vld [vmem:[%s2875 + $0x4a] sm:$0xff]
      %v2987 = vld [vmem:[%s2875 + $0x52] sm:$0xff]
      %v2988 = vld [vmem:[%s2875 + $0x62] sm:$0xff]
      %v2989 = vld [vmem:[%s2875 + $0x6a] sm:$0xff]
      %v2990 = vld [vmem:[%s2875 + $0x7a] sm:$0xff]
      %v2991 = vld [vmem:[%s2875 + $0x82] sm:$0xff]
      %v2992 = vld [vmem:[%s2875 + $0x92] sm:$0xff]
      %v2993 = vld [vmem:[%s2875 + $0x9a] sm:$0xff]
      %v2994 = vld [vmem:[%s2875 + $0xaa] sm:$0xff]
      %v2995 = vld [vmem:[%s2875 + $0xb2] sm:$0xff]
      %v2996 = vlaneseq
      %v2997 = vshrl.u32 %v2996, 7
      %v2998 = vsub.s32 0, %v2997
      %v2999 = vrot.slane %v2561, %v2998
      %v3000 = vmul.f32 %v2980, %v2999
      %v3001 = vmul.f32 %v2981, %v2999
      %v3002 = vmul.f32 %v2982, %v2999
      %v3003 = vmul.f32 %v2983, %v2999
      %v3004 = vmul.f32 %v2984, %v2999
      %v3005 = vmul.f32 %v2985, %v2999
      %v3006 = vmul.f32 %v2986, %v2999
      %v3007 = vmul.f32 %v2987, %v2999
      %v3008 = vmul.f32 %v2988, %v2999
      %v3009 = vmul.f32 %v2989, %v2999
      %v3010 = vmul.f32 %v2990, %v2999
      %v3011 = vmul.f32 %v2991, %v2999
      %v3012 = vmul.f32 %v2992, %v2999
      %v3013 = vmul.f32 %v2993, %v2999
      %v3014 = vmul.f32 %v2994, %v2999
      %v3015 = vmul.f32 %v2995, %v2999
      %v3016 = vadd.f32 %v2964, %v3000
      %v3017 = vadd.f32 %v2965, %v3001
      %v3018 = vadd.f32 %v2966, %v3002
      %v3019 = vadd.f32 %v2967, %v3003
      %v3020 = vadd.f32 %v2968, %v3004
      %v3021 = vadd.f32 %v2969, %v3005
      %v3022 = vadd.f32 %v2970, %v3006
      %v3023 = vadd.f32 %v2971, %v3007
      %v3024 = vadd.f32 %v2972, %v3008
      %v3025 = vadd.f32 %v2973, %v3009
      %v3026 = vadd.f32 %v2974, %v3010
      %v3027 = vadd.f32 %v2975, %v3011
      %v3028 = vadd.f32 %v2976, %v3012
      %v3029 = vadd.f32 %v2977, %v3013
      %v3030 = vadd.f32 %v2978, %v3014
      %v3031 = vadd.f32 %v2979, %v3015
      %v3032 = vld [vmem:[%s4] sm:$0x1]
      %v3034 = vlaneseq
      %v3035 = vshrl.u32 %v3034, 7
      %v3036 = vsub.s32 0, %v3035
      %v3037 = vrot.slane %v3032, %v3036
      %v3039 = vadd.f32 %v3016, %v3037
      %v3040 = vadd.f32 %v3017, %v3037
      %v3041 = vadd.f32 %v3018, %v3037
      %v3042 = vadd.f32 %v3019, %v3037
      %v3043 = vadd.f32 %v3020, %v3037
      %v3044 = vadd.f32 %v3021, %v3037
      %v3045 = vadd.f32 %v3022, %v3037
      %v3046 = vadd.f32 %v3023, %v3037
      %v3047 = vadd.f32 %v3024, %v3037
      %v3048 = vadd.f32 %v3025, %v3037
      %v3049 = vadd.f32 %v3026, %v3037
      %v3050 = vadd.f32 %v3027, %v3037
      %v3051 = vadd.f32 %v3028, %v3037
      %v3052 = vadd.f32 %v3029, %v3037
      %v3053 = vadd.f32 %v3030, %v3037
      %v3054 = vadd.f32 %v3031, %v3037
      %v3055 = vmax.f32 %v3039, 0.0
      %v3056 = vmax.f32 %v3040, 0.0
      %v3057 = vmax.f32 %v3041, 0.0
      %v3058 = vmax.f32 %v3042, 0.0
      %v3059 = vmax.f32 %v3043, 0.0
      %v3060 = vmax.f32 %v3044, 0.0
      %v3061 = vmax.f32 %v3045, 0.0
      %v3062 = vmax.f32 %v3046, 0.0
      %v3063 = vmax.f32 %v3047, 0.0
      %v3064 = vmax.f32 %v3048, 0.0
      %v3065 = vmax.f32 %v3049, 0.0
      %v3066 = vmax.f32 %v3050, 0.0
      %v3067 = vmax.f32 %v3051, 0.0
      %v3068 = vmax.f32 %v3052, 0.0
      %v3069 = vmax.f32 %v3053, 0.0
      %v3070 = vmax.f32 %v3054, 0.0
      %v3071 = vld [vmem:[%s5] sm:$0xff]
      %v3072 = vld [vmem:[%s5 + $0x8] sm:$0xff]
      %v3073 = vld [vmem:[%s5 + $0x10] sm:$0xff]
      %v3074 = vld [vmem:[%s5 + $0x18] sm:$0xff]
      %v3075 = vld [vmem:[%s6] sm:$0x1]
      %v3077 = vlaneseq
      %v3078 = vshrl.u32 %v3077, 7
      %v3079 = vsub.s32 0, %v3078
      %v3080 = vrot.slane %v3075, %v3079
      %v3083 = vsel %vm2528, %v3055, 0
      %v3086 = vsel %vm2528, %v3056, 0
      %v3089 = vsel %vm2528, %v3057, 0
      %v3092 = vsel %vm2528, %v3058, 0
      %v3095 = vsel %vm2528, %v3059, 0
      %v3098 = vsel %vm2528, %v3060, 0
      %v3101 = vsel %vm2528, %v3061, 0
      %v3104 = vsel %vm2528, %v3062, 0
      %v3107 = vsel %vm2528, %v3063, 0
      %v3110 = vsel %vm2528, %v3064, 0
      %v3113 = vsel %vm2528, %v3065, 0
      %v3116 = vsel %vm2528, %v3066, 0
      %v3119 = vsel %vm2528, %v3067, 0
      %v3122 = vsel %vm2528, %v3068, 0
      %v3125 = vsel %vm2528, %v3069, 0
      %v3128 = vsel %vm2528, %v3070, 0
      %3130 = vmatprep.subr.mxu0 0.0
      %3131 = vmatpush1.msra.mxu0 %v3071
      %3132 = vmatprep.subr.mxu0 0.0
      %3133 = vmatpush1.msra.mxu0 %v3072
      %3134 = vmatprep.subr.mxu0 0.0
      %3135 = vmatpush1.msra.mxu0 %v3073
      %3136 = vmatprep.subr.mxu0 0.0
      %3137 = vmatpush1.msra.mxu0 %v3074
      %3138 = vmatprep.subr.mxu0 0.0
      %3139 = vmatpush1.msra.mxu0 0.0
      %3140 = vmatprep.subr.mxu0 0.0
      %3141 = vmatpush1.msra.mxu0 0.0
      %3142 = vmatprep.subr.mxu0 0.0
      %3143 = vmatpush1.msra.mxu0 0.0
      %3144 = vmatprep.subr.mxu0 0.0
      %3145 = vmatpush1.msra.mxu0 0.0
      %3146 = vmatprep.subr.mxu0 0.0
      %3147 = vmatpush1.msra.mxu0 0.0
      %3148 = vmatprep.subr.mxu0 0.0
      %3149 = vmatpush1.msra.mxu0 0.0
      %3150 = vmatprep.subr.mxu0 0.0
      %3151 = vmatpush1.msra.mxu0 0.0
      %3152 = vmatprep.subr.mxu0 0.0
      %3153 = vmatpush1.msra.mxu0 0.0
      %3154 = vmatprep.subr.mxu0 0.0
      %3155 = vmatpush1.msra.mxu0 0.0
      %3156 = vmatprep.subr.mxu0 0.0
      %3157 = vmatpush1.msra.mxu0 0.0
      %3158 = vmatprep.subr.mxu0 0.0
      %3159 = vmatpush1.msra.mxu0 0.0
      %3160 = vmatprep.subr.mxu0 0.0
      %3161 = vmatpush1.msra.mxu0 0.0
      %3162 = vmatprep.subr.mxu0 0.0
      %3163 = vmatpush1.msra.mxu0 0.0
      %3164 = vmatprep.subr.mxu0 0.0
      %3165 = vmatpush1.msra.mxu0 0.0
      %3166 = vmatprep.subr.mxu0 0.0
      %3167 = vmatpush1.msra.mxu0 0.0
      %3168 = vmatprep.subr.mxu0 0.0
      %3169 = vmatpush1.msra.mxu0 0.0
      %3170 = vmatprep.subr.mxu0 0.0
      %3171 = vmatpush1.msra.mxu0 0.0
      %3172 = vmatprep.subr.mxu0 0.0
      %3173 = vmatpush1.msra.mxu0 0.0
      %3174 = vmatprep.subr.mxu0 0.0
      %3175 = vmatpush1.msra.mxu0 0.0
      %3176 = vmatprep.subr.mxu0 0.0
      %3177 = vmatpush1.msra.mxu0 0.0
      %3178 = vmatprep.subr.mxu0 0.0
      %3179 = vmatpush1.msra.mxu0 0.0
      %3180 = vmatprep.subr.mxu0 0.0
      %3181 = vmatpush1.msra.mxu0 0.0
      %3182 = vmatprep.subr.mxu0 0.0
      %3183 = vmatpush1.msra.mxu0 0.0
      %3184 = vmatprep.subr.mxu0 0.0
      %3185 = vmatpush1.msra.mxu0 0.0
      %3186 = vmatprep.subr.mxu0 0.0
      %3187 = vmatpush1.msra.mxu0 0.0
      %3188 = vmatprep.subr.mxu0 0.0
      %3189 = vmatpush1.msra.mxu0 0.0
      %3190 = vmatprep.subr.mxu0 0.0
      %3191 = vmatpush1.msra.mxu0 0.0
      %3192 = vmatprep.subr.mxu0 0.0
      %3193 = vmatpush1.msra.mxu0 0.0
      %3194 = vmatprep.mubr.f32.mxu0 0.0
      %3195 = vmatmul.mubr.f32.gmra.mrb[0].mxu0 %v3083
      %v3196 = vpop.f32.mrb[0].mxu0
      %v3197 = vadd.f32 %v3080, %v3196
      %v3198 = vpop.f32.mrb[0].mxu0
      %3199 = vmatprep.mubr.f32.mxu0 0.0
      %3200 = vmatmul.mubr.f32.gmra.mrb[0].mxu0 %v3086
      %v3201 = vpop.f32.mrb[0].mxu0
      %v3202 = vadd.f32 %v3080, %v3201
      %v3203 = vpop.f32.mrb[0].mxu0
      %3204 = vmatprep.mubr.f32.mxu0 0.0
      %3205 = vmatmul.mubr.f32.gmra.mrb[0].mxu0 %v3089
      %v3206 = vpop.f32.mrb[0].mxu0
      %v3207 = vadd.f32 %v3080, %v3206
      %v3208 = vpop.f32.mrb[0].mxu0
      %3209 = vmatprep.mubr.f32.mxu0 0.0
      %3210 = vmatmul.mubr.f32.gmra.mrb[0].mxu0 %v3092
      %v3211 = vpop.f32.mrb[0].mxu0
      %v3212 = vadd.f32 %v3080, %v3211
      %v3213 = vpop.f32.mrb[0].mxu0
      %3214 = vmatprep.mubr.f32.mxu0 0.0
      %3215 = vmatmul.mubr.f32.gmra.mrb[0].mxu0 %v3095
      %v3216 = vpop.f32.mrb[0].mxu0
      %v3217 = vadd.f32 %v3080, %v3216
      %v3218 = vpop.f32.mrb[0].mxu0
      %3219 = vmatprep.mubr.f32.mxu0 0.0
      %3220 = vmatmul.mubr.f32.gmra.mrb[0].mxu0 %v3098
      %v3221 = vpop.f32.mrb[0].mxu0
      %v3222 = vadd.f32 %v3080, %v3221
      %v3223 = vpop.f32.mrb[0].mxu0
      %3224 = vmatprep.mubr.f32.mxu0 0.0
      %3225 = vmatmul.mubr.f32.gmra.mrb[0].mxu0 %v3101
      %v3226 = vpop.f32.mrb[0].mxu0
      %v3227 = vadd.f32 %v3080, %v3226
      %v3228 = vpop.f32.mrb[0].mxu0
      %3229 = vmatprep.mubr.f32.mxu0 0.0
      %3230 = vmatmul.mubr.f32.gmra.mrb[0].mxu0 %v3104
      %v3231 = vpop.f32.mrb[0].mxu0
      %v3232 = vadd.f32 %v3080, %v3231
      %v3233 = vpop.f32.mrb[0].mxu0
      %3234 = vmatprep.mubr.f32.mxu0 0.0
      %3235 = vmatmul.mubr.f32.gmra.mrb[0].mxu0 %v3107
      %v3236 = vpop.f32.mrb[0].mxu0
      %v3237 = vadd.f32 %v3080, %v3236
      %v3238 = vpop.f32.mrb[0].mxu0
      %3239 = vmatprep.mubr.f32.mxu0 0.0
      %3240 = vmatmul.mubr.f32.gmra.mrb[0].mxu0 %v3110
      %v3241 = vpop.f32.mrb[0].mxu0
      %v3242 = vadd.f32 %v3080, %v3241
      %v3243 = vpop.f32.mrb[0].mxu0
      %3244 = vmatprep.mubr.f32.mxu0 0.0
      %3245 = vmatmul.mubr.f32.gmra.mrb[0].mxu0 %v3113
      %v3246 = vpop.f32.mrb[0].mxu0
      %v3247 = vadd.f32 %v3080, %v3246
      %v3248 = vpop.f32.mrb[0].mxu0
      %3249 = vmatprep.mubr.f32.mxu0 0.0
      %3250 = vmatmul.mubr.f32.gmra.mrb[0].mxu0 %v3116
      %v3251 = vpop.f32.mrb[0].mxu0
      %v3252 = vadd.f32 %v3080, %v3251
      %v3253 = vpop.f32.mrb[0].mxu0
      %3254 = vmatprep.mubr.f32.mxu0 0.0
      %3255 = vmatmul.mubr.f32.gmra.mrb[0].mxu0 %v3119
      %v3256 = vpop.f32.mrb[0].mxu0
      %v3257 = vadd.f32 %v3080, %v3256
      %v3258 = vpop.f32.mrb[0].mxu0
      %3259 = vmatprep.mubr.f32.mxu0 0.0
      %3260 = vmatmul.mubr.f32.gmra.mrb[0].mxu0 %v3122
      %v3261 = vpop.f32.mrb[0].mxu0
      %v3262 = vadd.f32 %v3080, %v3261
      %v3263 = vpop.f32.mrb[0].mxu0
      %3264 = vmatprep.mubr.f32.mxu0 0.0
      %3265 = vmatmul.mubr.f32.gmra.mrb[0].mxu0 %v3125
      %v3266 = vpop.f32.mrb[0].mxu0
      %v3267 = vadd.f32 %v3080, %v3266
      %v3268 = vpop.f32.mrb[0].mxu0
      %3269 = vmatprep.mubr.f32.mxu0 0.0
      %3270 = vmatmul.mubr.f32.gmra.mrb[0].mxu0 %v3128
      %v3271 = vpop.f32.mrb[0].mxu0
      %v3272 = vadd.f32 %v3080, %v3271
      %v3273 = vpop.f32.mrb[0].mxu0
      %3274 = vdwg.mxu0
      %v3275 = vld [vmem:[%s357] sm:$0xff]
      %v3276 = vld [vmem:[%s357 + $0x8] sm:$0xff]
      %v3277 = vld [vmem:[%s357 + $0x10] sm:$0xff]
      %v3278 = vld [vmem:[%s357 + $0x18] sm:$0xff]
      %v3279 = vld [vmem:[%s357 + $0x20] sm:$0xff]
      %v3280 = vld [vmem:[%s357 + $0x28] sm:$0xff]
      %v3281 = vld [vmem:[%s357 + $0x30] sm:$0xff]
      %v3282 = vld [vmem:[%s357 + $0x38] sm:$0xff]
      %v3283 = vld [vmem:[%s357 + $0x40] sm:$0xff]
      %v3284 = vld [vmem:[%s357 + $0x48] sm:$0xff]
      %v3285 = vld [vmem:[%s357 + $0x50] sm:$0xff]
      %v3286 = vld [vmem:[%s357 + $0x58] sm:$0xff]
      %v3287 = vld [vmem:[%s357 + $0x60] sm:$0xff]
      %v3288 = vld [vmem:[%s357 + $0x68] sm:$0xff]
      %v3289 = vld [vmem:[%s357 + $0x70] sm:$0xff]
      %v3290 = vld [vmem:[%s357 + $0x78] sm:$0xff]
      %v3291 = vadd.f32 %v3197, %v3275
      %v3292 = vadd.f32 %v3202, %v3276
      %v3293 = vadd.f32 %v3207, %v3277
      %v3294 = vadd.f32 %v3212, %v3278
      %v3295 = vadd.f32 %v3217, %v3279
      %v3296 = vadd.f32 %v3222, %v3280
      %v3297 = vadd.f32 %v3227, %v3281
      %v3298 = vadd.f32 %v3232, %v3282
      %v3299 = vadd.f32 %v3237, %v3283
      %v3300 = vadd.f32 %v3242, %v3284
      %v3301 = vadd.f32 %v3247, %v3285
      %v3302 = vadd.f32 %v3252, %v3286
      %v3303 = vadd.f32 %v3257, %v3287
      %v3304 = vadd.f32 %v3262, %v3288
      %v3305 = vadd.f32 %v3267, %v3289
      %v3306 = vadd.f32 %v3272, %v3290
      %3307 = vst.msk [vmem:[%s368] sm:$0xff] %vm1233, %v3291
      %3308 = vst.msk [vmem:[%s368 + $0x8] sm:$0xff] %vm1233, %v3292
      %3309 = vst.msk [vmem:[%s368 + $0x10] sm:$0xff] %vm1233, %v3293
      %3310 = vst.msk [vmem:[%s368 + $0x18] sm:$0xff] %vm1233, %v3294
      %3311 = vst.msk [vmem:[%s368 + $0x20] sm:$0xff] %vm1233, %v3295
      %3312 = vst.msk [vmem:[%s368 + $0x28] sm:$0xff] %vm1233, %v3296
      %3313 = vst.msk [vmem:[%s368 + $0x30] sm:$0xff] %vm1233, %v3297
      %3314 = vst.msk [vmem:[%s368 + $0x38] sm:$0xff] %vm1233, %v3298
      %3315 = vst.msk [vmem:[%s368 + $0x40] sm:$0xff] %vm1233, %v3299
      %3316 = vst.msk [vmem:[%s368 + $0x48] sm:$0xff] %vm1233, %v3300
      %3317 = vst.msk [vmem:[%s368 + $0x50] sm:$0xff] %vm1233, %v3301
      %3318 = vst.msk [vmem:[%s368 + $0x58] sm:$0xff] %vm1233, %v3302
      %3319 = vst.msk [vmem:[%s368 + $0x60] sm:$0xff] %vm1233, %v3303
      %3320 = vst.msk [vmem:[%s368 + $0x68] sm:$0xff] %vm1233, %v3304
      %3321 = vst.msk [vmem:[%s368 + $0x70] sm:$0xff] %vm1233, %v3305
      %3322 = vst.msk [vmem:[%s368 + $0x78] sm:$0xff] %vm1233, %v3306
      %s3323 = smul.u32 8, %s24
      %p3324 = scmp.lt.s32.totalorder %s23, 1
      %s3325 = scalar_select %p3324, %s23, 1
      %p3326 = scmp.lt.s32.totalorder %s3323, 15
      %s3327 = scalar_select %p3326, %s3323, 15
      %s3328 = smul.addr %s3327, 2
      %s3329 = smul.addr %s3325, 32
      %s3330 = sadd.s32 %s3328, %s3329
      %s3331 = smul.addr %s3330, 8
      %s3332 = scalar_lea.vmem %s8, %s3331
      // Predicated region
      $region53: #{_mobile_block_forward.1} parent=51 // pred_check
        %p3333 = pneg %p231
      $region54: #{_mobile_block_forward.1} parent=51 // pred_check_branch
        %3335 = sbr.rel (%p3333) target = $region56
      $region55: #{_mobile_block_forward.1} parent=51 // pred_region
        %s3336 = smul.u32 8, %s24
      $region56: #{_mobile_block_forward.1} parent=51 // pred_fallthru
        _
    $region52: #{_mobile_block_forward.1} parent=5 // pred_fallthru
      _
    %p3337 = scmp.le.s32.totalorder 2, %s14
    // Predicated region
    $region57: #{_mobile_block_forward.1} parent=5 // pred_check
      %p3338 = pneg %p3337
    $region58: #{_mobile_block_forward.1} parent=5 // pred_check_branch
      %3340 = sbr.rel (%p3338) target = $region60
    $region59: #{_mobile_block_forward.1} parent=5 // pred_region
      %s3341 = ssub.s32 %s14, 2
      // Predicated region
      $region61: #{_mobile_block_forward.1} parent=59 // pred_check
        %p3342 = pneg %p237
      $region62: #{_mobile_block_forward.1} parent=59 // pred_check_branch
        %3344 = sbr.rel (%p3342) target = $region64
      $region63: #{_mobile_block_forward.1} parent=59 // pred_region
        %s3345 = smul.u32 8, %s26
        %p3346 = scmp.lt.s32.totalorder %s25, 1
        %s3347 = scalar_select %p3346, %s25, 1
        %p3348 = scmp.lt.s32.totalorder %s3345, 15
        %s3349 = scalar_select %p3348, %s3345, 15
        %s3350 = smul.addr %s3349, 2
        %s3351 = smul.addr %s3347, 32
        %s3352 = sadd.s32 %s3350, %s3351
        %s3353 = smul.addr %s3352, 8
        %s3354 = scalar_lea.vmem %s8, %s3353
      $region64: #{_mobile_block_forward.1} parent=59 // pred_fallthru
        _
    $region60: #{_mobile_block_forward.1} parent=5 // pred_fallthru
      _
  $region6: #{_mobile_block_forward.1} parent=0 // loop_footer
    %s18 = sadd.s32 1, %s14
  $region7: #{_mobile_block_forward.1} parent=0 // loop_footer_branch
    %13 = sbr.rel target = $region3
  $region8: #{_mobile_block_forward.1} parent=0 // loop_exit
    _

</llo_original>
